<compile_context>
chip_gen: v7x
topology: tpu7x:2x2x1
jax: 0.10.0
libtpu: 0.0.40
codegen_flags: <defaults>
</compile_context>

<pallas_src>
import jax
import jax.numpy as jnp
import numpy as np
from jax import lax
from jax.experimental import pallas as pl
from jax.experimental.pallas import tpu as pltpu


# --------------------------- fused-layout weight prep -------------------------

def _spread_gate_cols(w, d, H):
    """Map (..., 4H) columns in PyTorch gate order (i, f, g, o) into the fused
    8H layout [i_f, i_b, f_f, f_b, o_f, o_b, g_f, g_b].  d=0 -> fwd, d=1 -> bwd;
    the other direction's column blocks are zero (block-diagonal structure)."""
    i_w = w[..., 0:H]
    f_w = w[..., H:2 * H]
    g_w = w[..., 2 * H:3 * H]
    o_w = w[..., 3 * H:4 * H]
    z = jnp.zeros_like(i_w)
    blocks = [z] * 8
    blocks[0 + d] = i_w
    blocks[2 + d] = f_w
    blocks[4 + d] = o_w
    blocks[6 + d] = g_w
    return jnp.concatenate(blocks, axis=-1)


# ------------------------------ fused kernel ----------------------------------

def make_fused_kernel(num_layers, T, BP, H, CP):
    """Fused BiLSTM (both layers, both directions) + tag head.

    Kernel ref order:
      x_flat (T*BP, E),
      per layer: w_ihf_spread (Din, 8H), w_ihb_spread (Din, 8H),
                 w_hh_fused (2H, 8H), bias_fused (1, 8H),
      w_out_pad (2H, CP), b_out_pad (1, CP),
      out_ref (T*BP, CP),
      scratch: xpf (T*BP, 8H), xpb (T*BP, 8H), h_buf (T*BP, 2H).
    """

    def kernel(*refs):
        idx = 0
        x_ref = refs[idx]; idx += 1
        layers = []
        for _ in range(num_layers):
            layers.append((refs[idx], refs[idx + 1], refs[idx + 2], refs[idx + 3]))
            idx += 4
        w_out_ref = refs[idx]; b_out_ref = refs[idx + 1]; idx += 2
        out_ref = refs[idx]; idx += 1
        xpf_ref, xpb_ref, h_ref = refs[idx], refs[idx + 1], refs[idx + 2]

        for l in range(num_layers):
            w_ihf_ref, w_ihb_ref, w_hh_ref, b_ref = layers[l]
            # Layer input: embedded tokens for l==0, previous layer's lane-dense
            # (T*BP, 2H) output slab for l>=1.  The slab is fully consumed by
            # the hoisted projections below before the recurrence overwrites it.
            src = x_ref if l == 0 else h_ref

            # Hoisted input projections: one slab matmul per direction.  Column
            # spreading in the wrapper places each direction's gates directly at
            # their fused lane positions, so no per-step shuffling is needed.
            # The fused bias (both directions) is folded into the fwd slab once.
            xpf_ref[...] = (jnp.dot(src[...], w_ihf_ref[...],
                                    preferred_element_type=jnp.float32)
                            + b_ref[...])
            xpb_ref[...] = jnp.dot(src[...], w_ihb_ref[...],
                                   preferred_element_type=jnp.float32)

            w_hh = w_hh_ref[...]                       # loop-invariant RHS, hoisted
            h2 = jnp.zeros((BP, 2 * H), jnp.float32)   # [h_fwd | h_bwd]
            c2 = jnp.zeros((BP, 2 * H), jnp.float32)   # [c_fwd | c_bwd]

            # Fused recurrence: at step s the fwd chain is at time s and the bwd
            # chain at time T-1-s; one block-diagonal matmul produces both
            # directions' 8H gates.
            for s in range(T):
                tb = T - 1 - s
                gates = (xpf_ref[s * BP:(s + 1) * BP, :]
                         + xpb_ref[tb * BP:(tb + 1) * BP, :]
                         + jnp.dot(h2, w_hh, preferred_element_type=jnp.float32))
                sig = jax.nn.sigmoid(gates[:, 0:6 * H])    # i_f,i_b,f_f,f_b,o_f,o_b
                g_g = jnp.tanh(gates[:, 6 * H:8 * H])      # g_f, g_b
                i_g = sig[:, 0:2 * H]
                f_g = sig[:, 2 * H:4 * H]
                o_g = sig[:, 4 * H:6 * H]
                c2 = f_g * c2 + i_g * g_g
                h2 = o_g * jnp.tanh(c2)
                # Lane-dense layer-output slab: fwd half at time s, bwd at T-1-s.
                h_ref[s * BP:(s + 1) * BP, 0:H] = h2[:, 0:H]
                h_ref[tb * BP:(tb + 1) * BP, H:2 * H] = h2[:, H:2 * H]

        # Tag head: single K=2H matmul on the lane-dense slab, 128-lane output.
        out_ref[...] = (jnp.dot(h_ref[...], w_out_ref[...],
                                preferred_element_type=jnp.float32)
                        + b_out_ref[...])

    return kernel


# ------------------------------ Pallas wrapper --------------------------------

def bilstm_tagger_forward(text, params, num_layers):
    """text: (B, T) int32 token ids -> (B, output_dim + 1, T) float32 logits."""
    B, T = text.shape
    # Embedding lookup is a gather -> plain JAX glue outside the kernel.
    emb = jnp.take(params["embedding"], text, axis=0)            # (B, T, E)
    x = jnp.transpose(emb, (1, 0, 2)).astype(jnp.float32)        # (T, B, E)

    # Pad batch to a full f32 sublane group (8 rows).  Padded rows carry
    # bias-driven garbage through the recurrence; this is safe ONLY because
    # batch rows never interact and we slice [:B] below — keep it that way.
    BP = ((B + 7) // 8) * 8
    if BP != B:
        x = jnp.pad(x, ((0, 0), (0, BP - B), (0, 0)))
    E = x.shape[-1]
    H = params["lstm"][0]["fwd"]["w_hh_t"].shape[0]
    C = params["w_out_t"].shape[1]
    CP = ((C + 127) // 128) * 128                                # lane-dense head
    x_flat = x.reshape(T * BP, E)                                # (T*BP, E)

    inputs = [x_flat]
    for l in range(num_layers):
        pf = params["lstm"][l]["fwd"]
        pb = params["lstm"][l]["bwd"]
        w_ihf = _spread_gate_cols(pf["w_ih_t"], 0, H)            # (Din, 8H)
        w_ihb = _spread_gate_cols(pb["w_ih_t"], 1, H)            # (Din, 8H)
        w_hh = jnp.concatenate([_spread_gate_cols(pf["w_hh_t"], 0, H),
                                _spread_gate_cols(pb["w_hh_t"], 1, H)],
                               axis=0)                           # (2H, 8H) block-diag
        b = (_spread_gate_cols(pf["b"], 0, H)
             + _spread_gate_cols(pb["b"], 1, H))                 # (1, 8H)
        inputs += [w_ihf, w_ihb, w_hh, b]
    w_out_pad = jnp.pad(params["w_out_t"], ((0, 0), (0, CP - C)))
    b_out_pad = jnp.pad(params["b_out"], ((0, 0), (0, CP - C)))
    inputs += [w_out_pad, b_out_pad]

    kernel = make_fused_kernel(num_layers, T, BP, H, CP)
    out = pl.pallas_call(
        kernel,
        out_shape=jax.ShapeDtypeStruct((T * BP, CP), jnp.float32),
        in_specs=[pl.BlockSpec(memory_space=pltpu.MemorySpace.VMEM)] * len(inputs),
        out_specs=pl.BlockSpec(memory_space=pltpu.MemorySpace.VMEM),
        scratch_shapes=[pltpu.VMEM((T * BP, 8 * H), jnp.float32),   # xp fwd-spread
                        pltpu.VMEM((T * BP, 8 * H), jnp.float32),   # xp bwd-spread
                        pltpu.VMEM((T * BP, 2 * H), jnp.float32)],  # layer outputs
    )(*inputs)

    logits = out.reshape(T, BP, CP)[:, :B, :C]                   # (T, B, C)
    return jnp.transpose(logits, (1, 2, 0))                      # (B, C, T)


# ---------------------------- pure-JAX reference ------------------------------

def reference_forward(text, params, num_layers):
    emb = jnp.take(params["embedding"], text, axis=0)
    xt = jnp.transpose(emb, (1, 0, 2)).astype(jnp.float32)

    def lstm_dir(x_tbd, w_ih_t, w_hh_t, b):
        _, B, _ = x_tbd.shape
        H = w_hh_t.shape[0]

        def step(carry, x_t):
            h, c = carry
            gates = (x_t @ w_ih_t + h @ w_hh_t + b)
            i = jax.nn.sigmoid(gates[:, :H])
            f = jax.nn.sigmoid(gates[:, H:2 * H])
            g = jnp.tanh(gates[:, 2 * H:3 * H])
            o = jax.nn.sigmoid(gates[:, 3 * H:])
            c = f * c + i * g
            h = o * jnp.tanh(c)
            return (h, c), h

        init = (jnp.zeros((B, H), jnp.float32), jnp.zeros((B, H), jnp.float32))
        _, hs = lax.scan(step, init, x_tbd)
        return hs

    for l in range(num_layers):
        lf = params["lstm"][l]["fwd"]
        lb = params["lstm"][l]["bwd"]
        hf = lstm_dir(xt, lf["w_ih_t"], lf["w_hh_t"], lf["b"])
        hb = jnp.flip(lstm_dir(jnp.flip(xt, 0), lb["w_ih_t"], lb["w_hh_t"], lb["b"]), 0)
        xt = jnp.concatenate([hf, hb], axis=-1)

    logits = xt @ params["w_out_t"] + params["b_out"]            # (T, B, C)
    return jnp.transpose(logits, (1, 2, 0))


# -------------------------------- parameters ----------------------------------

def init_params(key, vocab, E, H, num_layers, out_dim):
    n_keys = 1 + num_layers * 2 * 4 + 2
    keys = iter(jax.random.split(key, n_keys))

    def u(shape, bound):
        return jax.random.uniform(next(keys), shape, jnp.float32, -bound, bound)

    params = {"embedding": jax.random.normal(next(keys), (vocab, E), jnp.float32)}

    bound = 1.0 / np.sqrt(H)
    lstm = []
    for l in range(num_layers):
        Din = E if l == 0 else 2 * H
        layer = {}
        for d in ("fwd", "bwd"):
            w_ih = u((4 * H, Din), bound)
            w_hh = u((4 * H, H), bound)
            b_ih = u((4 * H,), bound)
            b_hh = u((4 * H,), bound)
            layer[d] = {"w_ih_t": jnp.transpose(w_ih),
                        "w_hh_t": jnp.transpose(w_hh),
                        "b": (b_ih + b_hh)[None, :]}
        lstm.append(layer)
    params["lstm"] = lstm

    C = out_dim + 1
    wb = 1.0 / np.sqrt(2 * H)
    w_out = u((C, 2 * H), wb)
    b_out = u((C,), wb)
    params["w_out_t"] = jnp.transpose(w_out)
    params["b_out"] = b_out[None, :]
    return params


# ----------------------------------- main --------------------------------------

if __name__ == "__main__":
    B, T = 2, 8
    E, H = 32, 32
    NUM_LAYERS = 2
    OUT_DIM = 17          # hidden2tag emits OUT_DIM + 1 = 18 classes
    VOCAB = 50

    key = jax.random.PRNGKey(0)
    pkey, tkey = jax.random.split(key)
    params = init_params(pkey, VOCAB, E, H, NUM_LAYERS, OUT_DIM)
    text = jax.random.randint(tkey, (B, T), 0, VOCAB, dtype=jnp.int32)

    fwd = jax.jit(bilstm_tagger_forward, static_argnums=2)
    out = jax.block_until_ready(fwd(text, params, NUM_LAYERS))
    assert out.shape == (B, OUT_DIM + 1, T), out.shape

    ref = jax.block_until_ready(reference_forward(text, params, NUM_LAYERS))
    assert np.allclose(np.asarray(out), np.asarray(ref), atol=1e-3, rtol=1e-3)

    print("KERNEL_OK")
</pallas_src>

<mosaic_0001>
module attributes {stable_mosaic.version = 11 : i64} {
  func.func @kernel(%arg0: memref<64x32xf32, #tpu.memory_space<vmem>>, %arg1: memref<32x256xf32, #tpu.memory_space<vmem>>, %arg2: memref<32x256xf32, #tpu.memory_space<vmem>>, %arg3: memref<64x256xf32, #tpu.memory_space<vmem>>, %arg4: memref<1x256xf32, #tpu.memory_space<vmem>>, %arg5: memref<64x256xf32, #tpu.memory_space<vmem>>, %arg6: memref<64x256xf32, #tpu.memory_space<vmem>>, %arg7: memref<64x256xf32, #tpu.memory_space<vmem>>, %arg8: memref<1x256xf32, #tpu.memory_space<vmem>>, %arg9: memref<64x128xf32, #tpu.memory_space<vmem>>, %arg10: memref<1x128xf32, #tpu.memory_space<vmem>>, %arg11: memref<64x128xf32, #tpu.memory_space<vmem>>, %arg12: memref<64x256xf32, #tpu.memory_space<vmem>>, %arg13: memref<64x256xf32, #tpu.memory_space<vmem>>, %arg14: memref<64x64xf32, #tpu.memory_space<vmem>>) attributes {dimension_semantics = [], scalar_prefetch = 0 : i64, scratch_operands = 3 : i64, tpu.core_type = #tpu.core_type<tc>} {
    %c0 = arith.constant 0 : index
    %c0_0 = arith.constant 0 : index
    %0 = vector.load %arg0[%c0, %c0_0] : memref<64x32xf32, #tpu.memory_space<vmem>>, vector<64x32xf32>
    %c0_1 = arith.constant 0 : index
    %c0_2 = arith.constant 0 : index
    %1 = vector.load %arg1[%c0_1, %c0_2] : memref<32x256xf32, #tpu.memory_space<vmem>>, vector<32x256xf32>
    %cst = arith.constant dense<0.000000e+00> : vector<64x256xf32>
    %2 = tpu.matmul %0, %1, %cst {dimension_numbers = #tpu.dot_dimension_numbers<[1], [0], [0], [1], [0, 0, 1, 1], [], []>} : vector<64x32xf32>, vector<32x256xf32>, vector<64x256xf32> -> vector<64x256xf32>
    %c0_3 = arith.constant 0 : index
    %c0_4 = arith.constant 0 : index
    %3 = vector.load %arg4[%c0_3, %c0_4] : memref<1x256xf32, #tpu.memory_space<vmem>>, vector<1x256xf32>
    %4 = vector.broadcast %3 : vector<1x256xf32> to vector<64x256xf32>
    %5 = arith.addf %2, %4 : vector<64x256xf32>
    %c0_5 = arith.constant 0 : index
    %c0_6 = arith.constant 0 : index
    %6 = vector.load %arg12[%c0_5, %c0_6] : memref<64x256xf32, #tpu.memory_space<vmem>>, vector<64x256xf32>
    tpu.vector_store %arg12[%c0_5, %c0_6], %5 {strides = array<i32>} : memref<64x256xf32, #tpu.memory_space<vmem>>, vector<64x256xf32>,
    %c0_7 = arith.constant 0 : index
    %c0_8 = arith.constant 0 : index
    %7 = vector.load %arg0[%c0_7, %c0_8] : memref<64x32xf32, #tpu.memory_space<vmem>>, vector<64x32xf32>
    %c0_9 = arith.constant 0 : index
    %c0_10 = arith.constant 0 : index
    %8 = vector.load %arg2[%c0_9, %c0_10] : memref<32x256xf32, #tpu.memory_space<vmem>>, vector<32x256xf32>
    %cst_11 = arith.constant dense<0.000000e+00> : vector<64x256xf32>
    %9 = tpu.matmul %7, %8, %cst_11 {dimension_numbers = #tpu.dot_dimension_numbers<[1], [0], [0], [1], [0, 0, 1, 1], [], []>} : vector<64x32xf32>, vector<32x256xf32>, vector<64x256xf32> -> vector<64x256xf32>
    %c0_12 = arith.constant 0 : index
    %c0_13 = arith.constant 0 : index
    %10 = vector.load %arg13[%c0_12, %c0_13] : memref<64x256xf32, #tpu.memory_space<vmem>>, vector<64x256xf32>
    tpu.vector_store %arg13[%c0_12, %c0_13], %9 {strides = array<i32>} : memref<64x256xf32, #tpu.memory_space<vmem>>, vector<64x256xf32>,
    %c0_14 = arith.constant 0 : index
    %c0_15 = arith.constant 0 : index
    %11 = vector.load %arg3[%c0_14, %c0_15] : memref<64x256xf32, #tpu.memory_space<vmem>>, vector<64x256xf32>
    %cst_16 = arith.constant 0.000000e+00 : f32
    %12 = vector.broadcast %cst_16 : f32 to vector<8x64xf32>
    %cst_17 = arith.constant 0.000000e+00 : f32
    %13 = vector.broadcast %cst_17 : f32 to vector<8x64xf32>
    %c0_18 = arith.constant 0 : index
    %c0_19 = arith.constant 0 : index
    %14 = vector.load %arg12[%c0_18, %c0_19] : memref<64x256xf32, #tpu.memory_space<vmem>>, vector<8x256xf32>
    %c56 = arith.constant 56 : index
    %c0_20 = arith.constant 0 : index
    %15 = vector.load %arg13[%c56, %c0_20] : memref<64x256xf32, #tpu.memory_space<vmem>>, vector<8x256xf32>
    %16 = arith.addf %14, %15 : vector<8x256xf32>
    %cst_21 = arith.constant dense<0.000000e+00> : vector<8x256xf32>
    %17 = tpu.matmul %12, %11, %cst_21 {dimension_numbers = #tpu.dot_dimension_numbers<[1], [0], [0], [1], [0, 0, 1, 1], [], []>} : vector<8x64xf32>, vector<64x256xf32>, vector<8x256xf32> -> vector<8x256xf32>
    %18 = arith.addf %16, %17 : vector<8x256xf32>
    %19 = vector.extract_strided_slice %18 {offsets = [0, 0], sizes = [8, 192], strides = [1, 1]} : vector<8x256xf32> to vector<8x192xf32>
    %20 = arith.negf %19 : vector<8x192xf32>
    %21 = math.exp %20 : vector<8x192xf32>
    %cst_22 = arith.constant 1.000000e+00 : f32
    %22 = vector.broadcast %cst_22 : f32 to vector<8x192xf32>
    %23 = arith.addf %22, %21 : vector<8x192xf32>
    %24 = arith.divf %22, %23 : vector<8x192xf32>
    %25 = vector.extract_strided_slice %18 {offsets = [0, 192], sizes = [8, 64], strides = [1, 1]} : vector<8x256xf32> to vector<8x64xf32>
    %26 = math.tanh %25 : vector<8x64xf32>
    %27 = vector.extract_strided_slice %24 {offsets = [0, 0], sizes = [8, 64], strides = [1, 1]} : vector<8x192xf32> to vector<8x64xf32>
    %28 = vector.extract_strided_slice %24 {offsets = [0, 64], sizes = [8, 64], strides = [1, 1]} : vector<8x192xf32> to vector<8x64xf32>
    %29 = vector.extract_strided_slice %24 {offsets = [0, 128], sizes = [8, 64], strides = [1, 1]} : vector<8x192xf32> to vector<8x64xf32>
    %30 = arith.mulf %28, %13 : vector<8x64xf32>
    %31 = arith.mulf %27, %26 : vector<8x64xf32>
    %32 = arith.addf %30, %31 : vector<8x64xf32>
    %33 = math.tanh %32 : vector<8x64xf32>
    %34 = arith.mulf %29, %33 : vector<8x64xf32>
    %35 = vector.extract_strided_slice %34 {offsets = [0, 0], sizes = [8, 32], strides = [1, 1]} : vector<8x64xf32> to vector<8x32xf32>
    %c0_23 = arith.constant 0 : index
    %c0_24 = arith.constant 0 : index
    %36 = vector.load %arg14[%c0_23, %c0_24] : memref<64x64xf32, #tpu.memory_space<vmem>>, vector<8x32xf32>
    tpu.vector_store %arg14[%c0_23, %c0_24], %35 {strides = array<i32>} : memref<64x64xf32, #tpu.memory_space<vmem>>, vector<8x32xf32>,
    %37 = vector.extract_strided_slice %34 {offsets = [0, 32], sizes = [8, 32], strides = [1, 1]} : vector<8x64xf32> to vector<8x32xf32>
    %c56_25 = arith.constant 56 : index
    %c32 = arith.constant 32 : index
    %38 = vector.load %arg14[%c56_25, %c32] : memref<64x64xf32, #tpu.memory_space<vmem>>, vector<8x32xf32>
    tpu.vector_store %arg14[%c56_25, %c32], %37 {strides = array<i32>} : memref<64x64xf32, #tpu.memory_space<vmem>>, vector<8x32xf32>,
    %c8 = arith.constant 8 : index
    %c0_26 = arith.constant 0 : index
    %39 = vector.load %arg12[%c8, %c0_26] : memref<64x256xf32, #tpu.memory_space<vmem>>, vector<8x256xf32>
    %c48 = arith.constant 48 : index
    %c0_27 = arith.constant 0 : index
    %40 = vector.load %arg13[%c48, %c0_27] : memref<64x256xf32, #tpu.memory_space<vmem>>, vector<8x256xf32>
    %41 = arith.addf %39, %40 : vector<8x256xf32>
    %cst_28 = arith.constant dense<0.000000e+00> : vector<8x256xf32>
    %42 = tpu.matmul %34, %11, %cst_28 {dimension_numbers = #tpu.dot_dimension_numbers<[1], [0], [0], [1], [0, 0, 1, 1], [], []>} : vector<8x64xf32>, vector<64x256xf32>, vector<8x256xf32> -> vector<8x256xf32>
    %43 = arith.addf %41, %42 : vector<8x256xf32>
    %44 = vector.extract_strided_slice %43 {offsets = [0, 0], sizes = [8, 192], strides = [1, 1]} : vector<8x256xf32> to vector<8x192xf32>
    %45 = arith.negf %44 : vector<8x192xf32>
    %46 = math.exp %45 : vector<8x192xf32>
    %cst_29 = arith.constant 1.000000e+00 : f32
    %47 = vector.broadcast %cst_29 : f32 to vector<8x192xf32>
    %48 = arith.addf %47, %46 : vector<8x192xf32>
    %49 = arith.divf %47, %48 : vector<8x192xf32>
    %50 = vector.extract_strided_slice %43 {offsets = [0, 192], sizes = [8, 64], strides = [1, 1]} : vector<8x256xf32> to vector<8x64xf32>
    %51 = math.tanh %50 : vector<8x64xf32>
    %52 = vector.extract_strided_slice %49 {offsets = [0, 0], sizes = [8, 64], strides = [1, 1]} : vector<8x192xf32> to vector<8x64xf32>
    %53 = vector.extract_strided_slice %49 {offsets = [0, 64], sizes = [8, 64], strides = [1, 1]} : vector<8x192xf32> to vector<8x64xf32>
    %54 = vector.extract_strided_slice %49 {offsets = [0, 128], sizes = [8, 64], strides = [1, 1]} : vector<8x192xf32> to vector<8x64xf32>
    %55 = arith.mulf %53, %32 : vector<8x64xf32>
    %56 = arith.mulf %52, %51 : vector<8x64xf32>
    %57 = arith.addf %55, %56 : vector<8x64xf32>
    %58 = math.tanh %57 : vector<8x64xf32>
    %59 = arith.mulf %54, %58 : vector<8x64xf32>
    %60 = vector.extract_strided_slice %59 {offsets = [0, 0], sizes = [8, 32], strides = [1, 1]} : vector<8x64xf32> to vector<8x32xf32>
    %c8_30 = arith.constant 8 : index
    %c0_31 = arith.constant 0 : index
    %61 = vector.load %arg14[%c8_30, %c0_31] : memref<64x64xf32, #tpu.memory_space<vmem>>, vector<8x32xf32>
    tpu.vector_store %arg14[%c8_30, %c0_31], %60 {strides = array<i32>} : memref<64x64xf32, #tpu.memory_space<vmem>>, vector<8x32xf32>,
    %62 = vector.extract_strided_slice %59 {offsets = [0, 32], sizes = [8, 32], strides = [1, 1]} : vector<8x64xf32> to vector<8x32xf32>
    %c48_32 = arith.constant 48 : index
    %c32_33 = arith.constant 32 : index
    %63 = vector.load %arg14[%c48_32, %c32_33] : memref<64x64xf32, #tpu.memory_space<vmem>>, vector<8x32xf32>
    tpu.vector_store %arg14[%c48_32, %c32_33], %62 {strides = array<i32>} : memref<64x64xf32, #tpu.memory_space<vmem>>, vector<8x32xf32>,
    %c16 = arith.constant 16 : index
    %c0_34 = arith.constant 0 : index
    %64 = vector.load %arg12[%c16, %c0_34] : memref<64x256xf32, #tpu.memory_space<vmem>>, vector<8x256xf32>
    %c40 = arith.constant 40 : index
    %c0_35 = arith.constant 0 : index
    %65 = vector.load %arg13[%c40, %c0_35] : memref<64x256xf32, #tpu.memory_space<vmem>>, vector<8x256xf32>
    %66 = arith.addf %64, %65 : vector<8x256xf32>
    %cst_36 = arith.constant dense<0.000000e+00> : vector<8x256xf32>
    %67 = tpu.matmul %59, %11, %cst_36 {dimension_numbers = #tpu.dot_dimension_numbers<[1], [0], [0], [1], [0, 0, 1, 1], [], []>} : vector<8x64xf32>, vector<64x256xf32>, vector<8x256xf32> -> vector<8x256xf32>
    %68 = arith.addf %66, %67 : vector<8x256xf32>
    %69 = vector.extract_strided_slice %68 {offsets = [0, 0], sizes = [8, 192], strides = [1, 1]} : vector<8x256xf32> to vector<8x192xf32>
    %70 = arith.negf %69 : vector<8x192xf32>
    %71 = math.exp %70 : vector<8x192xf32>
    %cst_37 = arith.constant 1.000000e+00 : f32
    %72 = vector.broadcast %cst_37 : f32 to vector<8x192xf32>
    %73 = arith.addf %72, %71 : vector<8x192xf32>
    %74 = arith.divf %72, %73 : vector<8x192xf32>
    %75 = vector.extract_strided_slice %68 {offsets = [0, 192], sizes = [8, 64], strides = [1, 1]} : vector<8x256xf32> to vector<8x64xf32>
    %76 = math.tanh %75 : vector<8x64xf32>
    %77 = vector.extract_strided_slice %74 {offsets = [0, 0], sizes = [8, 64], strides = [1, 1]} : vector<8x192xf32> to vector<8x64xf32>
    %78 = vector.extract_strided_slice %74 {offsets = [0, 64], sizes = [8, 64], strides = [1, 1]} : vector<8x192xf32> to vector<8x64xf32>
    %79 = vector.extract_strided_slice %74 {offsets = [0, 128], sizes = [8, 64], strides = [1, 1]} : vector<8x192xf32> to vector<8x64xf32>
    %80 = arith.mulf %78, %57 : vector<8x64xf32>
    %81 = arith.mulf %77, %76 : vector<8x64xf32>
    %82 = arith.addf %80, %81 : vector<8x64xf32>
    %83 = math.tanh %82 : vector<8x64xf32>
    %84 = arith.mulf %79, %83 : vector<8x64xf32>
    %85 = vector.extract_strided_slice %84 {offsets = [0, 0], sizes = [8, 32], strides = [1, 1]} : vector<8x64xf32> to vector<8x32xf32>
    %c16_38 = arith.constant 16 : index
    %c0_39 = arith.constant 0 : index
    %86 = vector.load %arg14[%c16_38, %c0_39] : memref<64x64xf32, #tpu.memory_space<vmem>>, vector<8x32xf32>
    tpu.vector_store %arg14[%c16_38, %c0_39], %85 {strides = array<i32>} : memref<64x64xf32, #tpu.memory_space<vmem>>, vector<8x32xf32>,
    %87 = vector.extract_strided_slice %84 {offsets = [0, 32], sizes = [8, 32], strides = [1, 1]} : vector<8x64xf32> to vector<8x32xf32>
    %c40_40 = arith.constant 40 : index
    %c32_41 = arith.constant 32 : index
    %88 = vector.load %arg14[%c40_40, %c32_41] : memref<64x64xf32, #tpu.memory_space<vmem>>, vector<8x32xf32>
    tpu.vector_store %arg14[%c40_40, %c32_41], %87 {strides = array<i32>} : memref<64x64xf32, #tpu.memory_space<vmem>>, vector<8x32xf32>,
    %c24 = arith.constant 24 : index
    %c0_42 = arith.constant 0 : index
    %89 = vector.load %arg12[%c24, %c0_42] : memref<64x256xf32, #tpu.memory_space<vmem>>, vector<8x256xf32>
    %c32_43 = arith.constant 32 : index
    %c0_44 = arith.constant 0 : index
    %90 = vector.load %arg13[%c32_43, %c0_44] : memref<64x256xf32, #tpu.memory_space<vmem>>, vector<8x256xf32>
    %91 = arith.addf %89, %90 : vector<8x256xf32>
    %cst_45 = arith.constant dense<0.000000e+00> : vector<8x256xf32>
    %92 = tpu.matmul %84, %11, %cst_45 {dimension_numbers = #tpu.dot_dimension_numbers<[1], [0], [0], [1], [0, 0, 1, 1], [], []>} : vector<8x64xf32>, vector<64x256xf32>, vector<8x256xf32> -> vector<8x256xf32>
    %93 = arith.addf %91, %92 : vector<8x256xf32>
    %94 = vector.extract_strided_slice %93 {offsets = [0, 0], sizes = [8, 192], strides = [1, 1]} : vector<8x256xf32> to vector<8x192xf32>
    %95 = arith.negf %94 : vector<8x192xf32>
    %96 = math.exp %95 : vector<8x192xf32>
    %cst_46 = arith.constant 1.000000e+00 : f32
    %97 = vector.broadcast %cst_46 : f32 to vector<8x192xf32>
    %98 = arith.addf %97, %96 : vector<8x192xf32>
    %99 = arith.divf %97, %98 : vector<8x192xf32>
    %100 = vector.extract_strided_slice %93 {offsets = [0, 192], sizes = [8, 64], strides = [1, 1]} : vector<8x256xf32> to vector<8x64xf32>
    %101 = math.tanh %100 : vector<8x64xf32>
    %102 = vector.extract_strided_slice %99 {offsets = [0, 0], sizes = [8, 64], strides = [1, 1]} : vector<8x192xf32> to vector<8x64xf32>
    %103 = vector.extract_strided_slice %99 {offsets = [0, 64], sizes = [8, 64], strides = [1, 1]} : vector<8x192xf32> to vector<8x64xf32>
    %104 = vector.extract_strided_slice %99 {offsets = [0, 128], sizes = [8, 64], strides = [1, 1]} : vector<8x192xf32> to vector<8x64xf32>
    %105 = arith.mulf %103, %82 : vector<8x64xf32>
    %106 = arith.mulf %102, %101 : vector<8x64xf32>
    %107 = arith.addf %105, %106 : vector<8x64xf32>
    %108 = math.tanh %107 : vector<8x64xf32>
    %109 = arith.mulf %104, %108 : vector<8x64xf32>
    %110 = vector.extract_strided_slice %109 {offsets = [0, 0], sizes = [8, 32], strides = [1, 1]} : vector<8x64xf32> to vector<8x32xf32>
    %c24_47 = arith.constant 24 : index
    %c0_48 = arith.constant 0 : index
    %111 = vector.load %arg14[%c24_47, %c0_48] : memref<64x64xf32, #tpu.memory_space<vmem>>, vector<8x32xf32>
    tpu.vector_store %arg14[%c24_47, %c0_48], %110 {strides = array<i32>} : memref<64x64xf32, #tpu.memory_space<vmem>>, vector<8x32xf32>,
    %112 = vector.extract_strided_slice %109 {offsets = [0, 32], sizes = [8, 32], strides = [1, 1]} : vector<8x64xf32> to vector<8x32xf32>
    %c32_49 = arith.constant 32 : index
    %c32_50 = arith.constant 32 : index
    %113 = vector.load %arg14[%c32_49, %c32_50] : memref<64x64xf32, #tpu.memory_space<vmem>>, vector<8x32xf32>
    tpu.vector_store %arg14[%c32_49, %c32_50], %112 {strides = array<i32>} : memref<64x64xf32, #tpu.memory_space<vmem>>, vector<8x32xf32>,
    %c32_51 = arith.constant 32 : index
    %c0_52 = arith.constant 0 : index
    %114 = vector.load %arg12[%c32_51, %c0_52] : memref<64x256xf32, #tpu.memory_space<vmem>>, vector<8x256xf32>
    %c24_53 = arith.constant 24 : index
    %c0_54 = arith.constant 0 : index
    %115 = vector.load %arg13[%c24_53, %c0_54] : memref<64x256xf32, #tpu.memory_space<vmem>>, vector<8x256xf32>
    %116 = arith.addf %114, %115 : vector<8x256xf32>
    %cst_55 = arith.constant dense<0.000000e+00> : vector<8x256xf32>
    %117 = tpu.matmul %109, %11, %cst_55 {dimension_numbers = #tpu.dot_dimension_numbers<[1], [0], [0], [1], [0, 0, 1, 1], [], []>} : vector<8x64xf32>, vector<64x256xf32>, vector<8x256xf32> -> vector<8x256xf32>
    %118 = arith.addf %116, %117 : vector<8x256xf32>
    %119 = vector.extract_strided_slice %118 {offsets = [0, 0], sizes = [8, 192], strides = [1, 1]} : vector<8x256xf32> to vector<8x192xf32>
    %120 = arith.negf %119 : vector<8x192xf32>
    %121 = math.exp %120 : vector<8x192xf32>
    %cst_56 = arith.constant 1.000000e+00 : f32
    %122 = vector.broadcast %cst_56 : f32 to vector<8x192xf32>
    %123 = arith.addf %122, %121 : vector<8x192xf32>
    %124 = arith.divf %122, %123 : vector<8x192xf32>
    %125 = vector.extract_strided_slice %118 {offsets = [0, 192], sizes = [8, 64], strides = [1, 1]} : vector<8x256xf32> to vector<8x64xf32>
    %126 = math.tanh %125 : vector<8x64xf32>
    %127 = vector.extract_strided_slice %124 {offsets = [0, 0], sizes = [8, 64], strides = [1, 1]} : vector<8x192xf32> to vector<8x64xf32>
    %128 = vector.extract_strided_slice %124 {offsets = [0, 64], sizes = [8, 64], strides = [1, 1]} : vector<8x192xf32> to vector<8x64xf32>
    %129 = vector.extract_strided_slice %124 {offsets = [0, 128], sizes = [8, 64], strides = [1, 1]} : vector<8x192xf32> to vector<8x64xf32>
    %130 = arith.mulf %128, %107 : vector<8x64xf32>
    %131 = arith.mulf %127, %126 : vector<8x64xf32>
    %132 = arith.addf %130, %131 : vector<8x64xf32>
    %133 = math.tanh %132 : vector<8x64xf32>
    %134 = arith.mulf %129, %133 : vector<8x64xf32>
    %135 = vector.extract_strided_slice %134 {offsets = [0, 0], sizes = [8, 32], strides = [1, 1]} : vector<8x64xf32> to vector<8x32xf32>
    %c32_57 = arith.constant 32 : index
    %c0_58 = arith.constant 0 : index
    %136 = vector.load %arg14[%c32_57, %c0_58] : memref<64x64xf32, #tpu.memory_space<vmem>>, vector<8x32xf32>
    tpu.vector_store %arg14[%c32_57, %c0_58], %135 {strides = array<i32>} : memref<64x64xf32, #tpu.memory_space<vmem>>, vector<8x32xf32>,
    %137 = vector.extract_strided_slice %134 {offsets = [0, 32], sizes = [8, 32], strides = [1, 1]} : vector<8x64xf32> to vector<8x32xf32>
    %c24_59 = arith.constant 24 : index
    %c32_60 = arith.constant 32 : index
    %138 = vector.load %arg14[%c24_59, %c32_60] : memref<64x64xf32, #tpu.memory_space<vmem>>, vector<8x32xf32>
    tpu.vector_store %arg14[%c24_59, %c32_60], %137 {strides = array<i32>} : memref<64x64xf32, #tpu.memory_space<vmem>>, vector<8x32xf32>,
    %c40_61 = arith.constant 40 : index
    %c0_62 = arith.constant 0 : index
    %139 = vector.load %arg12[%c40_61, %c0_62] : memref<64x256xf32, #tpu.memory_space<vmem>>, vector<8x256xf32>
    %c16_63 = arith.constant 16 : index
    %c0_64 = arith.constant 0 : index
    %140 = vector.load %arg13[%c16_63, %c0_64] : memref<64x256xf32, #tpu.memory_space<vmem>>, vector<8x256xf32>
    %141 = arith.addf %139, %140 : vector<8x256xf32>
    %cst_65 = arith.constant dense<0.000000e+00> : vector<8x256xf32>
    %142 = tpu.matmul %134, %11, %cst_65 {dimension_numbers = #tpu.dot_dimension_numbers<[1], [0], [0], [1], [0, 0, 1, 1], [], []>} : vector<8x64xf32>, vector<64x256xf32>, vector<8x256xf32> -> vector<8x256xf32>
    %143 = arith.addf %141, %142 : vector<8x256xf32>
    %144 = vector.extract_strided_slice %143 {offsets = [0, 0], sizes = [8, 192], strides = [1, 1]} : vector<8x256xf32> to vector<8x192xf32>
    %145 = arith.negf %144 : vector<8x192xf32>
    %146 = math.exp %145 : vector<8x192xf32>
    %cst_66 = arith.constant 1.000000e+00 : f32
    %147 = vector.broadcast %cst_66 : f32 to vector<8x192xf32>
    %148 = arith.addf %147, %146 : vector<8x192xf32>
    %149 = arith.divf %147, %148 : vector<8x192xf32>
    %150 = vector.extract_strided_slice %143 {offsets = [0, 192], sizes = [8, 64], strides = [1, 1]} : vector<8x256xf32> to vector<8x64xf32>
    %151 = math.tanh %150 : vector<8x64xf32>
    %152 = vector.extract_strided_slice %149 {offsets = [0, 0], sizes = [8, 64], strides = [1, 1]} : vector<8x192xf32> to vector<8x64xf32>
    %153 = vector.extract_strided_slice %149 {offsets = [0, 64], sizes = [8, 64], strides = [1, 1]} : vector<8x192xf32> to vector<8x64xf32>
    %154 = vector.extract_strided_slice %149 {offsets = [0, 128], sizes = [8, 64], strides = [1, 1]} : vector<8x192xf32> to vector<8x64xf32>
    %155 = arith.mulf %153, %132 : vector<8x64xf32>
    %156 = arith.mulf %152, %151 : vector<8x64xf32>
    %157 = arith.addf %155, %156 : vector<8x64xf32>
    %158 = math.tanh %157 : vector<8x64xf32>
    %159 = arith.mulf %154, %158 : vector<8x64xf32>
    %160 = vector.extract_strided_slice %159 {offsets = [0, 0], sizes = [8, 32], strides = [1, 1]} : vector<8x64xf32> to vector<8x32xf32>
    %c40_67 = arith.constant 40 : index
    %c0_68 = arith.constant 0 : index
    %161 = vector.load %arg14[%c40_67, %c0_68] : memref<64x64xf32, #tpu.memory_space<vmem>>, vector<8x32xf32>
    tpu.vector_store %arg14[%c40_67, %c0_68], %160 {strides = array<i32>} : memref<64x64xf32, #tpu.memory_space<vmem>>, vector<8x32xf32>,
    %162 = vector.extract_strided_slice %159 {offsets = [0, 32], sizes = [8, 32], strides = [1, 1]} : vector<8x64xf32> to vector<8x32xf32>
    %c16_69 = arith.constant 16 : index
    %c32_70 = arith.constant 32 : index
    %163 = vector.load %arg14[%c16_69, %c32_70] : memref<64x64xf32, #tpu.memory_space<vmem>>, vector<8x32xf32>
    tpu.vector_store %arg14[%c16_69, %c32_70], %162 {strides = array<i32>} : memref<64x64xf32, #tpu.memory_space<vmem>>, vector<8x32xf32>,
    %c48_71 = arith.constant 48 : index
    %c0_72 = arith.constant 0 : index
    %164 = vector.load %arg12[%c48_71, %c0_72] : memref<64x256xf32, #tpu.memory_space<vmem>>, vector<8x256xf32>
    %c8_73 = arith.constant 8 : index
    %c0_74 = arith.constant 0 : index
    %165 = vector.load %arg13[%c8_73, %c0_74] : memref<64x256xf32, #tpu.memory_space<vmem>>, vector<8x256xf32>
    %166 = arith.addf %164, %165 : vector<8x256xf32>
    %cst_75 = arith.constant dense<0.000000e+00> : vector<8x256xf32>
    %167 = tpu.matmul %159, %11, %cst_75 {dimension_numbers = #tpu.dot_dimension_numbers<[1], [0], [0], [1], [0, 0, 1, 1], [], []>} : vector<8x64xf32>, vector<64x256xf32>, vector<8x256xf32> -> vector<8x256xf32>
    %168 = arith.addf %166, %167 : vector<8x256xf32>
    %169 = vector.extract_strided_slice %168 {offsets = [0, 0], sizes = [8, 192], strides = [1, 1]} : vector<8x256xf32> to vector<8x192xf32>
    %170 = arith.negf %169 : vector<8x192xf32>
    %171 = math.exp %170 : vector<8x192xf32>
    %cst_76 = arith.constant 1.000000e+00 : f32
    %172 = vector.broadcast %cst_76 : f32 to vector<8x192xf32>
    %173 = arith.addf %172, %171 : vector<8x192xf32>
    %174 = arith.divf %172, %173 : vector<8x192xf32>
    %175 = vector.extract_strided_slice %168 {offsets = [0, 192], sizes = [8, 64], strides = [1, 1]} : vector<8x256xf32> to vector<8x64xf32>
    %176 = math.tanh %175 : vector<8x64xf32>
    %177 = vector.extract_strided_slice %174 {offsets = [0, 0], sizes = [8, 64], strides = [1, 1]} : vector<8x192xf32> to vector<8x64xf32>
    %178 = vector.extract_strided_slice %174 {offsets = [0, 64], sizes = [8, 64], strides = [1, 1]} : vector<8x192xf32> to vector<8x64xf32>
    %179 = vector.extract_strided_slice %174 {offsets = [0, 128], sizes = [8, 64], strides = [1, 1]} : vector<8x192xf32> to vector<8x64xf32>
    %180 = arith.mulf %178, %157 : vector<8x64xf32>
    %181 = arith.mulf %177, %176 : vector<8x64xf32>
    %182 = arith.addf %180, %181 : vector<8x64xf32>
    %183 = math.tanh %182 : vector<8x64xf32>
    %184 = arith.mulf %179, %183 : vector<8x64xf32>
    %185 = vector.extract_strided_slice %184 {offsets = [0, 0], sizes = [8, 32], strides = [1, 1]} : vector<8x64xf32> to vector<8x32xf32>
    %c48_77 = arith.constant 48 : index
    %c0_78 = arith.constant 0 : index
    %186 = vector.load %arg14[%c48_77, %c0_78] : memref<64x64xf32, #tpu.memory_space<vmem>>, vector<8x32xf32>
    tpu.vector_store %arg14[%c48_77, %c0_78], %185 {strides = array<i32>} : memref<64x64xf32, #tpu.memory_space<vmem>>, vector<8x32xf32>,
    %187 = vector.extract_strided_slice %184 {offsets = [0, 32], sizes = [8, 32], strides = [1, 1]} : vector<8x64xf32> to vector<8x32xf32>
    %c8_79 = arith.constant 8 : index
    %c32_80 = arith.constant 32 : index
    %188 = vector.load %arg14[%c8_79, %c32_80] : memref<64x64xf32, #tpu.memory_space<vmem>>, vector<8x32xf32>
    tpu.vector_store %arg14[%c8_79, %c32_80], %187 {strides = array<i32>} : memref<64x64xf32, #tpu.memory_space<vmem>>, vector<8x32xf32>,
    %c56_81 = arith.constant 56 : index
    %c0_82 = arith.constant 0 : index
    %189 = vector.load %arg12[%c56_81, %c0_82] : memref<64x256xf32, #tpu.memory_space<vmem>>, vector<8x256xf32>
    %c0_83 = arith.constant 0 : index
    %c0_84 = arith.constant 0 : index
    %190 = vector.load %arg13[%c0_83, %c0_84] : memref<64x256xf32, #tpu.memory_space<vmem>>, vector<8x256xf32>
    %191 = arith.addf %189, %190 : vector<8x256xf32>
    %cst_85 = arith.constant dense<0.000000e+00> : vector<8x256xf32>
    %192 = tpu.matmul %184, %11, %cst_85 {dimension_numbers = #tpu.dot_dimension_numbers<[1], [0], [0], [1], [0, 0, 1, 1], [], []>} : vector<8x64xf32>, vector<64x256xf32>, vector<8x256xf32> -> vector<8x256xf32>
    %193 = arith.addf %191, %192 : vector<8x256xf32>
    %194 = vector.extract_strided_slice %193 {offsets = [0, 0], sizes = [8, 192], strides = [1, 1]} : vector<8x256xf32> to vector<8x192xf32>
    %195 = arith.negf %194 : vector<8x192xf32>
    %196 = math.exp %195 : vector<8x192xf32>
    %cst_86 = arith.constant 1.000000e+00 : f32
    %197 = vector.broadcast %cst_86 : f32 to vector<8x192xf32>
    %198 = arith.addf %197, %196 : vector<8x192xf32>
    %199 = arith.divf %197, %198 : vector<8x192xf32>
    %200 = vector.extract_strided_slice %193 {offsets = [0, 192], sizes = [8, 64], strides = [1, 1]} : vector<8x256xf32> to vector<8x64xf32>
    %201 = math.tanh %200 : vector<8x64xf32>
    %202 = vector.extract_strided_slice %199 {offsets = [0, 0], sizes = [8, 64], strides = [1, 1]} : vector<8x192xf32> to vector<8x64xf32>
    %203 = vector.extract_strided_slice %199 {offsets = [0, 64], sizes = [8, 64], strides = [1, 1]} : vector<8x192xf32> to vector<8x64xf32>
    %204 = vector.extract_strided_slice %199 {offsets = [0, 128], sizes = [8, 64], strides = [1, 1]} : vector<8x192xf32> to vector<8x64xf32>
    %205 = arith.mulf %203, %182 : vector<8x64xf32>
    %206 = arith.mulf %202, %201 : vector<8x64xf32>
    %207 = arith.addf %205, %206 : vector<8x64xf32>
    %208 = math.tanh %207 : vector<8x64xf32>
    %209 = arith.mulf %204, %208 : vector<8x64xf32>
    %210 = vector.extract_strided_slice %209 {offsets = [0, 0], sizes = [8, 32], strides = [1, 1]} : vector<8x64xf32> to vector<8x32xf32>
    %c56_87 = arith.constant 56 : index
    %c0_88 = arith.constant 0 : index
    %211 = vector.load %arg14[%c56_87, %c0_88] : memref<64x64xf32, #tpu.memory_space<vmem>>, vector<8x32xf32>
    tpu.vector_store %arg14[%c56_87, %c0_88], %210 {strides = array<i32>} : memref<64x64xf32, #tpu.memory_space<vmem>>, vector<8x32xf32>,
    %212 = vector.extract_strided_slice %209 {offsets = [0, 32], sizes = [8, 32], strides = [1, 1]} : vector<8x64xf32> to vector<8x32xf32>
    %c0_89 = arith.constant 0 : index
    %c32_90 = arith.constant 32 : index
    %213 = vector.load %arg14[%c0_89, %c32_90] : memref<64x64xf32, #tpu.memory_space<vmem>>, vector<8x32xf32>
    tpu.vector_store %arg14[%c0_89, %c32_90], %212 {strides = array<i32>} : memref<64x64xf32, #tpu.memory_space<vmem>>, vector<8x32xf32>,
    %c0_91 = arith.constant 0 : index
    %c0_92 = arith.constant 0 : index
    %214 = vector.load %arg14[%c0_91, %c0_92] : memref<64x64xf32, #tpu.memory_space<vmem>>, vector<64x64xf32>
    %c0_93 = arith.constant 0 : index
    %c0_94 = arith.constant 0 : index
    %215 = vector.load %arg5[%c0_93, %c0_94] : memref<64x256xf32, #tpu.memory_space<vmem>>, vector<64x256xf32>
    %cst_95 = arith.constant dense<0.000000e+00> : vector<64x256xf32>
    %216 = tpu.matmul %214, %215, %cst_95 {dimension_numbers = #tpu.dot_dimension_numbers<[1], [0], [0], [1], [0, 0, 1, 1], [], []>} : vector<64x64xf32>, vector<64x256xf32>, vector<64x256xf32> -> vector<64x256xf32>
    %c0_96 = arith.constant 0 : index
    %c0_97 = arith.constant 0 : index
    %217 = vector.load %arg8[%c0_96, %c0_97] : memref<1x256xf32, #tpu.memory_space<vmem>>, vector<1x256xf32>
    %218 = vector.broadcast %217 : vector<1x256xf32> to vector<64x256xf32>
    %219 = arith.addf %216, %218 : vector<64x256xf32>
    %c0_98 = arith.constant 0 : index
    %c0_99 = arith.constant 0 : index
    %220 = vector.load %arg12[%c0_98, %c0_99] : memref<64x256xf32, #tpu.memory_space<vmem>>, vector<64x256xf32>
    tpu.vector_store %arg12[%c0_98, %c0_99], %219 {strides = array<i32>} : memref<64x256xf32, #tpu.memory_space<vmem>>, vector<64x256xf32>,
    %c0_100 = arith.constant 0 : index
    %c0_101 = arith.constant 0 : index
    %221 = vector.load %arg14[%c0_100, %c0_101] : memref<64x64xf32, #tpu.memory_space<vmem>>, vector<64x64xf32>
    %c0_102 = arith.constant 0 : index
    %c0_103 = arith.constant 0 : index
    %222 = vector.load %arg6[%c0_102, %c0_103] : memref<64x256xf32, #tpu.memory_space<vmem>>, vector<64x256xf32>
    %cst_104 = arith.constant dense<0.000000e+00> : vector<64x256xf32>
    %223 = tpu.matmul %221, %222, %cst_104 {dimension_numbers = #tpu.dot_dimension_numbers<[1], [0], [0], [1], [0, 0, 1, 1], [], []>} : vector<64x64xf32>, vector<64x256xf32>, vector<64x256xf32> -> vector<64x256xf32>
    %c0_105 = arith.constant 0 : index
    %c0_106 = arith.constant 0 : index
    %224 = vector.load %arg13[%c0_105, %c0_106] : memref<64x256xf32, #tpu.memory_space<vmem>>, vector<64x256xf32>
    tpu.vector_store %arg13[%c0_105, %c0_106], %223 {strides = array<i32>} : memref<64x256xf32, #tpu.memory_space<vmem>>, vector<64x256xf32>,
    %c0_107 = arith.constant 0 : index
    %c0_108 = arith.constant 0 : index
    %225 = vector.load %arg7[%c0_107, %c0_108] : memref<64x256xf32, #tpu.memory_space<vmem>>, vector<64x256xf32>
    %cst_109 = arith.constant 0.000000e+00 : f32
    %226 = vector.broadcast %cst_109 : f32 to vector<8x64xf32>
    %cst_110 = arith.constant 0.000000e+00 : f32
    %227 = vector.broadcast %cst_110 : f32 to vector<8x64xf32>
    %c0_111 = arith.constant 0 : index
    %c0_112 = arith.constant 0 : index
    %228 = vector.load %arg12[%c0_111, %c0_112] : memref<64x256xf32, #tpu.memory_space<vmem>>, vector<8x256xf32>
    %c56_113 = arith.constant 56 : index
    %c0_114 = arith.constant 0 : index
    %229 = vector.load %arg13[%c56_113, %c0_114] : memref<64x256xf32, #tpu.memory_space<vmem>>, vector<8x256xf32>
    %230 = arith.addf %228, %229 : vector<8x256xf32>
    %cst_115 = arith.constant dense<0.000000e+00> : vector<8x256xf32>
    %231 = tpu.matmul %226, %225, %cst_115 {dimension_numbers = #tpu.dot_dimension_numbers<[1], [0], [0], [1], [0, 0, 1, 1], [], []>} : vector<8x64xf32>, vector<64x256xf32>, vector<8x256xf32> -> vector<8x256xf32>
    %232 = arith.addf %230, %231 : vector<8x256xf32>
    %233 = vector.extract_strided_slice %232 {offsets = [0, 0], sizes = [8, 192], strides = [1, 1]} : vector<8x256xf32> to vector<8x192xf32>
    %234 = arith.negf %233 : vector<8x192xf32>
    %235 = math.exp %234 : vector<8x192xf32>
    %cst_116 = arith.constant 1.000000e+00 : f32
    %236 = vector.broadcast %cst_116 : f32 to vector<8x192xf32>
    %237 = arith.addf %236, %235 : vector<8x192xf32>
    %238 = arith.divf %236, %237 : vector<8x192xf32>
    %239 = vector.extract_strided_slice %232 {offsets = [0, 192], sizes = [8, 64], strides = [1, 1]} : vector<8x256xf32> to vector<8x64xf32>
    %240 = math.tanh %239 : vector<8x64xf32>
    %241 = vector.extract_strided_slice %238 {offsets = [0, 0], sizes = [8, 64], strides = [1, 1]} : vector<8x192xf32> to vector<8x64xf32>
    %242 = vector.extract_strided_slice %238 {offsets = [0, 64], sizes = [8, 64], strides = [1, 1]} : vector<8x192xf32> to vector<8x64xf32>
    %243 = vector.extract_strided_slice %238 {offsets = [0, 128], sizes = [8, 64], strides = [1, 1]} : vector<8x192xf32> to vector<8x64xf32>
    %244 = arith.mulf %242, %227 : vector<8x64xf32>
    %245 = arith.mulf %241, %240 : vector<8x64xf32>
    %246 = arith.addf %244, %245 : vector<8x64xf32>
    %247 = math.tanh %246 : vector<8x64xf32>
    %248 = arith.mulf %243, %247 : vector<8x64xf32>
    %249 = vector.extract_strided_slice %248 {offsets = [0, 0], sizes = [8, 32], strides = [1, 1]} : vector<8x64xf32> to vector<8x32xf32>
    %c0_117 = arith.constant 0 : index
    %c0_118 = arith.constant 0 : index
    %250 = vector.load %arg14[%c0_117, %c0_118] : memref<64x64xf32, #tpu.memory_space<vmem>>, vector<8x32xf32>
    tpu.vector_store %arg14[%c0_117, %c0_118], %249 {strides = array<i32>} : memref<64x64xf32, #tpu.memory_space<vmem>>, vector<8x32xf32>,
    %251 = vector.extract_strided_slice %248 {offsets = [0, 32], sizes = [8, 32], strides = [1, 1]} : vector<8x64xf32> to vector<8x32xf32>
    %c56_119 = arith.constant 56 : index
    %c32_120 = arith.constant 32 : index
    %252 = vector.load %arg14[%c56_119, %c32_120] : memref<64x64xf32, #tpu.memory_space<vmem>>, vector<8x32xf32>
    tpu.vector_store %arg14[%c56_119, %c32_120], %251 {strides = array<i32>} : memref<64x64xf32, #tpu.memory_space<vmem>>, vector<8x32xf32>,
    %c8_121 = arith.constant 8 : index
    %c0_122 = arith.constant 0 : index
    %253 = vector.load %arg12[%c8_121, %c0_122] : memref<64x256xf32, #tpu.memory_space<vmem>>, vector<8x256xf32>
    %c48_123 = arith.constant 48 : index
    %c0_124 = arith.constant 0 : index
    %254 = vector.load %arg13[%c48_123, %c0_124] : memref<64x256xf32, #tpu.memory_space<vmem>>, vector<8x256xf32>
    %255 = arith.addf %253, %254 : vector<8x256xf32>
    %cst_125 = arith.constant dense<0.000000e+00> : vector<8x256xf32>
    %256 = tpu.matmul %248, %225, %cst_125 {dimension_numbers = #tpu.dot_dimension_numbers<[1], [0], [0], [1], [0, 0, 1, 1], [], []>} : vector<8x64xf32>, vector<64x256xf32>, vector<8x256xf32> -> vector<8x256xf32>
    %257 = arith.addf %255, %256 : vector<8x256xf32>
    %258 = vector.extract_strided_slice %257 {offsets = [0, 0], sizes = [8, 192], strides = [1, 1]} : vector<8x256xf32> to vector<8x192xf32>
    %259 = arith.negf %258 : vector<8x192xf32>
    %260 = math.exp %259 : vector<8x192xf32>
    %cst_126 = arith.constant 1.000000e+00 : f32
    %261 = vector.broadcast %cst_126 : f32 to vector<8x192xf32>
    %262 = arith.addf %261, %260 : vector<8x192xf32>
    %263 = arith.divf %261, %262 : vector<8x192xf32>
    %264 = vector.extract_strided_slice %257 {offsets = [0, 192], sizes = [8, 64], strides = [1, 1]} : vector<8x256xf32> to vector<8x64xf32>
    %265 = math.tanh %264 : vector<8x64xf32>
    %266 = vector.extract_strided_slice %263 {offsets = [0, 0], sizes = [8, 64], strides = [1, 1]} : vector<8x192xf32> to vector<8x64xf32>
    %267 = vector.extract_strided_slice %263 {offsets = [0, 64], sizes = [8, 64], strides = [1, 1]} : vector<8x192xf32> to vector<8x64xf32>
    %268 = vector.extract_strided_slice %263 {offsets = [0, 128], sizes = [8, 64], strides = [1, 1]} : vector<8x192xf32> to vector<8x64xf32>
    %269 = arith.mulf %267, %246 : vector<8x64xf32>
    %270 = arith.mulf %266, %265 : vector<8x64xf32>
    %271 = arith.addf %269, %270 : vector<8x64xf32>
    %272 = math.tanh %271 : vector<8x64xf32>
    %273 = arith.mulf %268, %272 : vector<8x64xf32>
    %274 = vector.extract_strided_slice %273 {offsets = [0, 0], sizes = [8, 32], strides = [1, 1]} : vector<8x64xf32> to vector<8x32xf32>
    %c8_127 = arith.constant 8 : index
    %c0_128 = arith.constant 0 : index
    %275 = vector.load %arg14[%c8_127, %c0_128] : memref<64x64xf32, #tpu.memory_space<vmem>>, vector<8x32xf32>
    tpu.vector_store %arg14[%c8_127, %c0_128], %274 {strides = array<i32>} : memref<64x64xf32, #tpu.memory_space<vmem>>, vector<8x32xf32>,
    %276 = vector.extract_strided_slice %273 {offsets = [0, 32], sizes = [8, 32], strides = [1, 1]} : vector<8x64xf32> to vector<8x32xf32>
    %c48_129 = arith.constant 48 : index
    %c32_130 = arith.constant 32 : index
    %277 = vector.load %arg14[%c48_129, %c32_130] : memref<64x64xf32, #tpu.memory_space<vmem>>, vector<8x32xf32>
    tpu.vector_store %arg14[%c48_129, %c32_130], %276 {strides = array<i32>} : memref<64x64xf32, #tpu.memory_space<vmem>>, vector<8x32xf32>,
    %c16_131 = arith.constant 16 : index
    %c0_132 = arith.constant 0 : index
    %278 = vector.load %arg12[%c16_131, %c0_132] : memref<64x256xf32, #tpu.memory_space<vmem>>, vector<8x256xf32>
    %c40_133 = arith.constant 40 : index
    %c0_134 = arith.constant 0 : index
    %279 = vector.load %arg13[%c40_133, %c0_134] : memref<64x256xf32, #tpu.memory_space<vmem>>, vector<8x256xf32>
    %280 = arith.addf %278, %279 : vector<8x256xf32>
    %cst_135 = arith.constant dense<0.000000e+00> : vector<8x256xf32>
    %281 = tpu.matmul %273, %225, %cst_135 {dimension_numbers = #tpu.dot_dimension_numbers<[1], [0], [0], [1], [0, 0, 1, 1], [], []>} : vector<8x64xf32>, vector<64x256xf32>, vector<8x256xf32> -> vector<8x256xf32>
    %282 = arith.addf %280, %281 : vector<8x256xf32>
    %283 = vector.extract_strided_slice %282 {offsets = [0, 0], sizes = [8, 192], strides = [1, 1]} : vector<8x256xf32> to vector<8x192xf32>
    %284 = arith.negf %283 : vector<8x192xf32>
    %285 = math.exp %284 : vector<8x192xf32>
    %cst_136 = arith.constant 1.000000e+00 : f32
    %286 = vector.broadcast %cst_136 : f32 to vector<8x192xf32>
    %287 = arith.addf %286, %285 : vector<8x192xf32>
    %288 = arith.divf %286, %287 : vector<8x192xf32>
    %289 = vector.extract_strided_slice %282 {offsets = [0, 192], sizes = [8, 64], strides = [1, 1]} : vector<8x256xf32> to vector<8x64xf32>
    %290 = math.tanh %289 : vector<8x64xf32>
    %291 = vector.extract_strided_slice %288 {offsets = [0, 0], sizes = [8, 64], strides = [1, 1]} : vector<8x192xf32> to vector<8x64xf32>
    %292 = vector.extract_strided_slice %288 {offsets = [0, 64], sizes = [8, 64], strides = [1, 1]} : vector<8x192xf32> to vector<8x64xf32>
    %293 = vector.extract_strided_slice %288 {offsets = [0, 128], sizes = [8, 64], strides = [1, 1]} : vector<8x192xf32> to vector<8x64xf32>
    %294 = arith.mulf %292, %271 : vector<8x64xf32>
    %295 = arith.mulf %291, %290 : vector<8x64xf32>
    %296 = arith.addf %294, %295 : vector<8x64xf32>
    %297 = math.tanh %296 : vector<8x64xf32>
    %298 = arith.mulf %293, %297 : vector<8x64xf32>
    %299 = vector.extract_strided_slice %298 {offsets = [0, 0], sizes = [8, 32], strides = [1, 1]} : vector<8x64xf32> to vector<8x32xf32>
    %c16_137 = arith.constant 16 : index
    %c0_138 = arith.constant 0 : index
    %300 = vector.load %arg14[%c16_137, %c0_138] : memref<64x64xf32, #tpu.memory_space<vmem>>, vector<8x32xf32>
    tpu.vector_store %arg14[%c16_137, %c0_138], %299 {strides = array<i32>} : memref<64x64xf32, #tpu.memory_space<vmem>>, vector<8x32xf32>,
    %301 = vector.extract_strided_slice %298 {offsets = [0, 32], sizes = [8, 32], strides = [1, 1]} : vector<8x64xf32> to vector<8x32xf32>
    %c40_139 = arith.constant 40 : index
    %c32_140 = arith.constant 32 : index
    %302 = vector.load %arg14[%c40_139, %c32_140] : memref<64x64xf32, #tpu.memory_space<vmem>>, vector<8x32xf32>
    tpu.vector_store %arg14[%c40_139, %c32_140], %301 {strides = array<i32>} : memref<64x64xf32, #tpu.memory_space<vmem>>, vector<8x32xf32>,
    %c24_141 = arith.constant 24 : index
    %c0_142 = arith.constant 0 : index
    %303 = vector.load %arg12[%c24_141, %c0_142] : memref<64x256xf32, #tpu.memory_space<vmem>>, vector<8x256xf32>
    %c32_143 = arith.constant 32 : index
    %c0_144 = arith.constant 0 : index
    %304 = vector.load %arg13[%c32_143, %c0_144] : memref<64x256xf32, #tpu.memory_space<vmem>>, vector<8x256xf32>
    %305 = arith.addf %303, %304 : vector<8x256xf32>
    %cst_145 = arith.constant dense<0.000000e+00> : vector<8x256xf32>
    %306 = tpu.matmul %298, %225, %cst_145 {dimension_numbers = #tpu.dot_dimension_numbers<[1], [0], [0], [1], [0, 0, 1, 1], [], []>} : vector<8x64xf32>, vector<64x256xf32>, vector<8x256xf32> -> vector<8x256xf32>
    %307 = arith.addf %305, %306 : vector<8x256xf32>
    %308 = vector.extract_strided_slice %307 {offsets = [0, 0], sizes = [8, 192], strides = [1, 1]} : vector<8x256xf32> to vector<8x192xf32>
    %309 = arith.negf %308 : vector<8x192xf32>
    %310 = math.exp %309 : vector<8x192xf32>
    %cst_146 = arith.constant 1.000000e+00 : f32
    %311 = vector.broadcast %cst_146 : f32 to vector<8x192xf32>
    %312 = arith.addf %311, %310 : vector<8x192xf32>
    %313 = arith.divf %311, %312 : vector<8x192xf32>
    %314 = vector.extract_strided_slice %307 {offsets = [0, 192], sizes = [8, 64], strides = [1, 1]} : vector<8x256xf32> to vector<8x64xf32>
    %315 = math.tanh %314 : vector<8x64xf32>
    %316 = vector.extract_strided_slice %313 {offsets = [0, 0], sizes = [8, 64], strides = [1, 1]} : vector<8x192xf32> to vector<8x64xf32>
    %317 = vector.extract_strided_slice %313 {offsets = [0, 64], sizes = [8, 64], strides = [1, 1]} : vector<8x192xf32> to vector<8x64xf32>
    %318 = vector.extract_strided_slice %313 {offsets = [0, 128], sizes = [8, 64], strides = [1, 1]} : vector<8x192xf32> to vector<8x64xf32>
    %319 = arith.mulf %317, %296 : vector<8x64xf32>
    %320 = arith.mulf %316, %315 : vector<8x64xf32>
    %321 = arith.addf %319, %320 : vector<8x64xf32>
    %322 = math.tanh %321 : vector<8x64xf32>
    %323 = arith.mulf %318, %322 : vector<8x64xf32>
    %324 = vector.extract_strided_slice %323 {offsets = [0, 0], sizes = [8, 32], strides = [1, 1]} : vector<8x64xf32> to vector<8x32xf32>
    %c24_147 = arith.constant 24 : index
    %c0_148 = arith.constant 0 : index
    %325 = vector.load %arg14[%c24_147, %c0_148] : memref<64x64xf32, #tpu.memory_space<vmem>>, vector<8x32xf32>
    tpu.vector_store %arg14[%c24_147, %c0_148], %324 {strides = array<i32>} : memref<64x64xf32, #tpu.memory_space<vmem>>, vector<8x32xf32>,
    %326 = vector.extract_strided_slice %323 {offsets = [0, 32], sizes = [8, 32], strides = [1, 1]} : vector<8x64xf32> to vector<8x32xf32>
    %c32_149 = arith.constant 32 : index
    %c32_150 = arith.constant 32 : index
    %327 = vector.load %arg14[%c32_149, %c32_150] : memref<64x64xf32, #tpu.memory_space<vmem>>, vector<8x32xf32>
    tpu.vector_store %arg14[%c32_149, %c32_150], %326 {strides = array<i32>} : memref<64x64xf32, #tpu.memory_space<vmem>>, vector<8x32xf32>,
    %c32_151 = arith.constant 32 : index
    %c0_152 = arith.constant 0 : index
    %328 = vector.load %arg12[%c32_151, %c0_152] : memref<64x256xf32, #tpu.memory_space<vmem>>, vector<8x256xf32>
    %c24_153 = arith.constant 24 : index
    %c0_154 = arith.constant 0 : index
    %329 = vector.load %arg13[%c24_153, %c0_154] : memref<64x256xf32, #tpu.memory_space<vmem>>, vector<8x256xf32>
    %330 = arith.addf %328, %329 : vector<8x256xf32>
    %cst_155 = arith.constant dense<0.000000e+00> : vector<8x256xf32>
    %331 = tpu.matmul %323, %225, %cst_155 {dimension_numbers = #tpu.dot_dimension_numbers<[1], [0], [0], [1], [0, 0, 1, 1], [], []>} : vector<8x64xf32>, vector<64x256xf32>, vector<8x256xf32> -> vector<8x256xf32>
    %332 = arith.addf %330, %331 : vector<8x256xf32>
    %333 = vector.extract_strided_slice %332 {offsets = [0, 0], sizes = [8, 192], strides = [1, 1]} : vector<8x256xf32> to vector<8x192xf32>
    %334 = arith.negf %333 : vector<8x192xf32>
    %335 = math.exp %334 : vector<8x192xf32>
    %cst_156 = arith.constant 1.000000e+00 : f32
    %336 = vector.broadcast %cst_156 : f32 to vector<8x192xf32>
    %337 = arith.addf %336, %335 : vector<8x192xf32>
    %338 = arith.divf %336, %337 : vector<8x192xf32>
    %339 = vector.extract_strided_slice %332 {offsets = [0, 192], sizes = [8, 64], strides = [1, 1]} : vector<8x256xf32> to vector<8x64xf32>
    %340 = math.tanh %339 : vector<8x64xf32>
    %341 = vector.extract_strided_slice %338 {offsets = [0, 0], sizes = [8, 64], strides = [1, 1]} : vector<8x192xf32> to vector<8x64xf32>
    %342 = vector.extract_strided_slice %338 {offsets = [0, 64], sizes = [8, 64], strides = [1, 1]} : vector<8x192xf32> to vector<8x64xf32>
    %343 = vector.extract_strided_slice %338 {offsets = [0, 128], sizes = [8, 64], strides = [1, 1]} : vector<8x192xf32> to vector<8x64xf32>
    %344 = arith.mulf %342, %321 : vector<8x64xf32>
    %345 = arith.mulf %341, %340 : vector<8x64xf32>
    %346 = arith.addf %344, %345 : vector<8x64xf32>
    %347 = math.tanh %346 : vector<8x64xf32>
    %348 = arith.mulf %343, %347 : vector<8x64xf32>
    %349 = vector.extract_strided_slice %348 {offsets = [0, 0], sizes = [8, 32], strides = [1, 1]} : vector<8x64xf32> to vector<8x32xf32>
    %c32_157 = arith.constant 32 : index
    %c0_158 = arith.constant 0 : index
    %350 = vector.load %arg14[%c32_157, %c0_158] : memref<64x64xf32, #tpu.memory_space<vmem>>, vector<8x32xf32>
    tpu.vector_store %arg14[%c32_157, %c0_158], %349 {strides = array<i32>} : memref<64x64xf32, #tpu.memory_space<vmem>>, vector<8x32xf32>,
    %351 = vector.extract_strided_slice %348 {offsets = [0, 32], sizes = [8, 32], strides = [1, 1]} : vector<8x64xf32> to vector<8x32xf32>
    %c24_159 = arith.constant 24 : index
    %c32_160 = arith.constant 32 : index
    %352 = vector.load %arg14[%c24_159, %c32_160] : memref<64x64xf32, #tpu.memory_space<vmem>>, vector<8x32xf32>
    tpu.vector_store %arg14[%c24_159, %c32_160], %351 {strides = array<i32>} : memref<64x64xf32, #tpu.memory_space<vmem>>, vector<8x32xf32>,
    %c40_161 = arith.constant 40 : index
    %c0_162 = arith.constant 0 : index
    %353 = vector.load %arg12[%c40_161, %c0_162] : memref<64x256xf32, #tpu.memory_space<vmem>>, vector<8x256xf32>
    %c16_163 = arith.constant 16 : index
    %c0_164 = arith.constant 0 : index
    %354 = vector.load %arg13[%c16_163, %c0_164] : memref<64x256xf32, #tpu.memory_space<vmem>>, vector<8x256xf32>
    %355 = arith.addf %353, %354 : vector<8x256xf32>
    %cst_165 = arith.constant dense<0.000000e+00> : vector<8x256xf32>
    %356 = tpu.matmul %348, %225, %cst_165 {dimension_numbers = #tpu.dot_dimension_numbers<[1], [0], [0], [1], [0, 0, 1, 1], [], []>} : vector<8x64xf32>, vector<64x256xf32>, vector<8x256xf32> -> vector<8x256xf32>
    %357 = arith.addf %355, %356 : vector<8x256xf32>
    %358 = vector.extract_strided_slice %357 {offsets = [0, 0], sizes = [8, 192], strides = [1, 1]} : vector<8x256xf32> to vector<8x192xf32>
    %359 = arith.negf %358 : vector<8x192xf32>
    %360 = math.exp %359 : vector<8x192xf32>
    %cst_166 = arith.constant 1.000000e+00 : f32
    %361 = vector.broadcast %cst_166 : f32 to vector<8x192xf32>
    %362 = arith.addf %361, %360 : vector<8x192xf32>
    %363 = arith.divf %361, %362 : vector<8x192xf32>
    %364 = vector.extract_strided_slice %357 {offsets = [0, 192], sizes = [8, 64], strides = [1, 1]} : vector<8x256xf32> to vector<8x64xf32>
    %365 = math.tanh %364 : vector<8x64xf32>
    %366 = vector.extract_strided_slice %363 {offsets = [0, 0], sizes = [8, 64], strides = [1, 1]} : vector<8x192xf32> to vector<8x64xf32>
    %367 = vector.extract_strided_slice %363 {offsets = [0, 64], sizes = [8, 64], strides = [1, 1]} : vector<8x192xf32> to vector<8x64xf32>
    %368 = vector.extract_strided_slice %363 {offsets = [0, 128], sizes = [8, 64], strides = [1, 1]} : vector<8x192xf32> to vector<8x64xf32>
    %369 = arith.mulf %367, %346 : vector<8x64xf32>
    %370 = arith.mulf %366, %365 : vector<8x64xf32>
    %371 = arith.addf %369, %370 : vector<8x64xf32>
    %372 = math.tanh %371 : vector<8x64xf32>
    %373 = arith.mulf %368, %372 : vector<8x64xf32>
    %374 = vector.extract_strided_slice %373 {offsets = [0, 0], sizes = [8, 32], strides = [1, 1]} : vector<8x64xf32> to vector<8x32xf32>
    %c40_167 = arith.constant 40 : index
    %c0_168 = arith.constant 0 : index
    %375 = vector.load %arg14[%c40_167, %c0_168] : memref<64x64xf32, #tpu.memory_space<vmem>>, vector<8x32xf32>
    tpu.vector_store %arg14[%c40_167, %c0_168], %374 {strides = array<i32>} : memref<64x64xf32, #tpu.memory_space<vmem>>, vector<8x32xf32>,
    %376 = vector.extract_strided_slice %373 {offsets = [0, 32], sizes = [8, 32], strides = [1, 1]} : vector<8x64xf32> to vector<8x32xf32>
    %c16_169 = arith.constant 16 : index
    %c32_170 = arith.constant 32 : index
    %377 = vector.load %arg14[%c16_169, %c32_170] : memref<64x64xf32, #tpu.memory_space<vmem>>, vector<8x32xf32>
    tpu.vector_store %arg14[%c16_169, %c32_170], %376 {strides = array<i32>} : memref<64x64xf32, #tpu.memory_space<vmem>>, vector<8x32xf32>,
    %c48_171 = arith.constant 48 : index
    %c0_172 = arith.constant 0 : index
    %378 = vector.load %arg12[%c48_171, %c0_172] : memref<64x256xf32, #tpu.memory_space<vmem>>, vector<8x256xf32>
    %c8_173 = arith.constant 8 : index
    %c0_174 = arith.constant 0 : index
    %379 = vector.load %arg13[%c8_173, %c0_174] : memref<64x256xf32, #tpu.memory_space<vmem>>, vector<8x256xf32>
    %380 = arith.addf %378, %379 : vector<8x256xf32>
    %cst_175 = arith.constant dense<0.000000e+00> : vector<8x256xf32>
    %381 = tpu.matmul %373, %225, %cst_175 {dimension_numbers = #tpu.dot_dimension_numbers<[1], [0], [0], [1], [0, 0, 1, 1], [], []>} : vector<8x64xf32>, vector<64x256xf32>, vector<8x256xf32> -> vector<8x256xf32>
    %382 = arith.addf %380, %381 : vector<8x256xf32>
    %383 = vector.extract_strided_slice %382 {offsets = [0, 0], sizes = [8, 192], strides = [1, 1]} : vector<8x256xf32> to vector<8x192xf32>
    %384 = arith.negf %383 : vector<8x192xf32>
    %385 = math.exp %384 : vector<8x192xf32>
    %cst_176 = arith.constant 1.000000e+00 : f32
    %386 = vector.broadcast %cst_176 : f32 to vector<8x192xf32>
    %387 = arith.addf %386, %385 : vector<8x192xf32>
    %388 = arith.divf %386, %387 : vector<8x192xf32>
    %389 = vector.extract_strided_slice %382 {offsets = [0, 192], sizes = [8, 64], strides = [1, 1]} : vector<8x256xf32> to vector<8x64xf32>
    %390 = math.tanh %389 : vector<8x64xf32>
    %391 = vector.extract_strided_slice %388 {offsets = [0, 0], sizes = [8, 64], strides = [1, 1]} : vector<8x192xf32> to vector<8x64xf32>
    %392 = vector.extract_strided_slice %388 {offsets = [0, 64], sizes = [8, 64], strides = [1, 1]} : vector<8x192xf32> to vector<8x64xf32>
    %393 = vector.extract_strided_slice %388 {offsets = [0, 128], sizes = [8, 64], strides = [1, 1]} : vector<8x192xf32> to vector<8x64xf32>
    %394 = arith.mulf %392, %371 : vector<8x64xf32>
    %395 = arith.mulf %391, %390 : vector<8x64xf32>
    %396 = arith.addf %394, %395 : vector<8x64xf32>
    %397 = math.tanh %396 : vector<8x64xf32>
    %398 = arith.mulf %393, %397 : vector<8x64xf32>
    %399 = vector.extract_strided_slice %398 {offsets = [0, 0], sizes = [8, 32], strides = [1, 1]} : vector<8x64xf32> to vector<8x32xf32>
    %c48_177 = arith.constant 48 : index
    %c0_178 = arith.constant 0 : index
    %400 = vector.load %arg14[%c48_177, %c0_178] : memref<64x64xf32, #tpu.memory_space<vmem>>, vector<8x32xf32>
    tpu.vector_store %arg14[%c48_177, %c0_178], %399 {strides = array<i32>} : memref<64x64xf32, #tpu.memory_space<vmem>>, vector<8x32xf32>,
    %401 = vector.extract_strided_slice %398 {offsets = [0, 32], sizes = [8, 32], strides = [1, 1]} : vector<8x64xf32> to vector<8x32xf32>
    %c8_179 = arith.constant 8 : index
    %c32_180 = arith.constant 32 : index
    %402 = vector.load %arg14[%c8_179, %c32_180] : memref<64x64xf32, #tpu.memory_space<vmem>>, vector<8x32xf32>
    tpu.vector_store %arg14[%c8_179, %c32_180], %401 {strides = array<i32>} : memref<64x64xf32, #tpu.memory_space<vmem>>, vector<8x32xf32>,
    %c56_181 = arith.constant 56 : index
    %c0_182 = arith.constant 0 : index
    %403 = vector.load %arg12[%c56_181, %c0_182] : memref<64x256xf32, #tpu.memory_space<vmem>>, vector<8x256xf32>
    %c0_183 = arith.constant 0 : index
    %c0_184 = arith.constant 0 : index
    %404 = vector.load %arg13[%c0_183, %c0_184] : memref<64x256xf32, #tpu.memory_space<vmem>>, vector<8x256xf32>
    %405 = arith.addf %403, %404 : vector<8x256xf32>
    %cst_185 = arith.constant dense<0.000000e+00> : vector<8x256xf32>
    %406 = tpu.matmul %398, %225, %cst_185 {dimension_numbers = #tpu.dot_dimension_numbers<[1], [0], [0], [1], [0, 0, 1, 1], [], []>} : vector<8x64xf32>, vector<64x256xf32>, vector<8x256xf32> -> vector<8x256xf32>
    %407 = arith.addf %405, %406 : vector<8x256xf32>
    %408 = vector.extract_strided_slice %407 {offsets = [0, 0], sizes = [8, 192], strides = [1, 1]} : vector<8x256xf32> to vector<8x192xf32>
    %409 = arith.negf %408 : vector<8x192xf32>
    %410 = math.exp %409 : vector<8x192xf32>
    %cst_186 = arith.constant 1.000000e+00 : f32
    %411 = vector.broadcast %cst_186 : f32 to vector<8x192xf32>
    %412 = arith.addf %411, %410 : vector<8x192xf32>
    %413 = arith.divf %411, %412 : vector<8x192xf32>
    %414 = vector.extract_strided_slice %407 {offsets = [0, 192], sizes = [8, 64], strides = [1, 1]} : vector<8x256xf32> to vector<8x64xf32>
    %415 = math.tanh %414 : vector<8x64xf32>
    %416 = vector.extract_strided_slice %413 {offsets = [0, 0], sizes = [8, 64], strides = [1, 1]} : vector<8x192xf32> to vector<8x64xf32>
    %417 = vector.extract_strided_slice %413 {offsets = [0, 64], sizes = [8, 64], strides = [1, 1]} : vector<8x192xf32> to vector<8x64xf32>
    %418 = vector.extract_strided_slice %413 {offsets = [0, 128], sizes = [8, 64], strides = [1, 1]} : vector<8x192xf32> to vector<8x64xf32>
    %419 = arith.mulf %417, %396 : vector<8x64xf32>
    %420 = arith.mulf %416, %415 : vector<8x64xf32>
    %421 = arith.addf %419, %420 : vector<8x64xf32>
    %422 = math.tanh %421 : vector<8x64xf32>
    %423 = arith.mulf %418, %422 : vector<8x64xf32>
    %424 = vector.extract_strided_slice %423 {offsets = [0, 0], sizes = [8, 32], strides = [1, 1]} : vector<8x64xf32> to vector<8x32xf32>
    %c56_187 = arith.constant 56 : index
    %c0_188 = arith.constant 0 : index
    %425 = vector.load %arg14[%c56_187, %c0_188] : memref<64x64xf32, #tpu.memory_space<vmem>>, vector<8x32xf32>
    tpu.vector_store %arg14[%c56_187, %c0_188], %424 {strides = array<i32>} : memref<64x64xf32, #tpu.memory_space<vmem>>, vector<8x32xf32>,
    %426 = vector.extract_strided_slice %423 {offsets = [0, 32], sizes = [8, 32], strides = [1, 1]} : vector<8x64xf32> to vector<8x32xf32>
    %c0_189 = arith.constant 0 : index
    %c32_190 = arith.constant 32 : index
    %427 = vector.load %arg14[%c0_189, %c32_190] : memref<64x64xf32, #tpu.memory_space<vmem>>, vector<8x32xf32>
    tpu.vector_store %arg14[%c0_189, %c32_190], %426 {strides = array<i32>} : memref<64x64xf32, #tpu.memory_space<vmem>>, vector<8x32xf32>,
    %c0_191 = arith.constant 0 : index
    %c0_192 = arith.constant 0 : index
    %428 = vector.load %arg14[%c0_191, %c0_192] : memref<64x64xf32, #tpu.memory_space<vmem>>, vector<64x64xf32>
    %c0_193 = arith.constant 0 : index
    %c0_194 = arith.constant 0 : index
    %429 = vector.load %arg9[%c0_193, %c0_194] : memref<64x128xf32, #tpu.memory_space<vmem>>, vector<64x128xf32>
    %cst_195 = arith.constant dense<0.000000e+00> : vector<64x128xf32>
    %430 = tpu.matmul %428, %429, %cst_195 {dimension_numbers = #tpu.dot_dimension_numbers<[1], [0], [0], [1], [0, 0, 1, 1], [], []>} : vector<64x64xf32>, vector<64x128xf32>, vector<64x128xf32> -> vector<64x128xf32>
    %c0_196 = arith.constant 0 : index
    %c0_197 = arith.constant 0 : index
    %431 = vector.load %arg10[%c0_196, %c0_197] : memref<1x128xf32, #tpu.memory_space<vmem>>, vector<1x128xf32>
    %432 = vector.broadcast %431 : vector<1x128xf32> to vector<64x128xf32>
    %433 = arith.addf %430, %432 : vector<64x128xf32>
    %c0_198 = arith.constant 0 : index
    %c0_199 = arith.constant 0 : index
    %434 = vector.load %arg11[%c0_198, %c0_199] : memref<64x128xf32, #tpu.memory_space<vmem>>, vector<64x128xf32>
    tpu.vector_store %arg11[%c0_198, %c0_199], %433 {strides = array<i32>} : memref<64x128xf32, #tpu.memory_space<vmem>>, vector<64x128xf32>,
    return
  }
}

</mosaic_0001>

<llo_original>
// kernel: bilstm_tagger_forward.1
$region0: #{bilstm_tagger_forward.1}
  #allocation0 [shape = 'u32[]', space=smem, size = 0x4, offset = 0x4, fixed_abs, tag = 'smem constant byte address 0x4 - core index']
  #allocation1 [shape = 'u32[144,128]{1,0:T(1,128)}', space=vmem, size = 0x12000, scoped, tag = 'internal scratch']
  #allocation2 [shape = 'f32[64,256]{1,0:T(8,128)}', space=vmem, size = 0x10000, scoped, tag = 'scratch operand']
  #allocation3 [shape = 'f32[64,256]{1,0:T(8,128)}', space=vmem, size = 0x10000, scoped, tag = 'scratch operand']
  #allocation4 [shape = 'f32[64,64]{1,0:T(8,128)}', space=vmem, size = 0x8000, scoped, tag = 'scratch operand']
  %s0 = inlined_call_operand.vmem [shape: f32[64,32], index: 0, kind: input, shape index: {}]
  %s1 = inlined_call_operand.vmem [shape: f32[32,256], index: 1, kind: input, shape index: {}]
  %s2 = inlined_call_operand.vmem [shape: f32[32,256], index: 2, kind: input, shape index: {}]
  %s3 = inlined_call_operand.vmem [shape: f32[64,256], index: 3, kind: input, shape index: {}]
  %s4 = inlined_call_operand.vmem [shape: f32[1,256], index: 4, kind: input, shape index: {}]
  %s5 = inlined_call_operand.vmem [shape: f32[64,256], index: 5, kind: input, shape index: {}]
  %s6 = inlined_call_operand.vmem [shape: f32[64,256], index: 6, kind: input, shape index: {}]
  %s7 = inlined_call_operand.vmem [shape: f32[64,256], index: 7, kind: input, shape index: {}]
  %s8 = inlined_call_operand.vmem [shape: f32[1,256], index: 8, kind: input, shape index: {}]
  %s9 = inlined_call_operand.vmem [shape: f32[64,128], index: 9, kind: input, shape index: {}]
  %s10 = inlined_call_operand.vmem [shape: f32[1,128], index: 10, kind: input, shape index: {}]
  %s11 = inlined_call_operand.vmem [shape: f32[64,128], index: 11, kind: output, shape index: {}]
  %s12 = sld [smem:[#allocation0]]
  $region54: #{bilstm_tagger_forward.1} parent=0
    _
  %s14 = ssub.s32 1, %s12
  %s15 = scalar_select 0, %s14, %s12
  // Predicated region
  $region2: #{bilstm_tagger_forward.1} parent=0 // pred_check
    _
  $region3: #{bilstm_tagger_forward.1} parent=0 // pred_check_branch
    %17 = sbr.rel (0) target = $region5
  $region4: #{bilstm_tagger_forward.1} parent=0 // pred_region
    _
  $region5: #{bilstm_tagger_forward.1} parent=0 // pred_fallthru
    _
  // Predicated region
  $region6: #{bilstm_tagger_forward.1} parent=0 // pred_check
    _
  $region7: #{bilstm_tagger_forward.1} parent=0 // pred_check_branch
    %19 = sbr.rel (0) target = $region9
  $region8: #{bilstm_tagger_forward.1} parent=0 // pred_region
    _
  $region9: #{bilstm_tagger_forward.1} parent=0 // pred_fallthru
    _
  // Predicated region
  $region10: #{bilstm_tagger_forward.1} parent=0 // pred_check
    _
  $region11: #{bilstm_tagger_forward.1} parent=0 // pred_check_branch
    %21 = sbr.rel (0) target = $region13
  $region12: #{bilstm_tagger_forward.1} parent=0 // pred_region
    _
  $region13: #{bilstm_tagger_forward.1} parent=0 // pred_fallthru
    _
  // Predicated region
  $region14: #{bilstm_tagger_forward.1} parent=0 // pred_check
    _
  $region15: #{bilstm_tagger_forward.1} parent=0 // pred_check_branch
    %23 = sbr.rel (0) target = $region17
  $region16: #{bilstm_tagger_forward.1} parent=0 // pred_region
    _
  $region17: #{bilstm_tagger_forward.1} parent=0 // pred_fallthru
    _
  // Predicated region
  $region18: #{bilstm_tagger_forward.1} parent=0 // pred_check
    _
  $region19: #{bilstm_tagger_forward.1} parent=0 // pred_check_branch
    %25 = sbr.rel (0) target = $region21
  $region20: #{bilstm_tagger_forward.1} parent=0 // pred_region
    _
  $region21: #{bilstm_tagger_forward.1} parent=0 // pred_fallthru
    _
  // Predicated region
  $region22: #{bilstm_tagger_forward.1} parent=0 // pred_check
    _
  $region23: #{bilstm_tagger_forward.1} parent=0 // pred_check_branch
    %27 = sbr.rel (0) target = $region25
  $region24: #{bilstm_tagger_forward.1} parent=0 // pred_region
    _
  $region25: #{bilstm_tagger_forward.1} parent=0 // pred_fallthru
    _
  // Predicated region
  $region26: #{bilstm_tagger_forward.1} parent=0 // pred_check
    _
  $region27: #{bilstm_tagger_forward.1} parent=0 // pred_check_branch
    %29 = sbr.rel (0) target = $region29
  $region28: #{bilstm_tagger_forward.1} parent=0 // pred_region
    _
  $region29: #{bilstm_tagger_forward.1} parent=0 // pred_fallthru
    _
  // Predicated region
  $region30: #{bilstm_tagger_forward.1} parent=0 // pred_check
    _
  $region31: #{bilstm_tagger_forward.1} parent=0 // pred_check_branch
    %31 = sbr.rel (0) target = $region33
  $region32: #{bilstm_tagger_forward.1} parent=0 // pred_region
    _
  $region33: #{bilstm_tagger_forward.1} parent=0 // pred_fallthru
    _
  // Predicated region
  $region34: #{bilstm_tagger_forward.1} parent=0 // pred_check
    _
  $region35: #{bilstm_tagger_forward.1} parent=0 // pred_check_branch
    %33 = sbr.rel (0) target = $region37
  $region36: #{bilstm_tagger_forward.1} parent=0 // pred_region
    _
  $region37: #{bilstm_tagger_forward.1} parent=0 // pred_fallthru
    _
  // Predicated region
  $region38: #{bilstm_tagger_forward.1} parent=0 // pred_check
    _
  $region39: #{bilstm_tagger_forward.1} parent=0 // pred_check_branch
    %35 = sbr.rel (0) target = $region41
  $region40: #{bilstm_tagger_forward.1} parent=0 // pred_region
    _
  $region41: #{bilstm_tagger_forward.1} parent=0 // pred_fallthru
    _
  // Predicated region
  $region42: #{bilstm_tagger_forward.1} parent=0 // pred_check
    _
  $region43: #{bilstm_tagger_forward.1} parent=0 // pred_check_branch
    %37 = sbr.rel (0) target = $region45
  $region44: #{bilstm_tagger_forward.1} parent=0 // pred_region
    _
  $region45: #{bilstm_tagger_forward.1} parent=0 // pred_fallthru
    _
  %v38 = vld [vmem:[%s0] sm:$0xff]
  %v39 = vld [vmem:[%s0 + $0x8] sm:$0xff]
  %v40 = vld [vmem:[%s0 + $0x10] sm:$0xff]
  %v41 = vld [vmem:[%s0 + $0x18] sm:$0xff]
  %v42 = vld [vmem:[%s0 + $0x20] sm:$0xff]
  %v43 = vld [vmem:[%s0 + $0x28] sm:$0xff]
  %v44 = vld [vmem:[%s0 + $0x30] sm:$0xff]
  %v45 = vld [vmem:[%s0 + $0x38] sm:$0xff]
  %v46 = vld [vmem:[%s1] sm:$0xff]
  %v47 = vld [vmem:[%s1 + $0x8] sm:$0xff]
  %v48 = vld [vmem:[%s1 + $0x10] sm:$0xff]
  %v49 = vld [vmem:[%s1 + $0x18] sm:$0xff]
  %v50 = vld [vmem:[%s1 + $0x20] sm:$0xff]
  %v51 = vld [vmem:[%s1 + $0x28] sm:$0xff]
  %v52 = vld [vmem:[%s1 + $0x30] sm:$0xff]
  %v53 = vld [vmem:[%s1 + $0x38] sm:$0xff]
  %v54 = vld [vmem:[%s4] sm:$0x3]
  %v56 = vlaneseq
  %v57 = vshrl.u32 %v56, 7
  %v58 = vsub.s32 0, %v57
  %v59 = vrot.slane %v54, %v58
  %v60 = vlaneseq
  %v61 = vshrl.u32 %v60, 7
  %v62 = vsub.s32 1, %v61
  %v63 = vrot.slane %v54, %v62
  %vm66 = vcmask 261120
  %v68 = vsel %vm66, %v38, 0
  %v71 = vsel %vm66, %v39, 0
  %v74 = vsel %vm66, %v40, 0
  %v77 = vsel %vm66, %v41, 0
  %v80 = vsel %vm66, %v42, 0
  %v83 = vsel %vm66, %v43, 0
  %v86 = vsel %vm66, %v44, 0
  %v89 = vsel %vm66, %v45, 0
  %91 = vmatprep.subr.mxu0 %v47
  %92 = vmatpush1.msra.mxu0 %v46
  %93 = vmatprep.subr.mxu0 %v49
  %94 = vmatpush1.msra.mxu0 %v48
  %95 = vmatprep.subr.mxu0 %v51
  %96 = vmatpush1.msra.mxu0 %v50
  %97 = vmatprep.subr.mxu0 %v53
  %98 = vmatpush1.msra.mxu0 %v52
  %99 = vmatprep.subr.mxu0 0.0
  %100 = vmatpush1.msra.mxu0 0.0
  %101 = vmatprep.subr.mxu0 0.0
  %102 = vmatpush1.msra.mxu0 0.0
  %103 = vmatprep.subr.mxu0 0.0
  %104 = vmatpush1.msra.mxu0 0.0
  %105 = vmatprep.subr.mxu0 0.0
  %106 = vmatpush1.msra.mxu0 0.0
  %107 = vmatprep.subr.mxu0 0.0
  %108 = vmatpush1.msra.mxu0 0.0
  %109 = vmatprep.subr.mxu0 0.0
  %110 = vmatpush1.msra.mxu0 0.0
  %111 = vmatprep.subr.mxu0 0.0
  %112 = vmatpush1.msra.mxu0 0.0
  %113 = vmatprep.subr.mxu0 0.0
  %114 = vmatpush1.msra.mxu0 0.0
  %115 = vmatprep.subr.mxu0 0.0
  %116 = vmatpush1.msra.mxu0 0.0
  %117 = vmatprep.subr.mxu0 0.0
  %118 = vmatpush1.msra.mxu0 0.0
  %119 = vmatprep.subr.mxu0 0.0
  %120 = vmatpush1.msra.mxu0 0.0
  %121 = vmatprep.subr.mxu0 0.0
  %122 = vmatpush1.msra.mxu0 0.0
  %123 = vmatprep.subr.mxu0 0.0
  %124 = vmatpush1.msra.mxu0 0.0
  %125 = vmatprep.subr.mxu0 0.0
  %126 = vmatpush1.msra.mxu0 0.0
  %127 = vmatprep.subr.mxu0 0.0
  %128 = vmatpush1.msra.mxu0 0.0
  %129 = vmatprep.subr.mxu0 0.0
  %130 = vmatpush1.msra.mxu0 0.0
  %131 = vmatprep.subr.mxu0 0.0
  %132 = vmatpush1.msra.mxu0 0.0
  %133 = vmatprep.subr.mxu0 0.0
  %134 = vmatpush1.msra.mxu0 0.0
  %135 = vmatprep.subr.mxu0 0.0
  %136 = vmatpush1.msra.mxu0 0.0
  %137 = vmatprep.subr.mxu0 0.0
  %138 = vmatpush1.msra.mxu0 0.0
  %139 = vmatprep.subr.mxu0 0.0
  %140 = vmatpush1.msra.mxu0 0.0
  %141 = vmatprep.subr.mxu0 0.0
  %142 = vmatpush1.msra.mxu0 0.0
  %143 = vmatprep.subr.mxu0 0.0
  %144 = vmatpush1.msra.mxu0 0.0
  %145 = vmatprep.subr.mxu0 0.0
  %146 = vmatpush1.msra.mxu0 0.0
  %147 = vmatprep.subr.mxu0 0.0
  %148 = vmatpush1.msra.mxu0 0.0
  %149 = vmatprep.subr.mxu0 0.0
  %150 = vmatpush1.msra.mxu0 0.0
  %151 = vmatprep.subr.mxu0 0.0
  %152 = vmatpush1.msra.mxu0 0.0
  %153 = vmatprep.subr.mxu0 0.0
  %154 = vmatpush1.msra.mxu0 0.0
  %155 = vmatprep.mubr.f32.mxu0 0.0
  %156 = vmatmul.mubr.f32.gmra.mrb[0].mxu0 %v68
  %v157 = vpop.f32.mrb[0].mxu0
  %v158 = vadd.f32 %v59, %v157
  %v159 = vpop.f32.mrb[0].mxu0
  %v160 = vadd.f32 %v63, %v159
  %161 = vmatprep.mubr.f32.mxu0 0.0
  %162 = vmatmul.mubr.f32.gmra.mrb[0].mxu0 %v71
  %v163 = vpop.f32.mrb[0].mxu0
  %v164 = vadd.f32 %v59, %v163
  %v165 = vpop.f32.mrb[0].mxu0
  %v166 = vadd.f32 %v63, %v165
  %167 = vmatprep.mubr.f32.mxu0 0.0
  %168 = vmatmul.mubr.f32.gmra.mrb[0].mxu0 %v74
  %v169 = vpop.f32.mrb[0].mxu0
  %v170 = vadd.f32 %v59, %v169
  %v171 = vpop.f32.mrb[0].mxu0
  %v172 = vadd.f32 %v63, %v171
  %173 = vmatprep.mubr.f32.mxu0 0.0
  %174 = vmatmul.mubr.f32.gmra.mrb[0].mxu0 %v77
  %v175 = vpop.f32.mrb[0].mxu0
  %v176 = vadd.f32 %v59, %v175
  %v177 = vpop.f32.mrb[0].mxu0
  %v178 = vadd.f32 %v63, %v177
  %179 = vmatprep.mubr.f32.mxu0 0.0
  %180 = vmatmul.mubr.f32.gmra.mrb[0].mxu0 %v80
  %v181 = vpop.f32.mrb[0].mxu0
  %v182 = vadd.f32 %v59, %v181
  %v183 = vpop.f32.mrb[0].mxu0
  %v184 = vadd.f32 %v63, %v183
  %185 = vmatprep.mubr.f32.mxu0 0.0
  %186 = vmatmul.mubr.f32.gmra.mrb[0].mxu0 %v83
  %v187 = vpop.f32.mrb[0].mxu0
  %v188 = vadd.f32 %v59, %v187
  %v189 = vpop.f32.mrb[0].mxu0
  %v190 = vadd.f32 %v63, %v189
  %191 = vmatprep.mubr.f32.mxu0 0.0
  %192 = vmatmul.mubr.f32.gmra.mrb[0].mxu0 %v86
  %v193 = vpop.f32.mrb[0].mxu0
  %v194 = vadd.f32 %v59, %v193
  %v195 = vpop.f32.mrb[0].mxu0
  %v196 = vadd.f32 %v63, %v195
  %197 = vmatprep.mubr.f32.mxu0 0.0
  %198 = vmatmul.mubr.f32.gmra.mrb[0].mxu0 %v89
  %v199 = vpop.f32.mrb[0].mxu0
  %v200 = vadd.f32 %v59, %v199
  %v201 = vpop.f32.mrb[0].mxu0
  %v202 = vadd.f32 %v63, %v201
  %203 = vdwg.mxu0
  %204 = vst [vmem:[#allocation2] sm:$0xff] %v158
  %205 = vst [vmem:[#allocation2 + $0x8] sm:$0xff] %v160
  %206 = vst [vmem:[#allocation2 + $0x10] sm:$0xff] %v164
  %207 = vst [vmem:[#allocation2 + $0x18] sm:$0xff] %v166
  %208 = vst [vmem:[#allocation2 + $0x20] sm:$0xff] %v170
  %209 = vst [vmem:[#allocation2 + $0x28] sm:$0xff] %v172
  %210 = vst [vmem:[#allocation2 + $0x30] sm:$0xff] %v176
  %211 = vst [vmem:[#allocation2 + $0x38] sm:$0xff] %v178
  %212 = vst [vmem:[#allocation2 + $0x40] sm:$0xff] %v182
  %213 = vst [vmem:[#allocation2 + $0x48] sm:$0xff] %v184
  %214 = vst [vmem:[#allocation2 + $0x50] sm:$0xff] %v188
  %215 = vst [vmem:[#allocation2 + $0x58] sm:$0xff] %v190
  %216 = vst [vmem:[#allocation2 + $0x60] sm:$0xff] %v194
  %217 = vst [vmem:[#allocation2 + $0x68] sm:$0xff] %v196
  %218 = vst [vmem:[#allocation2 + $0x70] sm:$0xff] %v200
  %219 = vst [vmem:[#allocation2 + $0x78] sm:$0xff] %v202
  %v220 = vld [vmem:[%s0] sm:$0xff]
  %v221 = vld [vmem:[%s0 + $0x8] sm:$0xff]
  %v222 = vld [vmem:[%s0 + $0x10] sm:$0xff]
  %v223 = vld [vmem:[%s0 + $0x18] sm:$0xff]
  %v224 = vld [vmem:[%s0 + $0x20] sm:$0xff]
  %v225 = vld [vmem:[%s0 + $0x28] sm:$0xff]
  %v226 = vld [vmem:[%s0 + $0x30] sm:$0xff]
  %v227 = vld [vmem:[%s0 + $0x38] sm:$0xff]
  %v228 = vld [vmem:[%s2] sm:$0xff]
  %v229 = vld [vmem:[%s2 + $0x8] sm:$0xff]
  %v230 = vld [vmem:[%s2 + $0x10] sm:$0xff]
  %v231 = vld [vmem:[%s2 + $0x18] sm:$0xff]
  %v232 = vld [vmem:[%s2 + $0x20] sm:$0xff]
  %v233 = vld [vmem:[%s2 + $0x28] sm:$0xff]
  %v234 = vld [vmem:[%s2 + $0x30] sm:$0xff]
  %v235 = vld [vmem:[%s2 + $0x38] sm:$0xff]
  %v237 = vsel %vm66, %v220, 0
  %v240 = vsel %vm66, %v221, 0
  %v243 = vsel %vm66, %v222, 0
  %v246 = vsel %vm66, %v223, 0
  %v249 = vsel %vm66, %v224, 0
  %v252 = vsel %vm66, %v225, 0
  %v255 = vsel %vm66, %v226, 0
  %v258 = vsel %vm66, %v227, 0
  %260 = vmatprep.subr.mxu0 %v229
  %261 = vmatpush1.msra.mxu0 %v228
  %262 = vmatprep.subr.mxu0 %v231
  %263 = vmatpush1.msra.mxu0 %v230
  %264 = vmatprep.subr.mxu0 %v233
  %265 = vmatpush1.msra.mxu0 %v232
  %266 = vmatprep.subr.mxu0 %v235
  %267 = vmatpush1.msra.mxu0 %v234
  %268 = vmatprep.subr.mxu0 0.0
  %269 = vmatpush1.msra.mxu0 0.0
  %270 = vmatprep.subr.mxu0 0.0
  %271 = vmatpush1.msra.mxu0 0.0
  %272 = vmatprep.subr.mxu0 0.0
  %273 = vmatpush1.msra.mxu0 0.0
  %274 = vmatprep.subr.mxu0 0.0
  %275 = vmatpush1.msra.mxu0 0.0
  %276 = vmatprep.subr.mxu0 0.0
  %277 = vmatpush1.msra.mxu0 0.0
  %278 = vmatprep.subr.mxu0 0.0
  %279 = vmatpush1.msra.mxu0 0.0
  %280 = vmatprep.subr.mxu0 0.0
  %281 = vmatpush1.msra.mxu0 0.0
  %282 = vmatprep.subr.mxu0 0.0
  %283 = vmatpush1.msra.mxu0 0.0
  %284 = vmatprep.subr.mxu0 0.0
  %285 = vmatpush1.msra.mxu0 0.0
  %286 = vmatprep.subr.mxu0 0.0
  %287 = vmatpush1.msra.mxu0 0.0
  %288 = vmatprep.subr.mxu0 0.0
  %289 = vmatpush1.msra.mxu0 0.0
  %290 = vmatprep.subr.mxu0 0.0
  %291 = vmatpush1.msra.mxu0 0.0
  %292 = vmatprep.subr.mxu0 0.0
  %293 = vmatpush1.msra.mxu0 0.0
  %294 = vmatprep.subr.mxu0 0.0
  %295 = vmatpush1.msra.mxu0 0.0
  %296 = vmatprep.subr.mxu0 0.0
  %297 = vmatpush1.msra.mxu0 0.0
  %298 = vmatprep.subr.mxu0 0.0
  %299 = vmatpush1.msra.mxu0 0.0
  %300 = vmatprep.subr.mxu0 0.0
  %301 = vmatpush1.msra.mxu0 0.0
  %302 = vmatprep.subr.mxu0 0.0
  %303 = vmatpush1.msra.mxu0 0.0
  %304 = vmatprep.subr.mxu0 0.0
  %305 = vmatpush1.msra.mxu0 0.0
  %306 = vmatprep.subr.mxu0 0.0
  %307 = vmatpush1.msra.mxu0 0.0
  %308 = vmatprep.subr.mxu0 0.0
  %309 = vmatpush1.msra.mxu0 0.0
  %310 = vmatprep.subr.mxu0 0.0
  %311 = vmatpush1.msra.mxu0 0.0
  %312 = vmatprep.subr.mxu0 0.0
  %313 = vmatpush1.msra.mxu0 0.0
  %314 = vmatprep.subr.mxu0 0.0
  %315 = vmatpush1.msra.mxu0 0.0
  %316 = vmatprep.subr.mxu0 0.0
  %317 = vmatpush1.msra.mxu0 0.0
  %318 = vmatprep.subr.mxu0 0.0
  %319 = vmatpush1.msra.mxu0 0.0
  %320 = vmatprep.subr.mxu0 0.0
  %321 = vmatpush1.msra.mxu0 0.0
  %322 = vmatprep.subr.mxu0 0.0
  %323 = vmatpush1.msra.mxu0 0.0
  %324 = vmatprep.mubr.f32.mxu0 0.0
  %325 = vmatmul.mubr.f32.gmra.mrb[0].mxu0 %v237
  %v326 = vpop.f32.mrb[0].mxu0
  %v327 = vadd.f32 0.0, %v326
  %v328 = vpop.f32.mrb[0].mxu0
  %v329 = vadd.f32 0.0, %v328
  %330 = vmatprep.mubr.f32.mxu0 0.0
  %331 = vmatmul.mubr.f32.gmra.mrb[0].mxu0 %v240
  %v332 = vpop.f32.mrb[0].mxu0
  %v333 = vadd.f32 0.0, %v332
  %v334 = vpop.f32.mrb[0].mxu0
  %v335 = vadd.f32 0.0, %v334
  %336 = vmatprep.mubr.f32.mxu0 0.0
  %337 = vmatmul.mubr.f32.gmra.mrb[0].mxu0 %v243
  %v338 = vpop.f32.mrb[0].mxu0
  %v339 = vadd.f32 0.0, %v338
  %v340 = vpop.f32.mrb[0].mxu0
  %v341 = vadd.f32 0.0, %v340
  %342 = vmatprep.mubr.f32.mxu0 0.0
  %343 = vmatmul.mubr.f32.gmra.mrb[0].mxu0 %v246
  %v344 = vpop.f32.mrb[0].mxu0
  %v345 = vadd.f32 0.0, %v344
  %v346 = vpop.f32.mrb[0].mxu0
  %v347 = vadd.f32 0.0, %v346
  %348 = vmatprep.mubr.f32.mxu0 0.0
  %349 = vmatmul.mubr.f32.gmra.mrb[0].mxu0 %v249
  %v350 = vpop.f32.mrb[0].mxu0
  %v351 = vadd.f32 0.0, %v350
  %v352 = vpop.f32.mrb[0].mxu0
  %v353 = vadd.f32 0.0, %v352
  %354 = vmatprep.mubr.f32.mxu0 0.0
  %355 = vmatmul.mubr.f32.gmra.mrb[0].mxu0 %v252
  %v356 = vpop.f32.mrb[0].mxu0
  %v357 = vadd.f32 0.0, %v356
  %v358 = vpop.f32.mrb[0].mxu0
  %v359 = vadd.f32 0.0, %v358
  %360 = vmatprep.mubr.f32.mxu0 0.0
  %361 = vmatmul.mubr.f32.gmra.mrb[0].mxu0 %v255
  %v362 = vpop.f32.mrb[0].mxu0
  %v363 = vadd.f32 0.0, %v362
  %v364 = vpop.f32.mrb[0].mxu0
  %v365 = vadd.f32 0.0, %v364
  %366 = vmatprep.mubr.f32.mxu0 0.0
  %367 = vmatmul.mubr.f32.gmra.mrb[0].mxu0 %v258
  %v368 = vpop.f32.mrb[0].mxu0
  %v369 = vadd.f32 0.0, %v368
  %v370 = vpop.f32.mrb[0].mxu0
  %v371 = vadd.f32 0.0, %v370
  %372 = vdwg.mxu0
  %373 = vst [vmem:[#allocation3] sm:$0xff] %v327
  %374 = vst [vmem:[#allocation3 + $0x8] sm:$0xff] %v329
  %375 = vst [vmem:[#allocation3 + $0x10] sm:$0xff] %v333
  %376 = vst [vmem:[#allocation3 + $0x18] sm:$0xff] %v335
  %377 = vst [vmem:[#allocation3 + $0x20] sm:$0xff] %v339
  %378 = vst [vmem:[#allocation3 + $0x28] sm:$0xff] %v341
  %379 = vst [vmem:[#allocation3 + $0x30] sm:$0xff] %v345
  %380 = vst [vmem:[#allocation3 + $0x38] sm:$0xff] %v347
  %381 = vst [vmem:[#allocation3 + $0x40] sm:$0xff] %v351
  %382 = vst [vmem:[#allocation3 + $0x48] sm:$0xff] %v353
  %383 = vst [vmem:[#allocation3 + $0x50] sm:$0xff] %v357
  %384 = vst [vmem:[#allocation3 + $0x58] sm:$0xff] %v359
  %385 = vst [vmem:[#allocation3 + $0x60] sm:$0xff] %v363
  %386 = vst [vmem:[#allocation3 + $0x68] sm:$0xff] %v365
  %387 = vst [vmem:[#allocation3 + $0x70] sm:$0xff] %v369
  %388 = vst [vmem:[#allocation3 + $0x78] sm:$0xff] %v371
  %v389 = vld [vmem:[%s3] sm:$0xff]
  %v390 = vld [vmem:[%s3 + $0x8] sm:$0xff]
  %v391 = vld [vmem:[%s3 + $0x10] sm:$0xff]
  %v392 = vld [vmem:[%s3 + $0x18] sm:$0xff]
  %v393 = vld [vmem:[%s3 + $0x20] sm:$0xff]
  %v394 = vld [vmem:[%s3 + $0x28] sm:$0xff]
  %v395 = vld [vmem:[%s3 + $0x30] sm:$0xff]
  %v396 = vld [vmem:[%s3 + $0x38] sm:$0xff]
  %v397 = vld [vmem:[%s3 + $0x40] sm:$0xff]
  %v398 = vld [vmem:[%s3 + $0x48] sm:$0xff]
  %v399 = vld [vmem:[%s3 + $0x50] sm:$0xff]
  %v400 = vld [vmem:[%s3 + $0x58] sm:$0xff]
  %v401 = vld [vmem:[%s3 + $0x60] sm:$0xff]
  %v402 = vld [vmem:[%s3 + $0x68] sm:$0xff]
  %v403 = vld [vmem:[%s3 + $0x70] sm:$0xff]
  %v404 = vld [vmem:[%s3 + $0x78] sm:$0xff]
  %v405 = vld [vmem:[#allocation2] sm:$0xff]
  %v406 = vld [vmem:[#allocation2 + $0x8] sm:$0xff]
  %v407 = vld [vmem:[#allocation3 + $0x70] sm:$0xff]
  %v408 = vld [vmem:[#allocation3 + $0x78] sm:$0xff]
  %v409 = vadd.f32 %v405, %v407
  %v410 = vadd.f32 %v406, %v408
  %vm411 = vcmask 523264
  %v413 = vsel %vm411, 0.0, 0
  %415 = vmatprep.subr.mxu0 %v390
  %416 = vmatpush1.msra.mxu0 %v389
  %417 = vmatprep.subr.mxu0 %v392
  %418 = vmatpush1.msra.mxu0 %v391
  %419 = vmatprep.subr.mxu0 %v394
  %420 = vmatpush1.msra.mxu0 %v393
  %421 = vmatprep.subr.mxu0 %v396
  %422 = vmatpush1.msra.mxu0 %v395
  %423 = vmatprep.subr.mxu0 %v398
  %424 = vmatpush1.msra.mxu0 %v397
  %425 = vmatprep.subr.mxu0 %v400
  %426 = vmatpush1.msra.mxu0 %v399
  %427 = vmatprep.subr.mxu0 %v402
  %428 = vmatpush1.msra.mxu0 %v401
  %429 = vmatprep.subr.mxu0 %v404
  %430 = vmatpush1.msra.mxu0 %v403
  %431 = vmatprep.subr.mxu0 0.0
  %432 = vmatpush1.msra.mxu0 0.0
  %433 = vmatprep.subr.mxu0 0.0
  %434 = vmatpush1.msra.mxu0 0.0
  %435 = vmatprep.subr.mxu0 0.0
  %436 = vmatpush1.msra.mxu0 0.0
  %437 = vmatprep.subr.mxu0 0.0
  %438 = vmatpush1.msra.mxu0 0.0
  %439 = vmatprep.subr.mxu0 0.0
  %440 = vmatpush1.msra.mxu0 0.0
  %441 = vmatprep.subr.mxu0 0.0
  %442 = vmatpush1.msra.mxu0 0.0
  %443 = vmatprep.subr.mxu0 0.0
  %444 = vmatpush1.msra.mxu0 0.0
  %445 = vmatprep.subr.mxu0 0.0
  %446 = vmatpush1.msra.mxu0 0.0
  %447 = vmatprep.subr.mxu0 0.0
  %448 = vmatpush1.msra.mxu0 0.0
  %449 = vmatprep.subr.mxu0 0.0
  %450 = vmatpush1.msra.mxu0 0.0
  %451 = vmatprep.subr.mxu0 0.0
  %452 = vmatpush1.msra.mxu0 0.0
  %453 = vmatprep.subr.mxu0 0.0
  %454 = vmatpush1.msra.mxu0 0.0
  %455 = vmatprep.subr.mxu0 0.0
  %456 = vmatpush1.msra.mxu0 0.0
  %457 = vmatprep.subr.mxu0 0.0
  %458 = vmatpush1.msra.mxu0 0.0
  %459 = vmatprep.subr.mxu0 0.0
  %460 = vmatpush1.msra.mxu0 0.0
  %461 = vmatprep.subr.mxu0 0.0
  %462 = vmatpush1.msra.mxu0 0.0
  %463 = vmatprep.subr.mxu0 0.0
  %464 = vmatpush1.msra.mxu0 0.0
  %465 = vmatprep.subr.mxu0 0.0
  %466 = vmatpush1.msra.mxu0 0.0
  %467 = vmatprep.subr.mxu0 0.0
  %468 = vmatpush1.msra.mxu0 0.0
  %469 = vmatprep.subr.mxu0 0.0
  %470 = vmatpush1.msra.mxu0 0.0
  %471 = vmatprep.subr.mxu0 0.0
  %472 = vmatpush1.msra.mxu0 0.0
  %473 = vmatprep.subr.mxu0 0.0
  %474 = vmatpush1.msra.mxu0 0.0
  %475 = vmatprep.subr.mxu0 0.0
  %476 = vmatpush1.msra.mxu0 0.0
  %477 = vmatprep.subr.mxu0 0.0
  %478 = vmatpush1.msra.mxu0 0.0
  %479 = vmatprep.mubr.f32.mxu0 0.0
  %480 = vmatmul.mubr.f32.gmra.mrb[0].mxu0 %v413
  %v481 = vpop.f32.mrb[0].mxu0
  %v482 = vadd.f32 0.0, %v481
  %v483 = vpop.f32.mrb[0].mxu0
  %v484 = vadd.f32 0.0, %v483
  %485 = vdwg.mxu0
  %v486 = vadd.f32 %v409, %v482
  %v487 = vadd.f32 %v410, %v484
  %v488 = vxor.u32 %v486, 2147483648
  %v489 = vxor.u32 %v487, 2147483648
  %v490 = vmul.f32 %v488, 1.442695
  %v491 = vpow.pop %v490
  %v492 = vmul.f32 %v489, 1.442695
  %v493 = vpow.pop %v492
  %v494 = vadd.f32 %v491, 1.0
  %v495 = vadd.f32 %v493, 1.0
  %v496 = vrcp.pop %v494
  %v497 = vmul.f32 1.0, %v496
  %v498 = vrcp.pop %v495
  %v499 = vmul.f32 1.0, %v498
  %v500 = vtanh.pop %v487
  %v501 = vmul.f32 %v497, 0.0
  %503 = vrot.lane.b32.xlu0 %v500, 64
  %v504 = vpop.permute.xlu0 %503
  %v506 = vmul.f32 %v497, %v504
  %508 = vrot.lane.b32.xlu0 %v506, 64
  %v509 = vpop.permute.xlu0 %508
  %v511 = vadd.f32 %v501, %v509
  %v512 = vtanh.pop %v511
  %514 = vrot.lane.b32.xlu0 %v512, 64
  %v515 = vpop.permute.xlu0 %514
  %v517 = vmul.f32 %v499, %v515
  %518 = vst.msk [vmem:[#allocation4] sm:$0xff] %vm66, %v517
  %vm519 = vcmask 523520
  %520 = vst.msk [vmem:[#allocation4 + $0x38] sm:$0xff] %vm519, %v517
  %v521 = vld [vmem:[#allocation2 + $0x10] sm:$0xff]
  %v522 = vld [vmem:[#allocation2 + $0x18] sm:$0xff]
  %v523 = vld [vmem:[#allocation3 + $0x60] sm:$0xff]
  %v524 = vld [vmem:[#allocation3 + $0x68] sm:$0xff]
  %v525 = vadd.f32 %v521, %v523
  %v526 = vadd.f32 %v522, %v524
  %v528 = vsel %vm411, %v517, 0
  %530 = vmatprep.subr.mxu0 %v390
  %531 = vmatpush1.msra.mxu0 %v389
  %532 = vmatprep.subr.mxu0 %v392
  %533 = vmatpush1.msra.mxu0 %v391
  %534 = vmatprep.subr.mxu0 %v394
  %535 = vmatpush1.msra.mxu0 %v393
  %536 = vmatprep.subr.mxu0 %v396
  %537 = vmatpush1.msra.mxu0 %v395
  %538 = vmatprep.subr.mxu0 %v398
  %539 = vmatpush1.msra.mxu0 %v397
  %540 = vmatprep.subr.mxu0 %v400
  %541 = vmatpush1.msra.mxu0 %v399
  %542 = vmatprep.subr.mxu0 %v402
  %543 = vmatpush1.msra.mxu0 %v401
  %544 = vmatprep.subr.mxu0 %v404
  %545 = vmatpush1.msra.mxu0 %v403
  %546 = vmatprep.subr.mxu0 0.0
  %547 = vmatpush1.msra.mxu0 0.0
  %548 = vmatprep.subr.mxu0 0.0
  %549 = vmatpush1.msra.mxu0 0.0
  %550 = vmatprep.subr.mxu0 0.0
  %551 = vmatpush1.msra.mxu0 0.0
  %552 = vmatprep.subr.mxu0 0.0
  %553 = vmatpush1.msra.mxu0 0.0
  %554 = vmatprep.subr.mxu0 0.0
  %555 = vmatpush1.msra.mxu0 0.0
  %556 = vmatprep.subr.mxu0 0.0
  %557 = vmatpush1.msra.mxu0 0.0
  %558 = vmatprep.subr.mxu0 0.0
  %559 = vmatpush1.msra.mxu0 0.0
  %560 = vmatprep.subr.mxu0 0.0
  %561 = vmatpush1.msra.mxu0 0.0
  %562 = vmatprep.subr.mxu0 0.0
  %563 = vmatpush1.msra.mxu0 0.0
  %564 = vmatprep.subr.mxu0 0.0
  %565 = vmatpush1.msra.mxu0 0.0
  %566 = vmatprep.subr.mxu0 0.0
  %567 = vmatpush1.msra.mxu0 0.0
  %568 = vmatprep.subr.mxu0 0.0
  %569 = vmatpush1.msra.mxu0 0.0
  %570 = vmatprep.subr.mxu0 0.0
  %571 = vmatpush1.msra.mxu0 0.0
  %572 = vmatprep.subr.mxu0 0.0
  %573 = vmatpush1.msra.mxu0 0.0
  %574 = vmatprep.subr.mxu0 0.0
  %575 = vmatpush1.msra.mxu0 0.0
  %576 = vmatprep.subr.mxu0 0.0
  %577 = vmatpush1.msra.mxu0 0.0
  %578 = vmatprep.subr.mxu0 0.0
  %579 = vmatpush1.msra.mxu0 0.0
  %580 = vmatprep.subr.mxu0 0.0
  %581 = vmatpush1.msra.mxu0 0.0
  %582 = vmatprep.subr.mxu0 0.0
  %583 = vmatpush1.msra.mxu0 0.0
  %584 = vmatprep.subr.mxu0 0.0
  %585 = vmatpush1.msra.mxu0 0.0
  %586 = vmatprep.subr.mxu0 0.0
  %587 = vmatpush1.msra.mxu0 0.0
  %588 = vmatprep.subr.mxu0 0.0
  %589 = vmatpush1.msra.mxu0 0.0
  %590 = vmatprep.subr.mxu0 0.0
  %591 = vmatpush1.msra.mxu0 0.0
  %592 = vmatprep.subr.mxu0 0.0
  %593 = vmatpush1.msra.mxu0 0.0
  %594 = vmatprep.mubr.f32.mxu0 0.0
  %595 = vmatmul.mubr.f32.gmra.mrb[0].mxu0 %v528
  %v596 = vpop.f32.mrb[0].mxu0
  %v597 = vadd.f32 0.0, %v596
  %v598 = vpop.f32.mrb[0].mxu0
  %v599 = vadd.f32 0.0, %v598
  %600 = vdwg.mxu0
  %v601 = vadd.f32 %v525, %v597
  %v602 = vadd.f32 %v526, %v599
  %v603 = vxor.u32 %v601, 2147483648
  %v604 = vxor.u32 %v602, 2147483648
  %v605 = vmul.f32 %v603, 1.442695
  %v606 = vpow.pop %v605
  %v607 = vmul.f32 %v604, 1.442695
  %v608 = vpow.pop %v607
  %v609 = vadd.f32 %v606, 1.0
  %v610 = vadd.f32 %v608, 1.0
  %v611 = vrcp.pop %v609
  %v612 = vmul.f32 1.0, %v611
  %v613 = vrcp.pop %v610
  %v614 = vmul.f32 1.0, %v613
  %v615 = vtanh.pop %v602
  %v616 = vmul.f32 %v612, %v511
  %618 = vrot.lane.b32.xlu0 %v615, 64
  %v619 = vpop.permute.xlu0 %618
  %v621 = vmul.f32 %v612, %v619
  %623 = vrot.lane.b32.xlu0 %v621, 64
  %v624 = vpop.permute.xlu0 %623
  %v626 = vadd.f32 %v616, %v624
  %v627 = vtanh.pop %v626
  %629 = vrot.lane.b32.xlu0 %v627, 64
  %v630 = vpop.permute.xlu0 %629
  %v632 = vmul.f32 %v614, %v630
  %633 = vst.msk [vmem:[#allocation4 + $0x8] sm:$0xff] %vm66, %v632
  %634 = vst.msk [vmem:[#allocation4 + $0x30] sm:$0xff] %vm519, %v632
  %v635 = vld [vmem:[#allocation2 + $0x20] sm:$0xff]
  %v636 = vld [vmem:[#allocation2 + $0x28] sm:$0xff]
  %v637 = vld [vmem:[#allocation3 + $0x50] sm:$0xff]
  %v638 = vld [vmem:[#allocation3 + $0x58] sm:$0xff]
  %v639 = vadd.f32 %v635, %v637
  %v640 = vadd.f32 %v636, %v638
  %v642 = vsel %vm411, %v632, 0
  %644 = vmatprep.subr.mxu0 %v390
  %645 = vmatpush1.msra.mxu0 %v389
  %646 = vmatprep.subr.mxu0 %v392
  %647 = vmatpush1.msra.mxu0 %v391
  %648 = vmatprep.subr.mxu0 %v394
  %649 = vmatpush1.msra.mxu0 %v393
  %650 = vmatprep.subr.mxu0 %v396
  %651 = vmatpush1.msra.mxu0 %v395
  %652 = vmatprep.subr.mxu0 %v398
  %653 = vmatpush1.msra.mxu0 %v397
  %654 = vmatprep.subr.mxu0 %v400
  %655 = vmatpush1.msra.mxu0 %v399
  %656 = vmatprep.subr.mxu0 %v402
  %657 = vmatpush1.msra.mxu0 %v401
  %658 = vmatprep.subr.mxu0 %v404
  %659 = vmatpush1.msra.mxu0 %v403
  %660 = vmatprep.subr.mxu0 0.0
  %661 = vmatpush1.msra.mxu0 0.0
  %662 = vmatprep.subr.mxu0 0.0
  %663 = vmatpush1.msra.mxu0 0.0
  %664 = vmatprep.subr.mxu0 0.0
  %665 = vmatpush1.msra.mxu0 0.0
  %666 = vmatprep.subr.mxu0 0.0
  %667 = vmatpush1.msra.mxu0 0.0
  %668 = vmatprep.subr.mxu0 0.0
  %669 = vmatpush1.msra.mxu0 0.0
  %670 = vmatprep.subr.mxu0 0.0
  %671 = vmatpush1.msra.mxu0 0.0
  %672 = vmatprep.subr.mxu0 0.0
  %673 = vmatpush1.msra.mxu0 0.0
  %674 = vmatprep.subr.mxu0 0.0
  %675 = vmatpush1.msra.mxu0 0.0
  %676 = vmatprep.subr.mxu0 0.0
  %677 = vmatpush1.msra.mxu0 0.0
  %678 = vmatprep.subr.mxu0 0.0
  %679 = vmatpush1.msra.mxu0 0.0
  %680 = vmatprep.subr.mxu0 0.0
  %681 = vmatpush1.msra.mxu0 0.0
  %682 = vmatprep.subr.mxu0 0.0
  %683 = vmatpush1.msra.mxu0 0.0
  %684 = vmatprep.subr.mxu0 0.0
  %685 = vmatpush1.msra.mxu0 0.0
  %686 = vmatprep.subr.mxu0 0.0
  %687 = vmatpush1.msra.mxu0 0.0
  %688 = vmatprep.subr.mxu0 0.0
  %689 = vmatpush1.msra.mxu0 0.0
  %690 = vmatprep.subr.mxu0 0.0
  %691 = vmatpush1.msra.mxu0 0.0
  %692 = vmatprep.subr.mxu0 0.0
  %693 = vmatpush1.msra.mxu0 0.0
  %694 = vmatprep.subr.mxu0 0.0
  %695 = vmatpush1.msra.mxu0 0.0
  %696 = vmatprep.subr.mxu0 0.0
  %697 = vmatpush1.msra.mxu0 0.0
  %698 = vmatprep.subr.mxu0 0.0
  %699 = vmatpush1.msra.mxu0 0.0
  %700 = vmatprep.subr.mxu0 0.0
  %701 = vmatpush1.msra.mxu0 0.0
  %702 = vmatprep.subr.mxu0 0.0
  %703 = vmatpush1.msra.mxu0 0.0
  %704 = vmatprep.subr.mxu0 0.0
  %705 = vmatpush1.msra.mxu0 0.0
  %706 = vmatprep.subr.mxu0 0.0
  %707 = vmatpush1.msra.mxu0 0.0
  %708 = vmatprep.mubr.f32.mxu0 0.0
  %709 = vmatmul.mubr.f32.gmra.mrb[0].mxu0 %v642
  %v710 = vpop.f32.mrb[0].mxu0
  %v711 = vadd.f32 0.0, %v710
  %v712 = vpop.f32.mrb[0].mxu0
  %v713 = vadd.f32 0.0, %v712
  %714 = vdwg.mxu0
  %v715 = vadd.f32 %v639, %v711
  %v716 = vadd.f32 %v640, %v713
  %v717 = vxor.u32 %v715, 2147483648
  %v718 = vxor.u32 %v716, 2147483648
  %v719 = vmul.f32 %v717, 1.442695
  %v720 = vpow.pop %v719
  %v721 = vmul.f32 %v718, 1.442695
  %v722 = vpow.pop %v721
  %v723 = vadd.f32 %v720, 1.0
  %v724 = vadd.f32 %v722, 1.0
  %v725 = vrcp.pop %v723
  %v726 = vmul.f32 1.0, %v725
  %v727 = vrcp.pop %v724
  %v728 = vmul.f32 1.0, %v727
  %v729 = vtanh.pop %v716
  %v730 = vmul.f32 %v726, %v626
  %732 = vrot.lane.b32.xlu0 %v729, 64
  %v733 = vpop.permute.xlu0 %732
  %v735 = vmul.f32 %v726, %v733
  %737 = vrot.lane.b32.xlu0 %v735, 64
  %v738 = vpop.permute.xlu0 %737
  %v740 = vadd.f32 %v730, %v738
  %v741 = vtanh.pop %v740
  %743 = vrot.lane.b32.xlu0 %v741, 64
  %v744 = vpop.permute.xlu0 %743
  %v746 = vmul.f32 %v728, %v744
  %747 = vst.msk [vmem:[#allocation4 + $0x10] sm:$0xff] %vm66, %v746
  %748 = vst.msk [vmem:[#allocation4 + $0x28] sm:$0xff] %vm519, %v746
  %v749 = vld [vmem:[#allocation2 + $0x30] sm:$0xff]
  %v750 = vld [vmem:[#allocation2 + $0x38] sm:$0xff]
  %v751 = vld [vmem:[#allocation3 + $0x40] sm:$0xff]
  %v752 = vld [vmem:[#allocation3 + $0x48] sm:$0xff]
  %v753 = vadd.f32 %v749, %v751
  %v754 = vadd.f32 %v750, %v752
  %v756 = vsel %vm411, %v746, 0
  %758 = vmatprep.subr.mxu0 %v390
  %759 = vmatpush1.msra.mxu0 %v389
  %760 = vmatprep.subr.mxu0 %v392
  %761 = vmatpush1.msra.mxu0 %v391
  %762 = vmatprep.subr.mxu0 %v394
  %763 = vmatpush1.msra.mxu0 %v393
  %764 = vmatprep.subr.mxu0 %v396
  %765 = vmatpush1.msra.mxu0 %v395
  %766 = vmatprep.subr.mxu0 %v398
  %767 = vmatpush1.msra.mxu0 %v397
  %768 = vmatprep.subr.mxu0 %v400
  %769 = vmatpush1.msra.mxu0 %v399
  %770 = vmatprep.subr.mxu0 %v402
  %771 = vmatpush1.msra.mxu0 %v401
  %772 = vmatprep.subr.mxu0 %v404
  %773 = vmatpush1.msra.mxu0 %v403
  %774 = vmatprep.subr.mxu0 0.0
  %775 = vmatpush1.msra.mxu0 0.0
  %776 = vmatprep.subr.mxu0 0.0
  %777 = vmatpush1.msra.mxu0 0.0
  %778 = vmatprep.subr.mxu0 0.0
  %779 = vmatpush1.msra.mxu0 0.0
  %780 = vmatprep.subr.mxu0 0.0
  %781 = vmatpush1.msra.mxu0 0.0
  %782 = vmatprep.subr.mxu0 0.0
  %783 = vmatpush1.msra.mxu0 0.0
  %784 = vmatprep.subr.mxu0 0.0
  %785 = vmatpush1.msra.mxu0 0.0
  %786 = vmatprep.subr.mxu0 0.0
  %787 = vmatpush1.msra.mxu0 0.0
  %788 = vmatprep.subr.mxu0 0.0
  %789 = vmatpush1.msra.mxu0 0.0
  %790 = vmatprep.subr.mxu0 0.0
  %791 = vmatpush1.msra.mxu0 0.0
  %792 = vmatprep.subr.mxu0 0.0
  %793 = vmatpush1.msra.mxu0 0.0
  %794 = vmatprep.subr.mxu0 0.0
  %795 = vmatpush1.msra.mxu0 0.0
  %796 = vmatprep.subr.mxu0 0.0
  %797 = vmatpush1.msra.mxu0 0.0
  %798 = vmatprep.subr.mxu0 0.0
  %799 = vmatpush1.msra.mxu0 0.0
  %800 = vmatprep.subr.mxu0 0.0
  %801 = vmatpush1.msra.mxu0 0.0
  %802 = vmatprep.subr.mxu0 0.0
  %803 = vmatpush1.msra.mxu0 0.0
  %804 = vmatprep.subr.mxu0 0.0
  %805 = vmatpush1.msra.mxu0 0.0
  %806 = vmatprep.subr.mxu0 0.0
  %807 = vmatpush1.msra.mxu0 0.0
  %808 = vmatprep.subr.mxu0 0.0
  %809 = vmatpush1.msra.mxu0 0.0
  %810 = vmatprep.subr.mxu0 0.0
  %811 = vmatpush1.msra.mxu0 0.0
  %812 = vmatprep.subr.mxu0 0.0
  %813 = vmatpush1.msra.mxu0 0.0
  %814 = vmatprep.subr.mxu0 0.0
  %815 = vmatpush1.msra.mxu0 0.0
  %816 = vmatprep.subr.mxu0 0.0
  %817 = vmatpush1.msra.mxu0 0.0
  %818 = vmatprep.subr.mxu0 0.0
  %819 = vmatpush1.msra.mxu0 0.0
  %820 = vmatprep.subr.mxu0 0.0
  %821 = vmatpush1.msra.mxu0 0.0
  %822 = vmatprep.mubr.f32.mxu0 0.0
  %823 = vmatmul.mubr.f32.gmra.mrb[0].mxu0 %v756
  %v824 = vpop.f32.mrb[0].mxu0
  %v825 = vadd.f32 0.0, %v824
  %v826 = vpop.f32.mrb[0].mxu0
  %v827 = vadd.f32 0.0, %v826
  %828 = vdwg.mxu0
  %v829 = vadd.f32 %v753, %v825
  %v830 = vadd.f32 %v754, %v827
  %v831 = vxor.u32 %v829, 2147483648
  %v832 = vxor.u32 %v830, 2147483648
  %v833 = vmul.f32 %v831, 1.442695
  %v834 = vpow.pop %v833
  %v835 = vmul.f32 %v832, 1.442695
  %v836 = vpow.pop %v835
  %v837 = vadd.f32 %v834, 1.0
  %v838 = vadd.f32 %v836, 1.0
  %v839 = vrcp.pop %v837
  %v840 = vmul.f32 1.0, %v839
  %v841 = vrcp.pop %v838
  %v842 = vmul.f32 1.0, %v841
  %v843 = vtanh.pop %v830
  %v844 = vmul.f32 %v840, %v740
  %846 = vrot.lane.b32.xlu0 %v843, 64
  %v847 = vpop.permute.xlu0 %846
  %v849 = vmul.f32 %v840, %v847
  %851 = vrot.lane.b32.xlu0 %v849, 64
  %v852 = vpop.permute.xlu0 %851
  %v854 = vadd.f32 %v844, %v852
  %v855 = vtanh.pop %v854
  %857 = vrot.lane.b32.xlu0 %v855, 64
  %v858 = vpop.permute.xlu0 %857
  %v860 = vmul.f32 %v842, %v858
  %861 = vst.msk [vmem:[#allocation4 + $0x18] sm:$0xff] %vm66, %v860
  %862 = vst.msk [vmem:[#allocation4 + $0x20] sm:$0xff] %vm519, %v860
  %v863 = vld [vmem:[#allocation2 + $0x40] sm:$0xff]
  %v864 = vld [vmem:[#allocation2 + $0x48] sm:$0xff]
  %v865 = vld [vmem:[#allocation3 + $0x30] sm:$0xff]
  %v866 = vld [vmem:[#allocation3 + $0x38] sm:$0xff]
  %v867 = vadd.f32 %v863, %v865
  %v868 = vadd.f32 %v864, %v866
  %v870 = vsel %vm411, %v860, 0
  %872 = vmatprep.subr.mxu0 %v390
  %873 = vmatpush1.msra.mxu0 %v389
  %874 = vmatprep.subr.mxu0 %v392
  %875 = vmatpush1.msra.mxu0 %v391
  %876 = vmatprep.subr.mxu0 %v394
  %877 = vmatpush1.msra.mxu0 %v393
  %878 = vmatprep.subr.mxu0 %v396
  %879 = vmatpush1.msra.mxu0 %v395
  %880 = vmatprep.subr.mxu0 %v398
  %881 = vmatpush1.msra.mxu0 %v397
  %882 = vmatprep.subr.mxu0 %v400
  %883 = vmatpush1.msra.mxu0 %v399
  %884 = vmatprep.subr.mxu0 %v402
  %885 = vmatpush1.msra.mxu0 %v401
  %886 = vmatprep.subr.mxu0 %v404
  %887 = vmatpush1.msra.mxu0 %v403
  %888 = vmatprep.subr.mxu0 0.0
  %889 = vmatpush1.msra.mxu0 0.0
  %890 = vmatprep.subr.mxu0 0.0
  %891 = vmatpush1.msra.mxu0 0.0
  %892 = vmatprep.subr.mxu0 0.0
  %893 = vmatpush1.msra.mxu0 0.0
  %894 = vmatprep.subr.mxu0 0.0
  %895 = vmatpush1.msra.mxu0 0.0
  %896 = vmatprep.subr.mxu0 0.0
  %897 = vmatpush1.msra.mxu0 0.0
  %898 = vmatprep.subr.mxu0 0.0
  %899 = vmatpush1.msra.mxu0 0.0
  %900 = vmatprep.subr.mxu0 0.0
  %901 = vmatpush1.msra.mxu0 0.0
  %902 = vmatprep.subr.mxu0 0.0
  %903 = vmatpush1.msra.mxu0 0.0
  %904 = vmatprep.subr.mxu0 0.0
  %905 = vmatpush1.msra.mxu0 0.0
  %906 = vmatprep.subr.mxu0 0.0
  %907 = vmatpush1.msra.mxu0 0.0
  %908 = vmatprep.subr.mxu0 0.0
  %909 = vmatpush1.msra.mxu0 0.0
  %910 = vmatprep.subr.mxu0 0.0
  %911 = vmatpush1.msra.mxu0 0.0
  %912 = vmatprep.subr.mxu0 0.0
  %913 = vmatpush1.msra.mxu0 0.0
  %914 = vmatprep.subr.mxu0 0.0
  %915 = vmatpush1.msra.mxu0 0.0
  %916 = vmatprep.subr.mxu0 0.0
  %917 = vmatpush1.msra.mxu0 0.0
  %918 = vmatprep.subr.mxu0 0.0
  %919 = vmatpush1.msra.mxu0 0.0
  %920 = vmatprep.subr.mxu0 0.0
  %921 = vmatpush1.msra.mxu0 0.0
  %922 = vmatprep.subr.mxu0 0.0
  %923 = vmatpush1.msra.mxu0 0.0
  %924 = vmatprep.subr.mxu0 0.0
  %925 = vmatpush1.msra.mxu0 0.0
  %926 = vmatprep.subr.mxu0 0.0
  %927 = vmatpush1.msra.mxu0 0.0
  %928 = vmatprep.subr.mxu0 0.0
  %929 = vmatpush1.msra.mxu0 0.0
  %930 = vmatprep.subr.mxu0 0.0
  %931 = vmatpush1.msra.mxu0 0.0
  %932 = vmatprep.subr.mxu0 0.0
  %933 = vmatpush1.msra.mxu0 0.0
  %934 = vmatprep.subr.mxu0 0.0
  %935 = vmatpush1.msra.mxu0 0.0
  %936 = vmatprep.mubr.f32.mxu0 0.0
  %937 = vmatmul.mubr.f32.gmra.mrb[0].mxu0 %v870
  %v938 = vpop.f32.mrb[0].mxu0
  %v939 = vadd.f32 0.0, %v938
  %v940 = vpop.f32.mrb[0].mxu0
  %v941 = vadd.f32 0.0, %v940
  %942 = vdwg.mxu0
  %v943 = vadd.f32 %v867, %v939
  %v944 = vadd.f32 %v868, %v941
  %v945 = vxor.u32 %v943, 2147483648
  %v946 = vxor.u32 %v944, 2147483648
  %v947 = vmul.f32 %v945, 1.442695
  %v948 = vpow.pop %v947
  %v949 = vmul.f32 %v946, 1.442695
  %v950 = vpow.pop %v949
  %v951 = vadd.f32 %v948, 1.0
  %v952 = vadd.f32 %v950, 1.0
  %v953 = vrcp.pop %v951
  %v954 = vmul.f32 1.0, %v953
  %v955 = vrcp.pop %v952
  %v956 = vmul.f32 1.0, %v955
  %v957 = vtanh.pop %v944
  %v958 = vmul.f32 %v954, %v854
  %960 = vrot.lane.b32.xlu0 %v957, 64
  %v961 = vpop.permute.xlu0 %960
  %v963 = vmul.f32 %v954, %v961
  %965 = vrot.lane.b32.xlu0 %v963, 64
  %v966 = vpop.permute.xlu0 %965
  %v968 = vadd.f32 %v958, %v966
  %v969 = vtanh.pop %v968
  %971 = vrot.lane.b32.xlu0 %v969, 64
  %v972 = vpop.permute.xlu0 %971
  %v974 = vmul.f32 %v956, %v972
  %975 = vst.msk [vmem:[#allocation4 + $0x20] sm:$0xff] %vm66, %v974
  %976 = vst.msk [vmem:[#allocation4 + $0x18] sm:$0xff] %vm519, %v974
  %v977 = vld [vmem:[#allocation2 + $0x50] sm:$0xff]
  %v978 = vld [vmem:[#allocation2 + $0x58] sm:$0xff]
  %v979 = vld [vmem:[#allocation3 + $0x20] sm:$0xff]
  %v980 = vld [vmem:[#allocation3 + $0x28] sm:$0xff]
  %v981 = vadd.f32 %v977, %v979
  %v982 = vadd.f32 %v978, %v980
  %v984 = vsel %vm411, %v974, 0
  %986 = vmatprep.subr.mxu0 %v390
  %987 = vmatpush1.msra.mxu0 %v389
  %988 = vmatprep.subr.mxu0 %v392
  %989 = vmatpush1.msra.mxu0 %v391
  %990 = vmatprep.subr.mxu0 %v394
  %991 = vmatpush1.msra.mxu0 %v393
  %992 = vmatprep.subr.mxu0 %v396
  %993 = vmatpush1.msra.mxu0 %v395
  %994 = vmatprep.subr.mxu0 %v398
  %995 = vmatpush1.msra.mxu0 %v397
  %996 = vmatprep.subr.mxu0 %v400
  %997 = vmatpush1.msra.mxu0 %v399
  %998 = vmatprep.subr.mxu0 %v402
  %999 = vmatpush1.msra.mxu0 %v401
  %1000 = vmatprep.subr.mxu0 %v404
  %1001 = vmatpush1.msra.mxu0 %v403
  %1002 = vmatprep.subr.mxu0 0.0
  %1003 = vmatpush1.msra.mxu0 0.0
  %1004 = vmatprep.subr.mxu0 0.0
  %1005 = vmatpush1.msra.mxu0 0.0
  %1006 = vmatprep.subr.mxu0 0.0
  %1007 = vmatpush1.msra.mxu0 0.0
  %1008 = vmatprep.subr.mxu0 0.0
  %1009 = vmatpush1.msra.mxu0 0.0
  %1010 = vmatprep.subr.mxu0 0.0
  %1011 = vmatpush1.msra.mxu0 0.0
  %1012 = vmatprep.subr.mxu0 0.0
  %1013 = vmatpush1.msra.mxu0 0.0
  %1014 = vmatprep.subr.mxu0 0.0
  %1015 = vmatpush1.msra.mxu0 0.0
  %1016 = vmatprep.subr.mxu0 0.0
  %1017 = vmatpush1.msra.mxu0 0.0
  %1018 = vmatprep.subr.mxu0 0.0
  %1019 = vmatpush1.msra.mxu0 0.0
  %1020 = vmatprep.subr.mxu0 0.0
  %1021 = vmatpush1.msra.mxu0 0.0
  %1022 = vmatprep.subr.mxu0 0.0
  %1023 = vmatpush1.msra.mxu0 0.0
  %1024 = vmatprep.subr.mxu0 0.0
  %1025 = vmatpush1.msra.mxu0 0.0
  %1026 = vmatprep.subr.mxu0 0.0
  %1027 = vmatpush1.msra.mxu0 0.0
  %1028 = vmatprep.subr.mxu0 0.0
  %1029 = vmatpush1.msra.mxu0 0.0
  %1030 = vmatprep.subr.mxu0 0.0
  %1031 = vmatpush1.msra.mxu0 0.0
  %1032 = vmatprep.subr.mxu0 0.0
  %1033 = vmatpush1.msra.mxu0 0.0
  %1034 = vmatprep.subr.mxu0 0.0
  %1035 = vmatpush1.msra.mxu0 0.0
  %1036 = vmatprep.subr.mxu0 0.0
  %1037 = vmatpush1.msra.mxu0 0.0
  %1038 = vmatprep.subr.mxu0 0.0
  %1039 = vmatpush1.msra.mxu0 0.0
  %1040 = vmatprep.subr.mxu0 0.0
  %1041 = vmatpush1.msra.mxu0 0.0
  %1042 = vmatprep.subr.mxu0 0.0
  %1043 = vmatpush1.msra.mxu0 0.0
  %1044 = vmatprep.subr.mxu0 0.0
  %1045 = vmatpush1.msra.mxu0 0.0
  %1046 = vmatprep.subr.mxu0 0.0
  %1047 = vmatpush1.msra.mxu0 0.0
  %1048 = vmatprep.subr.mxu0 0.0
  %1049 = vmatpush1.msra.mxu0 0.0
  %1050 = vmatprep.mubr.f32.mxu0 0.0
  %1051 = vmatmul.mubr.f32.gmra.mrb[0].mxu0 %v984
  %v1052 = vpop.f32.mrb[0].mxu0
  %v1053 = vadd.f32 0.0, %v1052
  %v1054 = vpop.f32.mrb[0].mxu0
  %v1055 = vadd.f32 0.0, %v1054
  %1056 = vdwg.mxu0
  %v1057 = vadd.f32 %v981, %v1053
  %v1058 = vadd.f32 %v982, %v1055
  %v1059 = vxor.u32 %v1057, 2147483648
  %v1060 = vxor.u32 %v1058, 2147483648
  %v1061 = vmul.f32 %v1059, 1.442695
  %v1062 = vpow.pop %v1061
  %v1063 = vmul.f32 %v1060, 1.442695
  %v1064 = vpow.pop %v1063
  %v1065 = vadd.f32 %v1062, 1.0
  %v1066 = vadd.f32 %v1064, 1.0
  %v1067 = vrcp.pop %v1065
  %v1068 = vmul.f32 1.0, %v1067
  %v1069 = vrcp.pop %v1066
  %v1070 = vmul.f32 1.0, %v1069
  %v1071 = vtanh.pop %v1058
  %v1072 = vmul.f32 %v1068, %v968
  %1074 = vrot.lane.b32.xlu0 %v1071, 64
  %v1075 = vpop.permute.xlu0 %1074
  %v1077 = vmul.f32 %v1068, %v1075
  %1079 = vrot.lane.b32.xlu0 %v1077, 64
  %v1080 = vpop.permute.xlu0 %1079
  %v1082 = vadd.f32 %v1072, %v1080
  %v1083 = vtanh.pop %v1082
  %1085 = vrot.lane.b32.xlu0 %v1083, 64
  %v1086 = vpop.permute.xlu0 %1085
  %v1088 = vmul.f32 %v1070, %v1086
  %1089 = vst.msk [vmem:[#allocation4 + $0x28] sm:$0xff] %vm66, %v1088
  %1090 = vst.msk [vmem:[#allocation4 + $0x10] sm:$0xff] %vm519, %v1088
  %v1091 = vld [vmem:[#allocation2 + $0x60] sm:$0xff]
  %v1092 = vld [vmem:[#allocation2 + $0x68] sm:$0xff]
  %v1093 = vld [vmem:[#allocation3 + $0x10] sm:$0xff]
  %v1094 = vld [vmem:[#allocation3 + $0x18] sm:$0xff]
  %v1095 = vadd.f32 %v1091, %v1093
  %v1096 = vadd.f32 %v1092, %v1094
  %v1098 = vsel %vm411, %v1088, 0
  %1100 = vmatprep.subr.mxu0 %v390
  %1101 = vmatpush1.msra.mxu0 %v389
  %1102 = vmatprep.subr.mxu0 %v392
  %1103 = vmatpush1.msra.mxu0 %v391
  %1104 = vmatprep.subr.mxu0 %v394
  %1105 = vmatpush1.msra.mxu0 %v393
  %1106 = vmatprep.subr.mxu0 %v396
  %1107 = vmatpush1.msra.mxu0 %v395
  %1108 = vmatprep.subr.mxu0 %v398
  %1109 = vmatpush1.msra.mxu0 %v397
  %1110 = vmatprep.subr.mxu0 %v400
  %1111 = vmatpush1.msra.mxu0 %v399
  %1112 = vmatprep.subr.mxu0 %v402
  %1113 = vmatpush1.msra.mxu0 %v401
  %1114 = vmatprep.subr.mxu0 %v404
  %1115 = vmatpush1.msra.mxu0 %v403
  %1116 = vmatprep.subr.mxu0 0.0
  %1117 = vmatpush1.msra.mxu0 0.0
  %1118 = vmatprep.subr.mxu0 0.0
  %1119 = vmatpush1.msra.mxu0 0.0
  %1120 = vmatprep.subr.mxu0 0.0
  %1121 = vmatpush1.msra.mxu0 0.0
  %1122 = vmatprep.subr.mxu0 0.0
  %1123 = vmatpush1.msra.mxu0 0.0
  %1124 = vmatprep.subr.mxu0 0.0
  %1125 = vmatpush1.msra.mxu0 0.0
  %1126 = vmatprep.subr.mxu0 0.0
  %1127 = vmatpush1.msra.mxu0 0.0
  %1128 = vmatprep.subr.mxu0 0.0
  %1129 = vmatpush1.msra.mxu0 0.0
  %1130 = vmatprep.subr.mxu0 0.0
  %1131 = vmatpush1.msra.mxu0 0.0
  %1132 = vmatprep.subr.mxu0 0.0
  %1133 = vmatpush1.msra.mxu0 0.0
  %1134 = vmatprep.subr.mxu0 0.0
  %1135 = vmatpush1.msra.mxu0 0.0
  %1136 = vmatprep.subr.mxu0 0.0
  %1137 = vmatpush1.msra.mxu0 0.0
  %1138 = vmatprep.subr.mxu0 0.0
  %1139 = vmatpush1.msra.mxu0 0.0
  %1140 = vmatprep.subr.mxu0 0.0
  %1141 = vmatpush1.msra.mxu0 0.0
  %1142 = vmatprep.subr.mxu0 0.0
  %1143 = vmatpush1.msra.mxu0 0.0
  %1144 = vmatprep.subr.mxu0 0.0
  %1145 = vmatpush1.msra.mxu0 0.0
  %1146 = vmatprep.subr.mxu0 0.0
  %1147 = vmatpush1.msra.mxu0 0.0
  %1148 = vmatprep.subr.mxu0 0.0
  %1149 = vmatpush1.msra.mxu0 0.0
  %1150 = vmatprep.subr.mxu0 0.0
  %1151 = vmatpush1.msra.mxu0 0.0
  %1152 = vmatprep.subr.mxu0 0.0
  %1153 = vmatpush1.msra.mxu0 0.0
  %1154 = vmatprep.subr.mxu0 0.0
  %1155 = vmatpush1.msra.mxu0 0.0
  %1156 = vmatprep.subr.mxu0 0.0
  %1157 = vmatpush1.msra.mxu0 0.0
  %1158 = vmatprep.subr.mxu0 0.0
  %1159 = vmatpush1.msra.mxu0 0.0
  %1160 = vmatprep.subr.mxu0 0.0
  %1161 = vmatpush1.msra.mxu0 0.0
  %1162 = vmatprep.subr.mxu0 0.0
  %1163 = vmatpush1.msra.mxu0 0.0
  %1164 = vmatprep.mubr.f32.mxu0 0.0
  %1165 = vmatmul.mubr.f32.gmra.mrb[0].mxu0 %v1098
  %v1166 = vpop.f32.mrb[0].mxu0
  %v1167 = vadd.f32 0.0, %v1166
  %v1168 = vpop.f32.mrb[0].mxu0
  %v1169 = vadd.f32 0.0, %v1168
  %1170 = vdwg.mxu0
  %v1171 = vadd.f32 %v1095, %v1167
  %v1172 = vadd.f32 %v1096, %v1169
  %v1173 = vxor.u32 %v1171, 2147483648
  %v1174 = vxor.u32 %v1172, 2147483648
  %v1175 = vmul.f32 %v1173, 1.442695
  %v1176 = vpow.pop %v1175
  %v1177 = vmul.f32 %v1174, 1.442695
  %v1178 = vpow.pop %v1177
  %v1179 = vadd.f32 %v1176, 1.0
  %v1180 = vadd.f32 %v1178, 1.0
  %v1181 = vrcp.pop %v1179
  %v1182 = vmul.f32 1.0, %v1181
  %v1183 = vrcp.pop %v1180
  %v1184 = vmul.f32 1.0, %v1183
  %v1185 = vtanh.pop %v1172
  %v1186 = vmul.f32 %v1182, %v1082
  %1188 = vrot.lane.b32.xlu0 %v1185, 64
  %v1189 = vpop.permute.xlu0 %1188
  %v1191 = vmul.f32 %v1182, %v1189
  %1193 = vrot.lane.b32.xlu0 %v1191, 64
  %v1194 = vpop.permute.xlu0 %1193
  %v1196 = vadd.f32 %v1186, %v1194
  %v1197 = vtanh.pop %v1196
  %1199 = vrot.lane.b32.xlu0 %v1197, 64
  %v1200 = vpop.permute.xlu0 %1199
  %v1202 = vmul.f32 %v1184, %v1200
  %1203 = vst.msk [vmem:[#allocation4 + $0x30] sm:$0xff] %vm66, %v1202
  %1204 = vst.msk [vmem:[#allocation4 + $0x8] sm:$0xff] %vm519, %v1202
  %v1205 = vld [vmem:[#allocation2 + $0x70] sm:$0xff]
  %v1206 = vld [vmem:[#allocation2 + $0x78] sm:$0xff]
  %v1207 = vld [vmem:[#allocation3] sm:$0xff]
  %v1208 = vld [vmem:[#allocation3 + $0x8] sm:$0xff]
  %v1209 = vadd.f32 %v1205, %v1207
  %v1210 = vadd.f32 %v1206, %v1208
  %v1212 = vsel %vm411, %v1202, 0
  %1214 = vmatprep.subr.mxu0 %v390
  %1215 = vmatpush1.msra.mxu0 %v389
  %1216 = vmatprep.subr.mxu0 %v392
  %1217 = vmatpush1.msra.mxu0 %v391
  %1218 = vmatprep.subr.mxu0 %v394
  %1219 = vmatpush1.msra.mxu0 %v393
  %1220 = vmatprep.subr.mxu0 %v396
  %1221 = vmatpush1.msra.mxu0 %v395
  %1222 = vmatprep.subr.mxu0 %v398
  %1223 = vmatpush1.msra.mxu0 %v397
  %1224 = vmatprep.subr.mxu0 %v400
  %1225 = vmatpush1.msra.mxu0 %v399
  %1226 = vmatprep.subr.mxu0 %v402
  %1227 = vmatpush1.msra.mxu0 %v401
  %1228 = vmatprep.subr.mxu0 %v404
  %1229 = vmatpush1.msra.mxu0 %v403
  %1230 = vmatprep.subr.mxu0 0.0
  %1231 = vmatpush1.msra.mxu0 0.0
  %1232 = vmatprep.subr.mxu0 0.0
  %1233 = vmatpush1.msra.mxu0 0.0
  %1234 = vmatprep.subr.mxu0 0.0
  %1235 = vmatpush1.msra.mxu0 0.0
  %1236 = vmatprep.subr.mxu0 0.0
  %1237 = vmatpush1.msra.mxu0 0.0
  %1238 = vmatprep.subr.mxu0 0.0
  %1239 = vmatpush1.msra.mxu0 0.0
  %1240 = vmatprep.subr.mxu0 0.0
  %1241 = vmatpush1.msra.mxu0 0.0
  %1242 = vmatprep.subr.mxu0 0.0
  %1243 = vmatpush1.msra.mxu0 0.0
  %1244 = vmatprep.subr.mxu0 0.0
  %1245 = vmatpush1.msra.mxu0 0.0
  %1246 = vmatprep.subr.mxu0 0.0
  %1247 = vmatpush1.msra.mxu0 0.0
  %1248 = vmatprep.subr.mxu0 0.0
  %1249 = vmatpush1.msra.mxu0 0.0
  %1250 = vmatprep.subr.mxu0 0.0
  %1251 = vmatpush1.msra.mxu0 0.0
  %1252 = vmatprep.subr.mxu0 0.0
  %1253 = vmatpush1.msra.mxu0 0.0
  %1254 = vmatprep.subr.mxu0 0.0
  %1255 = vmatpush1.msra.mxu0 0.0
  %1256 = vmatprep.subr.mxu0 0.0
  %1257 = vmatpush1.msra.mxu0 0.0
  %1258 = vmatprep.subr.mxu0 0.0
  %1259 = vmatpush1.msra.mxu0 0.0
  %1260 = vmatprep.subr.mxu0 0.0
  %1261 = vmatpush1.msra.mxu0 0.0
  %1262 = vmatprep.subr.mxu0 0.0
  %1263 = vmatpush1.msra.mxu0 0.0
  %1264 = vmatprep.subr.mxu0 0.0
  %1265 = vmatpush1.msra.mxu0 0.0
  %1266 = vmatprep.subr.mxu0 0.0
  %1267 = vmatpush1.msra.mxu0 0.0
  %1268 = vmatprep.subr.mxu0 0.0
  %1269 = vmatpush1.msra.mxu0 0.0
  %1270 = vmatprep.subr.mxu0 0.0
  %1271 = vmatpush1.msra.mxu0 0.0
  %1272 = vmatprep.subr.mxu0 0.0
  %1273 = vmatpush1.msra.mxu0 0.0
  %1274 = vmatprep.subr.mxu0 0.0
  %1275 = vmatpush1.msra.mxu0 0.0
  %1276 = vmatprep.subr.mxu0 0.0
  %1277 = vmatpush1.msra.mxu0 0.0
  %1278 = vmatprep.mubr.f32.mxu0 0.0
  %1279 = vmatmul.mubr.f32.gmra.mrb[0].mxu0 %v1212
  %v1280 = vpop.f32.mrb[0].mxu0
  %v1281 = vadd.f32 0.0, %v1280
  %v1282 = vpop.f32.mrb[0].mxu0
  %v1283 = vadd.f32 0.0, %v1282
  %1284 = vdwg.mxu0
  %v1285 = vadd.f32 %v1209, %v1281
  %v1286 = vadd.f32 %v1210, %v1283
  %v1287 = vxor.u32 %v1285, 2147483648
  %v1288 = vxor.u32 %v1286, 2147483648
  %v1289 = vmul.f32 %v1287, 1.442695
  %v1290 = vpow.pop %v1289
  %v1291 = vmul.f32 %v1288, 1.442695
  %v1292 = vpow.pop %v1291
  %v1293 = vadd.f32 %v1290, 1.0
  %v1294 = vadd.f32 %v1292, 1.0
  %v1295 = vrcp.pop %v1293
  %v1296 = vmul.f32 1.0, %v1295
  %v1297 = vrcp.pop %v1294
  %v1298 = vmul.f32 1.0, %v1297
  %v1299 = vtanh.pop %v1286
  %v1300 = vmul.f32 %v1296, %v1196
  %1302 = vrot.lane.b32.xlu0 %v1299, 64
  %v1303 = vpop.permute.xlu0 %1302
  %v1305 = vmul.f32 %v1296, %v1303
  %1307 = vrot.lane.b32.xlu0 %v1305, 64
  %v1308 = vpop.permute.xlu0 %1307
  %v1310 = vadd.f32 %v1300, %v1308
  %v1311 = vtanh.pop %v1310
  %1313 = vrot.lane.b32.xlu0 %v1311, 64
  %v1314 = vpop.permute.xlu0 %1313
  %v1316 = vmul.f32 %v1298, %v1314
  %1317 = vst.msk [vmem:[#allocation4 + $0x38] sm:$0xff] %vm66, %v1316
  %1318 = vst.msk [vmem:[#allocation4] sm:$0xff] %vm519, %v1316
  %v1319 = vld [vmem:[#allocation4] sm:$0xff]
  %v1320 = vld [vmem:[#allocation4 + $0x8] sm:$0xff]
  %v1321 = vld [vmem:[#allocation4 + $0x10] sm:$0xff]
  %v1322 = vld [vmem:[#allocation4 + $0x18] sm:$0xff]
  %v1323 = vld [vmem:[#allocation4 + $0x20] sm:$0xff]
  %v1324 = vld [vmem:[#allocation4 + $0x28] sm:$0xff]
  %v1325 = vld [vmem:[#allocation4 + $0x30] sm:$0xff]
  %v1326 = vld [vmem:[#allocation4 + $0x38] sm:$0xff]
  %v1327 = vld [vmem:[%s5] sm:$0xff]
  %v1328 = vld [vmem:[%s5 + $0x8] sm:$0xff]
  %v1329 = vld [vmem:[%s5 + $0x10] sm:$0xff]
  %v1330 = vld [vmem:[%s5 + $0x18] sm:$0xff]
  %v1331 = vld [vmem:[%s5 + $0x20] sm:$0xff]
  %v1332 = vld [vmem:[%s5 + $0x28] sm:$0xff]
  %v1333 = vld [vmem:[%s5 + $0x30] sm:$0xff]
  %v1334 = vld [vmem:[%s5 + $0x38] sm:$0xff]
  %v1335 = vld [vmem:[%s5 + $0x40] sm:$0xff]
  %v1336 = vld [vmem:[%s5 + $0x48] sm:$0xff]
  %v1337 = vld [vmem:[%s5 + $0x50] sm:$0xff]
  %v1338 = vld [vmem:[%s5 + $0x58] sm:$0xff]
  %v1339 = vld [vmem:[%s5 + $0x60] sm:$0xff]
  %v1340 = vld [vmem:[%s5 + $0x68] sm:$0xff]
  %v1341 = vld [vmem:[%s5 + $0x70] sm:$0xff]
  %v1342 = vld [vmem:[%s5 + $0x78] sm:$0xff]
  %v1343 = vld [vmem:[%s8] sm:$0x3]
  %v1345 = vlaneseq
  %v1346 = vshrl.u32 %v1345, 7
  %v1347 = vsub.s32 0, %v1346
  %v1348 = vrot.slane %v1343, %v1347
  %v1349 = vlaneseq
  %v1350 = vshrl.u32 %v1349, 7
  %v1351 = vsub.s32 1, %v1350
  %v1352 = vrot.slane %v1343, %v1351
  %v1356 = vsel %vm411, %v1319, 0
  %v1359 = vsel %vm411, %v1320, 0
  %v1362 = vsel %vm411, %v1321, 0
  %v1365 = vsel %vm411, %v1322, 0
  %v1368 = vsel %vm411, %v1323, 0
  %v1371 = vsel %vm411, %v1324, 0
  %v1374 = vsel %vm411, %v1325, 0
  %v1377 = vsel %vm411, %v1326, 0
  %1379 = vmatprep.subr.mxu0 %v1328
  %1380 = vmatpush1.msra.mxu0 %v1327
  %1381 = vmatprep.subr.mxu0 %v1330
  %1382 = vmatpush1.msra.mxu0 %v1329
  %1383 = vmatprep.subr.mxu0 %v1332
  %1384 = vmatpush1.msra.mxu0 %v1331
  %1385 = vmatprep.subr.mxu0 %v1334
  %1386 = vmatpush1.msra.mxu0 %v1333
  %1387 = vmatprep.subr.mxu0 %v1336
  %1388 = vmatpush1.msra.mxu0 %v1335
  %1389 = vmatprep.subr.mxu0 %v1338
  %1390 = vmatpush1.msra.mxu0 %v1337
  %1391 = vmatprep.subr.mxu0 %v1340
  %1392 = vmatpush1.msra.mxu0 %v1339
  %1393 = vmatprep.subr.mxu0 %v1342
  %1394 = vmatpush1.msra.mxu0 %v1341
  %1395 = vmatprep.subr.mxu0 0.0
  %1396 = vmatpush1.msra.mxu0 0.0
  %1397 = vmatprep.subr.mxu0 0.0
  %1398 = vmatpush1.msra.mxu0 0.0
  %1399 = vmatprep.subr.mxu0 0.0
  %1400 = vmatpush1.msra.mxu0 0.0
  %1401 = vmatprep.subr.mxu0 0.0
  %1402 = vmatpush1.msra.mxu0 0.0
  %1403 = vmatprep.subr.mxu0 0.0
  %1404 = vmatpush1.msra.mxu0 0.0
  %1405 = vmatprep.subr.mxu0 0.0
  %1406 = vmatpush1.msra.mxu0 0.0
  %1407 = vmatprep.subr.mxu0 0.0
  %1408 = vmatpush1.msra.mxu0 0.0
  %1409 = vmatprep.subr.mxu0 0.0
  %1410 = vmatpush1.msra.mxu0 0.0
  %1411 = vmatprep.subr.mxu0 0.0
  %1412 = vmatpush1.msra.mxu0 0.0
  %1413 = vmatprep.subr.mxu0 0.0
  %1414 = vmatpush1.msra.mxu0 0.0
  %1415 = vmatprep.subr.mxu0 0.0
  %1416 = vmatpush1.msra.mxu0 0.0
  %1417 = vmatprep.subr.mxu0 0.0
  %1418 = vmatpush1.msra.mxu0 0.0
  %1419 = vmatprep.subr.mxu0 0.0
  %1420 = vmatpush1.msra.mxu0 0.0
  %1421 = vmatprep.subr.mxu0 0.0
  %1422 = vmatpush1.msra.mxu0 0.0
  %1423 = vmatprep.subr.mxu0 0.0
  %1424 = vmatpush1.msra.mxu0 0.0
  %1425 = vmatprep.subr.mxu0 0.0
  %1426 = vmatpush1.msra.mxu0 0.0
  %1427 = vmatprep.subr.mxu0 0.0
  %1428 = vmatpush1.msra.mxu0 0.0
  %1429 = vmatprep.subr.mxu0 0.0
  %1430 = vmatpush1.msra.mxu0 0.0
  %1431 = vmatprep.subr.mxu0 0.0
  %1432 = vmatpush1.msra.mxu0 0.0
  %1433 = vmatprep.subr.mxu0 0.0
  %1434 = vmatpush1.msra.mxu0 0.0
  %1435 = vmatprep.subr.mxu0 0.0
  %1436 = vmatpush1.msra.mxu0 0.0
  %1437 = vmatprep.subr.mxu0 0.0
  %1438 = vmatpush1.msra.mxu0 0.0
  %1439 = vmatprep.subr.mxu0 0.0
  %1440 = vmatpush1.msra.mxu0 0.0
  %1441 = vmatprep.subr.mxu0 0.0
  %1442 = vmatpush1.msra.mxu0 0.0
  %1443 = vmatprep.mubr.f32.mxu0 0.0
  %1444 = vmatmul.mubr.f32.gmra.mrb[0].mxu0 %v1356
  %v1445 = vpop.f32.mrb[0].mxu0
  %v1446 = vadd.f32 %v1348, %v1445
  %v1447 = vpop.f32.mrb[0].mxu0
  %v1448 = vadd.f32 %v1352, %v1447
  %1449 = vmatprep.mubr.f32.mxu0 0.0
  %1450 = vmatmul.mubr.f32.gmra.mrb[0].mxu0 %v1359
  %v1451 = vpop.f32.mrb[0].mxu0
  %v1452 = vadd.f32 %v1348, %v1451
  %v1453 = vpop.f32.mrb[0].mxu0
  %v1454 = vadd.f32 %v1352, %v1453
  %1455 = vmatprep.mubr.f32.mxu0 0.0
  %1456 = vmatmul.mubr.f32.gmra.mrb[0].mxu0 %v1362
  %v1457 = vpop.f32.mrb[0].mxu0
  %v1458 = vadd.f32 %v1348, %v1457
  %v1459 = vpop.f32.mrb[0].mxu0
  %v1460 = vadd.f32 %v1352, %v1459
  %1461 = vmatprep.mubr.f32.mxu0 0.0
  %1462 = vmatmul.mubr.f32.gmra.mrb[0].mxu0 %v1365
  %v1463 = vpop.f32.mrb[0].mxu0
  %v1464 = vadd.f32 %v1348, %v1463
  %v1465 = vpop.f32.mrb[0].mxu0
  %v1466 = vadd.f32 %v1352, %v1465
  %1467 = vmatprep.mubr.f32.mxu0 0.0
  %1468 = vmatmul.mubr.f32.gmra.mrb[0].mxu0 %v1368
  %v1469 = vpop.f32.mrb[0].mxu0
  %v1470 = vadd.f32 %v1348, %v1469
  %v1471 = vpop.f32.mrb[0].mxu0
  %v1472 = vadd.f32 %v1352, %v1471
  %1473 = vmatprep.mubr.f32.mxu0 0.0
  %1474 = vmatmul.mubr.f32.gmra.mrb[0].mxu0 %v1371
  %v1475 = vpop.f32.mrb[0].mxu0
  %v1476 = vadd.f32 %v1348, %v1475
  %v1477 = vpop.f32.mrb[0].mxu0
  %v1478 = vadd.f32 %v1352, %v1477
  %1479 = vmatprep.mubr.f32.mxu0 0.0
  %1480 = vmatmul.mubr.f32.gmra.mrb[0].mxu0 %v1374
  %v1481 = vpop.f32.mrb[0].mxu0
  %v1482 = vadd.f32 %v1348, %v1481
  %v1483 = vpop.f32.mrb[0].mxu0
  %v1484 = vadd.f32 %v1352, %v1483
  %1485 = vmatprep.mubr.f32.mxu0 0.0
  %1486 = vmatmul.mubr.f32.gmra.mrb[0].mxu0 %v1377
  %v1487 = vpop.f32.mrb[0].mxu0
  %v1488 = vadd.f32 %v1348, %v1487
  %v1489 = vpop.f32.mrb[0].mxu0
  %v1490 = vadd.f32 %v1352, %v1489
  %1491 = vdwg.mxu0
  %1492 = vst [vmem:[#allocation2] sm:$0xff] %v1446
  %1493 = vst [vmem:[#allocation2 + $0x8] sm:$0xff] %v1448
  %1494 = vst [vmem:[#allocation2 + $0x10] sm:$0xff] %v1452
  %1495 = vst [vmem:[#allocation2 + $0x18] sm:$0xff] %v1454
  %1496 = vst [vmem:[#allocation2 + $0x20] sm:$0xff] %v1458
  %1497 = vst [vmem:[#allocation2 + $0x28] sm:$0xff] %v1460
  %1498 = vst [vmem:[#allocation2 + $0x30] sm:$0xff] %v1464
  %1499 = vst [vmem:[#allocation2 + $0x38] sm:$0xff] %v1466
  %1500 = vst [vmem:[#allocation2 + $0x40] sm:$0xff] %v1470
  %1501 = vst [vmem:[#allocation2 + $0x48] sm:$0xff] %v1472
  %1502 = vst [vmem:[#allocation2 + $0x50] sm:$0xff] %v1476
  %1503 = vst [vmem:[#allocation2 + $0x58] sm:$0xff] %v1478
  %1504 = vst [vmem:[#allocation2 + $0x60] sm:$0xff] %v1482
  %1505 = vst [vmem:[#allocation2 + $0x68] sm:$0xff] %v1484
  %1506 = vst [vmem:[#allocation2 + $0x70] sm:$0xff] %v1488
  %1507 = vst [vmem:[#allocation2 + $0x78] sm:$0xff] %v1490
  %v1508 = vld [vmem:[#allocation4] sm:$0xff]
  %v1509 = vld [vmem:[#allocation4 + $0x8] sm:$0xff]
  %v1510 = vld [vmem:[#allocation4 + $0x10] sm:$0xff]
  %v1511 = vld [vmem:[#allocation4 + $0x18] sm:$0xff]
  %v1512 = vld [vmem:[#allocation4 + $0x20] sm:$0xff]
  %v1513 = vld [vmem:[#allocation4 + $0x28] sm:$0xff]
  %v1514 = vld [vmem:[#allocation4 + $0x30] sm:$0xff]
  %v1515 = vld [vmem:[#allocation4 + $0x38] sm:$0xff]
  %v1516 = vld [vmem:[%s6] sm:$0xff]
  %v1517 = vld [vmem:[%s6 + $0x8] sm:$0xff]
  %v1518 = vld [vmem:[%s6 + $0x10] sm:$0xff]
  %v1519 = vld [vmem:[%s6 + $0x18] sm:$0xff]
  %v1520 = vld [vmem:[%s6 + $0x20] sm:$0xff]
  %v1521 = vld [vmem:[%s6 + $0x28] sm:$0xff]
  %v1522 = vld [vmem:[%s6 + $0x30] sm:$0xff]
  %v1523 = vld [vmem:[%s6 + $0x38] sm:$0xff]
  %v1524 = vld [vmem:[%s6 + $0x40] sm:$0xff]
  %v1525 = vld [vmem:[%s6 + $0x48] sm:$0xff]
  %v1526 = vld [vmem:[%s6 + $0x50] sm:$0xff]
  %v1527 = vld [vmem:[%s6 + $0x58] sm:$0xff]
  %v1528 = vld [vmem:[%s6 + $0x60] sm:$0xff]
  %v1529 = vld [vmem:[%s6 + $0x68] sm:$0xff]
  %v1530 = vld [vmem:[%s6 + $0x70] sm:$0xff]
  %v1531 = vld [vmem:[%s6 + $0x78] sm:$0xff]
  %v1533 = vsel %vm411, %v1508, 0
  %v1536 = vsel %vm411, %v1509, 0
  %v1539 = vsel %vm411, %v1510, 0
  %v1542 = vsel %vm411, %v1511, 0
  %v1545 = vsel %vm411, %v1512, 0
  %v1548 = vsel %vm411, %v1513, 0
  %v1551 = vsel %vm411, %v1514, 0
  %v1554 = vsel %vm411, %v1515, 0
  %1556 = vmatprep.subr.mxu0 %v1517
  %1557 = vmatpush1.msra.mxu0 %v1516
  %1558 = vmatprep.subr.mxu0 %v1519
  %1559 = vmatpush1.msra.mxu0 %v1518
  %1560 = vmatprep.subr.mxu0 %v1521
  %1561 = vmatpush1.msra.mxu0 %v1520
  %1562 = vmatprep.subr.mxu0 %v1523
  %1563 = vmatpush1.msra.mxu0 %v1522
  %1564 = vmatprep.subr.mxu0 %v1525
  %1565 = vmatpush1.msra.mxu0 %v1524
  %1566 = vmatprep.subr.mxu0 %v1527
  %1567 = vmatpush1.msra.mxu0 %v1526
  %1568 = vmatprep.subr.mxu0 %v1529
  %1569 = vmatpush1.msra.mxu0 %v1528
  %1570 = vmatprep.subr.mxu0 %v1531
  %1571 = vmatpush1.msra.mxu0 %v1530
  %1572 = vmatprep.subr.mxu0 0.0
  %1573 = vmatpush1.msra.mxu0 0.0
  %1574 = vmatprep.subr.mxu0 0.0
  %1575 = vmatpush1.msra.mxu0 0.0
  %1576 = vmatprep.subr.mxu0 0.0
  %1577 = vmatpush1.msra.mxu0 0.0
  %1578 = vmatprep.subr.mxu0 0.0
  %1579 = vmatpush1.msra.mxu0 0.0
  %1580 = vmatprep.subr.mxu0 0.0
  %1581 = vmatpush1.msra.mxu0 0.0
  %1582 = vmatprep.subr.mxu0 0.0
  %1583 = vmatpush1.msra.mxu0 0.0
  %1584 = vmatprep.subr.mxu0 0.0
  %1585 = vmatpush1.msra.mxu0 0.0
  %1586 = vmatprep.subr.mxu0 0.0
  %1587 = vmatpush1.msra.mxu0 0.0
  %1588 = vmatprep.subr.mxu0 0.0
  %1589 = vmatpush1.msra.mxu0 0.0
  %1590 = vmatprep.subr.mxu0 0.0
  %1591 = vmatpush1.msra.mxu0 0.0
  %1592 = vmatprep.subr.mxu0 0.0
  %1593 = vmatpush1.msra.mxu0 0.0
  %1594 = vmatprep.subr.mxu0 0.0
  %1595 = vmatpush1.msra.mxu0 0.0
  %1596 = vmatprep.subr.mxu0 0.0
  %1597 = vmatpush1.msra.mxu0 0.0
  %1598 = vmatprep.subr.mxu0 0.0
  %1599 = vmatpush1.msra.mxu0 0.0
  %1600 = vmatprep.subr.mxu0 0.0
  %1601 = vmatpush1.msra.mxu0 0.0
  %1602 = vmatprep.subr.mxu0 0.0
  %1603 = vmatpush1.msra.mxu0 0.0
  %1604 = vmatprep.subr.mxu0 0.0
  %1605 = vmatpush1.msra.mxu0 0.0
  %1606 = vmatprep.subr.mxu0 0.0
  %1607 = vmatpush1.msra.mxu0 0.0
  %1608 = vmatprep.subr.mxu0 0.0
  %1609 = vmatpush1.msra.mxu0 0.0
  %1610 = vmatprep.subr.mxu0 0.0
  %1611 = vmatpush1.msra.mxu0 0.0
  %1612 = vmatprep.subr.mxu0 0.0
  %1613 = vmatpush1.msra.mxu0 0.0
  %1614 = vmatprep.subr.mxu0 0.0
  %1615 = vmatpush1.msra.mxu0 0.0
  %1616 = vmatprep.subr.mxu0 0.0
  %1617 = vmatpush1.msra.mxu0 0.0
  %1618 = vmatprep.subr.mxu0 0.0
  %1619 = vmatpush1.msra.mxu0 0.0
  %1620 = vmatprep.mubr.f32.mxu0 0.0
  %1621 = vmatmul.mubr.f32.gmra.mrb[0].mxu0 %v1533
  %v1622 = vpop.f32.mrb[0].mxu0
  %v1623 = vadd.f32 0.0, %v1622
  %v1624 = vpop.f32.mrb[0].mxu0
  %v1625 = vadd.f32 0.0, %v1624
  %1626 = vmatprep.mubr.f32.mxu0 0.0
  %1627 = vmatmul.mubr.f32.gmra.mrb[0].mxu0 %v1536
  %v1628 = vpop.f32.mrb[0].mxu0
  %v1629 = vadd.f32 0.0, %v1628
  %v1630 = vpop.f32.mrb[0].mxu0
  %v1631 = vadd.f32 0.0, %v1630
  %1632 = vmatprep.mubr.f32.mxu0 0.0
  %1633 = vmatmul.mubr.f32.gmra.mrb[0].mxu0 %v1539
  %v1634 = vpop.f32.mrb[0].mxu0
  %v1635 = vadd.f32 0.0, %v1634
  %v1636 = vpop.f32.mrb[0].mxu0
  %v1637 = vadd.f32 0.0, %v1636
  %1638 = vmatprep.mubr.f32.mxu0 0.0
  %1639 = vmatmul.mubr.f32.gmra.mrb[0].mxu0 %v1542
  %v1640 = vpop.f32.mrb[0].mxu0
  %v1641 = vadd.f32 0.0, %v1640
  %v1642 = vpop.f32.mrb[0].mxu0
  %v1643 = vadd.f32 0.0, %v1642
  %1644 = vmatprep.mubr.f32.mxu0 0.0
  %1645 = vmatmul.mubr.f32.gmra.mrb[0].mxu0 %v1545
  %v1646 = vpop.f32.mrb[0].mxu0
  %v1647 = vadd.f32 0.0, %v1646
  %v1648 = vpop.f32.mrb[0].mxu0
  %v1649 = vadd.f32 0.0, %v1648
  %1650 = vmatprep.mubr.f32.mxu0 0.0
  %1651 = vmatmul.mubr.f32.gmra.mrb[0].mxu0 %v1548
  %v1652 = vpop.f32.mrb[0].mxu0
  %v1653 = vadd.f32 0.0, %v1652
  %v1654 = vpop.f32.mrb[0].mxu0
  %v1655 = vadd.f32 0.0, %v1654
  %1656 = vmatprep.mubr.f32.mxu0 0.0
  %1657 = vmatmul.mubr.f32.gmra.mrb[0].mxu0 %v1551
  %v1658 = vpop.f32.mrb[0].mxu0
  %v1659 = vadd.f32 0.0, %v1658
  %v1660 = vpop.f32.mrb[0].mxu0
  %v1661 = vadd.f32 0.0, %v1660
  %1662 = vmatprep.mubr.f32.mxu0 0.0
  %1663 = vmatmul.mubr.f32.gmra.mrb[0].mxu0 %v1554
  %v1664 = vpop.f32.mrb[0].mxu0
  %v1665 = vadd.f32 0.0, %v1664
  %v1666 = vpop.f32.mrb[0].mxu0
  %v1667 = vadd.f32 0.0, %v1666
  %1668 = vdwg.mxu0
  %1669 = vst [vmem:[#allocation3] sm:$0xff] %v1623
  %1670 = vst [vmem:[#allocation3 + $0x8] sm:$0xff] %v1625
  %1671 = vst [vmem:[#allocation3 + $0x10] sm:$0xff] %v1629
  %1672 = vst [vmem:[#allocation3 + $0x18] sm:$0xff] %v1631
  %1673 = vst [vmem:[#allocation3 + $0x20] sm:$0xff] %v1635
  %1674 = vst [vmem:[#allocation3 + $0x28] sm:$0xff] %v1637
  %1675 = vst [vmem:[#allocation3 + $0x30] sm:$0xff] %v1641
  %1676 = vst [vmem:[#allocation3 + $0x38] sm:$0xff] %v1643
  %1677 = vst [vmem:[#allocation3 + $0x40] sm:$0xff] %v1647
  %1678 = vst [vmem:[#allocation3 + $0x48] sm:$0xff] %v1649
  %1679 = vst [vmem:[#allocation3 + $0x50] sm:$0xff] %v1653
  %1680 = vst [vmem:[#allocation3 + $0x58] sm:$0xff] %v1655
  %1681 = vst [vmem:[#allocation3 + $0x60] sm:$0xff] %v1659
  %1682 = vst [vmem:[#allocation3 + $0x68] sm:$0xff] %v1661
  %1683 = vst [vmem:[#allocation3 + $0x70] sm:$0xff] %v1665
  %1684 = vst [vmem:[#allocation3 + $0x78] sm:$0xff] %v1667
  %v1685 = vld [vmem:[%s7] sm:$0xff]
  %v1686 = vld [vmem:[%s7 + $0x8] sm:$0xff]
  %v1687 = vld [vmem:[%s7 + $0x10] sm:$0xff]
  %v1688 = vld [vmem:[%s7 + $0x18] sm:$0xff]
  %v1689 = vld [vmem:[%s7 + $0x20] sm:$0xff]
  %v1690 = vld [vmem:[%s7 + $0x28] sm:$0xff]
  %v1691 = vld [vmem:[%s7 + $0x30] sm:$0xff]
  %v1692 = vld [vmem:[%s7 + $0x38] sm:$0xff]
  %v1693 = vld [vmem:[%s7 + $0x40] sm:$0xff]
  %v1694 = vld [vmem:[%s7 + $0x48] sm:$0xff]
  %v1695 = vld [vmem:[%s7 + $0x50] sm:$0xff]
  %v1696 = vld [vmem:[%s7 + $0x58] sm:$0xff]
  %v1697 = vld [vmem:[%s7 + $0x60] sm:$0xff]
  %v1698 = vld [vmem:[%s7 + $0x68] sm:$0xff]
  %v1699 = vld [vmem:[%s7 + $0x70] sm:$0xff]
  %v1700 = vld [vmem:[%s7 + $0x78] sm:$0xff]
  %v1701 = vld [vmem:[#allocation2] sm:$0xff]
  %v1702 = vld [vmem:[#allocation2 + $0x8] sm:$0xff]
  %v1703 = vld [vmem:[#allocation3 + $0x70] sm:$0xff]
  %v1704 = vld [vmem:[#allocation3 + $0x78] sm:$0xff]
  %v1705 = vadd.f32 %v1701, %v1703
  %v1706 = vadd.f32 %v1702, %v1704
  %1707 = vmatprep.subr.mxu0 %v1686
  %1708 = vmatpush1.msra.mxu0 %v1685
  %1709 = vmatprep.subr.mxu0 %v1688
  %1710 = vmatpush1.msra.mxu0 %v1687
  %1711 = vmatprep.subr.mxu0 %v1690
  %1712 = vmatpush1.msra.mxu0 %v1689
  %1713 = vmatprep.subr.mxu0 %v1692
  %1714 = vmatpush1.msra.mxu0 %v1691
  %1715 = vmatprep.subr.mxu0 %v1694
  %1716 = vmatpush1.msra.mxu0 %v1693
  %1717 = vmatprep.subr.mxu0 %v1696
  %1718 = vmatpush1.msra.mxu0 %v1695
  %1719 = vmatprep.subr.mxu0 %v1698
  %1720 = vmatpush1.msra.mxu0 %v1697
  %1721 = vmatprep.subr.mxu0 %v1700
  %1722 = vmatpush1.msra.mxu0 %v1699
  %1723 = vmatprep.subr.mxu0 0.0
  %1724 = vmatpush1.msra.mxu0 0.0
  %1725 = vmatprep.subr.mxu0 0.0
  %1726 = vmatpush1.msra.mxu0 0.0
  %1727 = vmatprep.subr.mxu0 0.0
  %1728 = vmatpush1.msra.mxu0 0.0
  %1729 = vmatprep.subr.mxu0 0.0
  %1730 = vmatpush1.msra.mxu0 0.0
  %1731 = vmatprep.subr.mxu0 0.0
  %1732 = vmatpush1.msra.mxu0 0.0
  %1733 = vmatprep.subr.mxu0 0.0
  %1734 = vmatpush1.msra.mxu0 0.0
  %1735 = vmatprep.subr.mxu0 0.0
  %1736 = vmatpush1.msra.mxu0 0.0
  %1737 = vmatprep.subr.mxu0 0.0
  %1738 = vmatpush1.msra.mxu0 0.0
  %1739 = vmatprep.subr.mxu0 0.0
  %1740 = vmatpush1.msra.mxu0 0.0
  %1741 = vmatprep.subr.mxu0 0.0
  %1742 = vmatpush1.msra.mxu0 0.0
  %1743 = vmatprep.subr.mxu0 0.0
  %1744 = vmatpush1.msra.mxu0 0.0
  %1745 = vmatprep.subr.mxu0 0.0
  %1746 = vmatpush1.msra.mxu0 0.0
  %1747 = vmatprep.subr.mxu0 0.0
  %1748 = vmatpush1.msra.mxu0 0.0
  %1749 = vmatprep.subr.mxu0 0.0
  %1750 = vmatpush1.msra.mxu0 0.0
  %1751 = vmatprep.subr.mxu0 0.0
  %1752 = vmatpush1.msra.mxu0 0.0
  %1753 = vmatprep.subr.mxu0 0.0
  %1754 = vmatpush1.msra.mxu0 0.0
  %1755 = vmatprep.subr.mxu0 0.0
  %1756 = vmatpush1.msra.mxu0 0.0
  %1757 = vmatprep.subr.mxu0 0.0
  %1758 = vmatpush1.msra.mxu0 0.0
  %1759 = vmatprep.subr.mxu0 0.0
  %1760 = vmatpush1.msra.mxu0 0.0
  %1761 = vmatprep.subr.mxu0 0.0
  %1762 = vmatpush1.msra.mxu0 0.0
  %1763 = vmatprep.subr.mxu0 0.0
  %1764 = vmatpush1.msra.mxu0 0.0
  %1765 = vmatprep.subr.mxu0 0.0
  %1766 = vmatpush1.msra.mxu0 0.0
  %1767 = vmatprep.subr.mxu0 0.0
  %1768 = vmatpush1.msra.mxu0 0.0
  %1769 = vmatprep.subr.mxu0 0.0
  %1770 = vmatpush1.msra.mxu0 0.0
  %1771 = vmatprep.mubr.f32.mxu0 0.0
  %1772 = vmatmul.mubr.f32.gmra.mrb[0].mxu0 %v413
  %v1773 = vpop.f32.mrb[0].mxu0
  %v1774 = vadd.f32 0.0, %v1773
  %v1775 = vpop.f32.mrb[0].mxu0
  %v1776 = vadd.f32 0.0, %v1775
  %1777 = vdwg.mxu0
  %v1778 = vadd.f32 %v1705, %v1774
  %v1779 = vadd.f32 %v1706, %v1776
  %v1780 = vxor.u32 %v1778, 2147483648
  %v1781 = vxor.u32 %v1779, 2147483648
  %v1782 = vmul.f32 %v1780, 1.442695
  %v1783 = vpow.pop %v1782
  %v1784 = vmul.f32 %v1781, 1.442695
  %v1785 = vpow.pop %v1784
  %v1786 = vadd.f32 %v1783, 1.0
  %v1787 = vadd.f32 %v1785, 1.0
  %v1788 = vrcp.pop %v1786
  %v1789 = vmul.f32 1.0, %v1788
  %v1790 = vrcp.pop %v1787
  %v1791 = vmul.f32 1.0, %v1790
  %v1792 = vtanh.pop %v1779
  %v1793 = vmul.f32 %v1789, 0.0
  %1795 = vrot.lane.b32.xlu0 %v1792, 64
  %v1796 = vpop.permute.xlu0 %1795
  %v1798 = vmul.f32 %v1789, %v1796
  %1800 = vrot.lane.b32.xlu0 %v1798, 64
  %v1801 = vpop.permute.xlu0 %1800
  %v1803 = vadd.f32 %v1793, %v1801
  %v1804 = vtanh.pop %v1803
  %1806 = vrot.lane.b32.xlu0 %v1804, 64
  %v1807 = vpop.permute.xlu0 %1806
  %v1809 = vmul.f32 %v1791, %v1807
  %1810 = vst.msk [vmem:[#allocation4] sm:$0xff] %vm66, %v1809
  %1811 = vst.msk [vmem:[#allocation4 + $0x38] sm:$0xff] %vm519, %v1809
  %v1812 = vld [vmem:[#allocation2 + $0x10] sm:$0xff]
  %v1813 = vld [vmem:[#allocation2 + $0x18] sm:$0xff]
  %v1814 = vld [vmem:[#allocation3 + $0x60] sm:$0xff]
  %v1815 = vld [vmem:[#allocation3 + $0x68] sm:$0xff]
  %v1816 = vadd.f32 %v1812, %v1814
  %v1817 = vadd.f32 %v1813, %v1815
  %v1819 = vsel %vm411, %v1809, 0
  %1821 = vmatprep.subr.mxu0 %v1686
  %1822 = vmatpush1.msra.mxu0 %v1685
  %1823 = vmatprep.subr.mxu0 %v1688
  %1824 = vmatpush1.msra.mxu0 %v1687
  %1825 = vmatprep.subr.mxu0 %v1690
  %1826 = vmatpush1.msra.mxu0 %v1689
  %1827 = vmatprep.subr.mxu0 %v1692
  %1828 = vmatpush1.msra.mxu0 %v1691
  %1829 = vmatprep.subr.mxu0 %v1694
  %1830 = vmatpush1.msra.mxu0 %v1693
  %1831 = vmatprep.subr.mxu0 %v1696
  %1832 = vmatpush1.msra.mxu0 %v1695
  %1833 = vmatprep.subr.mxu0 %v1698
  %1834 = vmatpush1.msra.mxu0 %v1697
  %1835 = vmatprep.subr.mxu0 %v1700
  %1836 = vmatpush1.msra.mxu0 %v1699
  %1837 = vmatprep.subr.mxu0 0.0
  %1838 = vmatpush1.msra.mxu0 0.0
  %1839 = vmatprep.subr.mxu0 0.0
  %1840 = vmatpush1.msra.mxu0 0.0
  %1841 = vmatprep.subr.mxu0 0.0
  %1842 = vmatpush1.msra.mxu0 0.0
  %1843 = vmatprep.subr.mxu0 0.0
  %1844 = vmatpush1.msra.mxu0 0.0
  %1845 = vmatprep.subr.mxu0 0.0
  %1846 = vmatpush1.msra.mxu0 0.0
  %1847 = vmatprep.subr.mxu0 0.0
  %1848 = vmatpush1.msra.mxu0 0.0
  %1849 = vmatprep.subr.mxu0 0.0
  %1850 = vmatpush1.msra.mxu0 0.0
  %1851 = vmatprep.subr.mxu0 0.0
  %1852 = vmatpush1.msra.mxu0 0.0
  %1853 = vmatprep.subr.mxu0 0.0
  %1854 = vmatpush1.msra.mxu0 0.0
  %1855 = vmatprep.subr.mxu0 0.0
  %1856 = vmatpush1.msra.mxu0 0.0
  %1857 = vmatprep.subr.mxu0 0.0
  %1858 = vmatpush1.msra.mxu0 0.0
  %1859 = vmatprep.subr.mxu0 0.0
  %1860 = vmatpush1.msra.mxu0 0.0
  %1861 = vmatprep.subr.mxu0 0.0
  %1862 = vmatpush1.msra.mxu0 0.0
  %1863 = vmatprep.subr.mxu0 0.0
  %1864 = vmatpush1.msra.mxu0 0.0
  %1865 = vmatprep.subr.mxu0 0.0
  %1866 = vmatpush1.msra.mxu0 0.0
  %1867 = vmatprep.subr.mxu0 0.0
  %1868 = vmatpush1.msra.mxu0 0.0
  %1869 = vmatprep.subr.mxu0 0.0
  %1870 = vmatpush1.msra.mxu0 0.0
  %1871 = vmatprep.subr.mxu0 0.0
  %1872 = vmatpush1.msra.mxu0 0.0
  %1873 = vmatprep.subr.mxu0 0.0
  %1874 = vmatpush1.msra.mxu0 0.0
  %1875 = vmatprep.subr.mxu0 0.0
  %1876 = vmatpush1.msra.mxu0 0.0
  %1877 = vmatprep.subr.mxu0 0.0
  %1878 = vmatpush1.msra.mxu0 0.0
  %1879 = vmatprep.subr.mxu0 0.0
  %1880 = vmatpush1.msra.mxu0 0.0
  %1881 = vmatprep.subr.mxu0 0.0
  %1882 = vmatpush1.msra.mxu0 0.0
  %1883 = vmatprep.subr.mxu0 0.0
  %1884 = vmatpush1.msra.mxu0 0.0
  %1885 = vmatprep.mubr.f32.mxu0 0.0
  %1886 = vmatmul.mubr.f32.gmra.mrb[0].mxu0 %v1819
  %v1887 = vpop.f32.mrb[0].mxu0
  %v1888 = vadd.f32 0.0, %v1887
  %v1889 = vpop.f32.mrb[0].mxu0
  %v1890 = vadd.f32 0.0, %v1889
  %1891 = vdwg.mxu0
  %v1892 = vadd.f32 %v1816, %v1888
  %v1893 = vadd.f32 %v1817, %v1890
  %v1894 = vxor.u32 %v1892, 2147483648
  %v1895 = vxor.u32 %v1893, 2147483648
  %v1896 = vmul.f32 %v1894, 1.442695
  %v1897 = vpow.pop %v1896
  %v1898 = vmul.f32 %v1895, 1.442695
  %v1899 = vpow.pop %v1898
  %v1900 = vadd.f32 %v1897, 1.0
  %v1901 = vadd.f32 %v1899, 1.0
  %v1902 = vrcp.pop %v1900
  %v1903 = vmul.f32 1.0, %v1902
  %v1904 = vrcp.pop %v1901
  %v1905 = vmul.f32 1.0, %v1904
  %v1906 = vtanh.pop %v1893
  %v1907 = vmul.f32 %v1903, %v1803
  %1909 = vrot.lane.b32.xlu0 %v1906, 64
  %v1910 = vpop.permute.xlu0 %1909
  %v1912 = vmul.f32 %v1903, %v1910
  %1914 = vrot.lane.b32.xlu0 %v1912, 64
  %v1915 = vpop.permute.xlu0 %1914
  %v1917 = vadd.f32 %v1907, %v1915
  %v1918 = vtanh.pop %v1917
  %1920 = vrot.lane.b32.xlu0 %v1918, 64
  %v1921 = vpop.permute.xlu0 %1920
  %v1923 = vmul.f32 %v1905, %v1921
  %1924 = vst.msk [vmem:[#allocation4 + $0x8] sm:$0xff] %vm66, %v1923
  %1925 = vst.msk [vmem:[#allocation4 + $0x30] sm:$0xff] %vm519, %v1923
  %v1926 = vld [vmem:[#allocation2 + $0x20] sm:$0xff]
  %v1927 = vld [vmem:[#allocation2 + $0x28] sm:$0xff]
  %v1928 = vld [vmem:[#allocation3 + $0x50] sm:$0xff]
  %v1929 = vld [vmem:[#allocation3 + $0x58] sm:$0xff]
  %v1930 = vadd.f32 %v1926, %v1928
  %v1931 = vadd.f32 %v1927, %v1929
  %v1933 = vsel %vm411, %v1923, 0
  %1935 = vmatprep.subr.mxu0 %v1686
  %1936 = vmatpush1.msra.mxu0 %v1685
  %1937 = vmatprep.subr.mxu0 %v1688
  %1938 = vmatpush1.msra.mxu0 %v1687
  %1939 = vmatprep.subr.mxu0 %v1690
  %1940 = vmatpush1.msra.mxu0 %v1689
  %1941 = vmatprep.subr.mxu0 %v1692
  %1942 = vmatpush1.msra.mxu0 %v1691
  %1943 = vmatprep.subr.mxu0 %v1694
  %1944 = vmatpush1.msra.mxu0 %v1693
  %1945 = vmatprep.subr.mxu0 %v1696
  %1946 = vmatpush1.msra.mxu0 %v1695
  %1947 = vmatprep.subr.mxu0 %v1698
  %1948 = vmatpush1.msra.mxu0 %v1697
  %1949 = vmatprep.subr.mxu0 %v1700
  %1950 = vmatpush1.msra.mxu0 %v1699
  %1951 = vmatprep.subr.mxu0 0.0
  %1952 = vmatpush1.msra.mxu0 0.0
  %1953 = vmatprep.subr.mxu0 0.0
  %1954 = vmatpush1.msra.mxu0 0.0
  %1955 = vmatprep.subr.mxu0 0.0
  %1956 = vmatpush1.msra.mxu0 0.0
  %1957 = vmatprep.subr.mxu0 0.0
  %1958 = vmatpush1.msra.mxu0 0.0
  %1959 = vmatprep.subr.mxu0 0.0
  %1960 = vmatpush1.msra.mxu0 0.0
  %1961 = vmatprep.subr.mxu0 0.0
  %1962 = vmatpush1.msra.mxu0 0.0
  %1963 = vmatprep.subr.mxu0 0.0
  %1964 = vmatpush1.msra.mxu0 0.0
  %1965 = vmatprep.subr.mxu0 0.0
  %1966 = vmatpush1.msra.mxu0 0.0
  %1967 = vmatprep.subr.mxu0 0.0
  %1968 = vmatpush1.msra.mxu0 0.0
  %1969 = vmatprep.subr.mxu0 0.0
  %1970 = vmatpush1.msra.mxu0 0.0
  %1971 = vmatprep.subr.mxu0 0.0
  %1972 = vmatpush1.msra.mxu0 0.0
  %1973 = vmatprep.subr.mxu0 0.0
  %1974 = vmatpush1.msra.mxu0 0.0
  %1975 = vmatprep.subr.mxu0 0.0
  %1976 = vmatpush1.msra.mxu0 0.0
  %1977 = vmatprep.subr.mxu0 0.0
  %1978 = vmatpush1.msra.mxu0 0.0
  %1979 = vmatprep.subr.mxu0 0.0
  %1980 = vmatpush1.msra.mxu0 0.0
  %1981 = vmatprep.subr.mxu0 0.0
  %1982 = vmatpush1.msra.mxu0 0.0
  %1983 = vmatprep.subr.mxu0 0.0
  %1984 = vmatpush1.msra.mxu0 0.0
  %1985 = vmatprep.subr.mxu0 0.0
  %1986 = vmatpush1.msra.mxu0 0.0
  %1987 = vmatprep.subr.mxu0 0.0
  %1988 = vmatpush1.msra.mxu0 0.0
  %1989 = vmatprep.subr.mxu0 0.0
  %1990 = vmatpush1.msra.mxu0 0.0
  %1991 = vmatprep.subr.mxu0 0.0
  %1992 = vmatpush1.msra.mxu0 0.0
  %1993 = vmatprep.subr.mxu0 0.0
  %1994 = vmatpush1.msra.mxu0 0.0
  %1995 = vmatprep.subr.mxu0 0.0
  %1996 = vmatpush1.msra.mxu0 0.0
  %1997 = vmatprep.subr.mxu0 0.0
  %1998 = vmatpush1.msra.mxu0 0.0
  %1999 = vmatprep.mubr.f32.mxu0 0.0
  %2000 = vmatmul.mubr.f32.gmra.mrb[0].mxu0 %v1933
  %v2001 = vpop.f32.mrb[0].mxu0
  %v2002 = vadd.f32 0.0, %v2001
  %v2003 = vpop.f32.mrb[0].mxu0
  %v2004 = vadd.f32 0.0, %v2003
  %2005 = vdwg.mxu0
  %v2006 = vadd.f32 %v1930, %v2002
  %v2007 = vadd.f32 %v1931, %v2004
  %v2008 = vxor.u32 %v2006, 2147483648
  %v2009 = vxor.u32 %v2007, 2147483648
  %v2010 = vmul.f32 %v2008, 1.442695
  %v2011 = vpow.pop %v2010
  %v2012 = vmul.f32 %v2009, 1.442695
  %v2013 = vpow.pop %v2012
  %v2014 = vadd.f32 %v2011, 1.0
  %v2015 = vadd.f32 %v2013, 1.0
  %v2016 = vrcp.pop %v2014
  %v2017 = vmul.f32 1.0, %v2016
  %v2018 = vrcp.pop %v2015
  %v2019 = vmul.f32 1.0, %v2018
  %v2020 = vtanh.pop %v2007
  %v2021 = vmul.f32 %v2017, %v1917
  %2023 = vrot.lane.b32.xlu0 %v2020, 64
  %v2024 = vpop.permute.xlu0 %2023
  %v2026 = vmul.f32 %v2017, %v2024
  %2028 = vrot.lane.b32.xlu0 %v2026, 64
  %v2029 = vpop.permute.xlu0 %2028
  %v2031 = vadd.f32 %v2021, %v2029
  %v2032 = vtanh.pop %v2031
  %2034 = vrot.lane.b32.xlu0 %v2032, 64
  %v2035 = vpop.permute.xlu0 %2034
  %v2037 = vmul.f32 %v2019, %v2035
  %2038 = vst.msk [vmem:[#allocation4 + $0x10] sm:$0xff] %vm66, %v2037
  %2039 = vst.msk [vmem:[#allocation4 + $0x28] sm:$0xff] %vm519, %v2037
  %v2040 = vld [vmem:[#allocation2 + $0x30] sm:$0xff]
  %v2041 = vld [vmem:[#allocation2 + $0x38] sm:$0xff]
  %v2042 = vld [vmem:[#allocation3 + $0x40] sm:$0xff]
  %v2043 = vld [vmem:[#allocation3 + $0x48] sm:$0xff]
  %v2044 = vadd.f32 %v2040, %v2042
  %v2045 = vadd.f32 %v2041, %v2043
  %v2047 = vsel %vm411, %v2037, 0
  %2049 = vmatprep.subr.mxu0 %v1686
  %2050 = vmatpush1.msra.mxu0 %v1685
  %2051 = vmatprep.subr.mxu0 %v1688
  %2052 = vmatpush1.msra.mxu0 %v1687
  %2053 = vmatprep.subr.mxu0 %v1690
  %2054 = vmatpush1.msra.mxu0 %v1689
  %2055 = vmatprep.subr.mxu0 %v1692
  %2056 = vmatpush1.msra.mxu0 %v1691
  %2057 = vmatprep.subr.mxu0 %v1694
  %2058 = vmatpush1.msra.mxu0 %v1693
  %2059 = vmatprep.subr.mxu0 %v1696
  %2060 = vmatpush1.msra.mxu0 %v1695
  %2061 = vmatprep.subr.mxu0 %v1698
  %2062 = vmatpush1.msra.mxu0 %v1697
  %2063 = vmatprep.subr.mxu0 %v1700
  %2064 = vmatpush1.msra.mxu0 %v1699
  %2065 = vmatprep.subr.mxu0 0.0
  %2066 = vmatpush1.msra.mxu0 0.0
  %2067 = vmatprep.subr.mxu0 0.0
  %2068 = vmatpush1.msra.mxu0 0.0
  %2069 = vmatprep.subr.mxu0 0.0
  %2070 = vmatpush1.msra.mxu0 0.0
  %2071 = vmatprep.subr.mxu0 0.0
  %2072 = vmatpush1.msra.mxu0 0.0
  %2073 = vmatprep.subr.mxu0 0.0
  %2074 = vmatpush1.msra.mxu0 0.0
  %2075 = vmatprep.subr.mxu0 0.0
  %2076 = vmatpush1.msra.mxu0 0.0
  %2077 = vmatprep.subr.mxu0 0.0
  %2078 = vmatpush1.msra.mxu0 0.0
  %2079 = vmatprep.subr.mxu0 0.0
  %2080 = vmatpush1.msra.mxu0 0.0
  %2081 = vmatprep.subr.mxu0 0.0
  %2082 = vmatpush1.msra.mxu0 0.0
  %2083 = vmatprep.subr.mxu0 0.0
  %2084 = vmatpush1.msra.mxu0 0.0
  %2085 = vmatprep.subr.mxu0 0.0
  %2086 = vmatpush1.msra.mxu0 0.0
  %2087 = vmatprep.subr.mxu0 0.0
  %2088 = vmatpush1.msra.mxu0 0.0
  %2089 = vmatprep.subr.mxu0 0.0
  %2090 = vmatpush1.msra.mxu0 0.0
  %2091 = vmatprep.subr.mxu0 0.0
  %2092 = vmatpush1.msra.mxu0 0.0
  %2093 = vmatprep.subr.mxu0 0.0
  %2094 = vmatpush1.msra.mxu0 0.0
  %2095 = vmatprep.subr.mxu0 0.0
  %2096 = vmatpush1.msra.mxu0 0.0
  %2097 = vmatprep.subr.mxu0 0.0
  %2098 = vmatpush1.msra.mxu0 0.0
  %2099 = vmatprep.subr.mxu0 0.0
  %2100 = vmatpush1.msra.mxu0 0.0
  %2101 = vmatprep.subr.mxu0 0.0
  %2102 = vmatpush1.msra.mxu0 0.0
  %2103 = vmatprep.subr.mxu0 0.0
  %2104 = vmatpush1.msra.mxu0 0.0
  %2105 = vmatprep.subr.mxu0 0.0
  %2106 = vmatpush1.msra.mxu0 0.0
  %2107 = vmatprep.subr.mxu0 0.0
  %2108 = vmatpush1.msra.mxu0 0.0
  %2109 = vmatprep.subr.mxu0 0.0
  %2110 = vmatpush1.msra.mxu0 0.0
  %2111 = vmatprep.subr.mxu0 0.0
  %2112 = vmatpush1.msra.mxu0 0.0
  %2113 = vmatprep.mubr.f32.mxu0 0.0
  %2114 = vmatmul.mubr.f32.gmra.mrb[0].mxu0 %v2047
  %v2115 = vpop.f32.mrb[0].mxu0
  %v2116 = vadd.f32 0.0, %v2115
  %v2117 = vpop.f32.mrb[0].mxu0
  %v2118 = vadd.f32 0.0, %v2117
  %2119 = vdwg.mxu0
  %v2120 = vadd.f32 %v2044, %v2116
  %v2121 = vadd.f32 %v2045, %v2118
  %v2122 = vxor.u32 %v2120, 2147483648
  %v2123 = vxor.u32 %v2121, 2147483648
  %v2124 = vmul.f32 %v2122, 1.442695
  %v2125 = vpow.pop %v2124
  %v2126 = vmul.f32 %v2123, 1.442695
  %v2127 = vpow.pop %v2126
  %v2128 = vadd.f32 %v2125, 1.0
  %v2129 = vadd.f32 %v2127, 1.0
  %v2130 = vrcp.pop %v2128
  %v2131 = vmul.f32 1.0, %v2130
  %v2132 = vrcp.pop %v2129
  %v2133 = vmul.f32 1.0, %v2132
  %v2134 = vtanh.pop %v2121
  %v2135 = vmul.f32 %v2131, %v2031
  %2137 = vrot.lane.b32.xlu0 %v2134, 64
  %v2138 = vpop.permute.xlu0 %2137
  %v2140 = vmul.f32 %v2131, %v2138
  %2142 = vrot.lane.b32.xlu0 %v2140, 64
  %v2143 = vpop.permute.xlu0 %2142
  %v2145 = vadd.f32 %v2135, %v2143
  %v2146 = vtanh.pop %v2145
  %2148 = vrot.lane.b32.xlu0 %v2146, 64
  %v2149 = vpop.permute.xlu0 %2148
  %v2151 = vmul.f32 %v2133, %v2149
  %2152 = vst.msk [vmem:[#allocation4 + $0x18] sm:$0xff] %vm66, %v2151
  %2153 = vst.msk [vmem:[#allocation4 + $0x20] sm:$0xff] %vm519, %v2151
  %v2154 = vld [vmem:[#allocation2 + $0x40] sm:$0xff]
  %v2155 = vld [vmem:[#allocation2 + $0x48] sm:$0xff]
  %v2156 = vld [vmem:[#allocation3 + $0x30] sm:$0xff]
  %v2157 = vld [vmem:[#allocation3 + $0x38] sm:$0xff]
  %v2158 = vadd.f32 %v2154, %v2156
  %v2159 = vadd.f32 %v2155, %v2157
  %v2161 = vsel %vm411, %v2151, 0
  %2163 = vmatprep.subr.mxu0 %v1686
  %2164 = vmatpush1.msra.mxu0 %v1685
  %2165 = vmatprep.subr.mxu0 %v1688
  %2166 = vmatpush1.msra.mxu0 %v1687
  %2167 = vmatprep.subr.mxu0 %v1690
  %2168 = vmatpush1.msra.mxu0 %v1689
  %2169 = vmatprep.subr.mxu0 %v1692
  %2170 = vmatpush1.msra.mxu0 %v1691
  %2171 = vmatprep.subr.mxu0 %v1694
  %2172 = vmatpush1.msra.mxu0 %v1693
  %2173 = vmatprep.subr.mxu0 %v1696
  %2174 = vmatpush1.msra.mxu0 %v1695
  %2175 = vmatprep.subr.mxu0 %v1698
  %2176 = vmatpush1.msra.mxu0 %v1697
  %2177 = vmatprep.subr.mxu0 %v1700
  %2178 = vmatpush1.msra.mxu0 %v1699
  %2179 = vmatprep.subr.mxu0 0.0
  %2180 = vmatpush1.msra.mxu0 0.0
  %2181 = vmatprep.subr.mxu0 0.0
  %2182 = vmatpush1.msra.mxu0 0.0
  %2183 = vmatprep.subr.mxu0 0.0
  %2184 = vmatpush1.msra.mxu0 0.0
  %2185 = vmatprep.subr.mxu0 0.0
  %2186 = vmatpush1.msra.mxu0 0.0
  %2187 = vmatprep.subr.mxu0 0.0
  %2188 = vmatpush1.msra.mxu0 0.0
  %2189 = vmatprep.subr.mxu0 0.0
  %2190 = vmatpush1.msra.mxu0 0.0
  %2191 = vmatprep.subr.mxu0 0.0
  %2192 = vmatpush1.msra.mxu0 0.0
  %2193 = vmatprep.subr.mxu0 0.0
  %2194 = vmatpush1.msra.mxu0 0.0
  %2195 = vmatprep.subr.mxu0 0.0
  %2196 = vmatpush1.msra.mxu0 0.0
  %2197 = vmatprep.subr.mxu0 0.0
  %2198 = vmatpush1.msra.mxu0 0.0
  %2199 = vmatprep.subr.mxu0 0.0
  %2200 = vmatpush1.msra.mxu0 0.0
  %2201 = vmatprep.subr.mxu0 0.0
  %2202 = vmatpush1.msra.mxu0 0.0
  %2203 = vmatprep.subr.mxu0 0.0
  %2204 = vmatpush1.msra.mxu0 0.0
  %2205 = vmatprep.subr.mxu0 0.0
  %2206 = vmatpush1.msra.mxu0 0.0
  %2207 = vmatprep.subr.mxu0 0.0
  %2208 = vmatpush1.msra.mxu0 0.0
  %2209 = vmatprep.subr.mxu0 0.0
  %2210 = vmatpush1.msra.mxu0 0.0
  %2211 = vmatprep.subr.mxu0 0.0
  %2212 = vmatpush1.msra.mxu0 0.0
  %2213 = vmatprep.subr.mxu0 0.0
  %2214 = vmatpush1.msra.mxu0 0.0
  %2215 = vmatprep.subr.mxu0 0.0
  %2216 = vmatpush1.msra.mxu0 0.0
  %2217 = vmatprep.subr.mxu0 0.0
  %2218 = vmatpush1.msra.mxu0 0.0
  %2219 = vmatprep.subr.mxu0 0.0
  %2220 = vmatpush1.msra.mxu0 0.0
  %2221 = vmatprep.subr.mxu0 0.0
  %2222 = vmatpush1.msra.mxu0 0.0
  %2223 = vmatprep.subr.mxu0 0.0
  %2224 = vmatpush1.msra.mxu0 0.0
  %2225 = vmatprep.subr.mxu0 0.0
  %2226 = vmatpush1.msra.mxu0 0.0
  %2227 = vmatprep.mubr.f32.mxu0 0.0
  %2228 = vmatmul.mubr.f32.gmra.mrb[0].mxu0 %v2161
  %v2229 = vpop.f32.mrb[0].mxu0
  %v2230 = vadd.f32 0.0, %v2229
  %v2231 = vpop.f32.mrb[0].mxu0
  %v2232 = vadd.f32 0.0, %v2231
  %2233 = vdwg.mxu0
  %v2234 = vadd.f32 %v2158, %v2230
  %v2235 = vadd.f32 %v2159, %v2232
  %v2236 = vxor.u32 %v2234, 2147483648
  %v2237 = vxor.u32 %v2235, 2147483648
  %v2238 = vmul.f32 %v2236, 1.442695
  %v2239 = vpow.pop %v2238
  %v2240 = vmul.f32 %v2237, 1.442695
  %v2241 = vpow.pop %v2240
  %v2242 = vadd.f32 %v2239, 1.0
  %v2243 = vadd.f32 %v2241, 1.0
  %v2244 = vrcp.pop %v2242
  %v2245 = vmul.f32 1.0, %v2244
  %v2246 = vrcp.pop %v2243
  %v2247 = vmul.f32 1.0, %v2246
  %v2248 = vtanh.pop %v2235
  %v2249 = vmul.f32 %v2245, %v2145
  %2251 = vrot.lane.b32.xlu0 %v2248, 64
  %v2252 = vpop.permute.xlu0 %2251
  %v2254 = vmul.f32 %v2245, %v2252
  %2256 = vrot.lane.b32.xlu0 %v2254, 64
  %v2257 = vpop.permute.xlu0 %2256
  %v2259 = vadd.f32 %v2249, %v2257
  %v2260 = vtanh.pop %v2259
  %2262 = vrot.lane.b32.xlu0 %v2260, 64
  %v2263 = vpop.permute.xlu0 %2262
  %v2265 = vmul.f32 %v2247, %v2263
  %2266 = vst.msk [vmem:[#allocation4 + $0x20] sm:$0xff] %vm66, %v2265
  %2267 = vst.msk [vmem:[#allocation4 + $0x18] sm:$0xff] %vm519, %v2265
  %v2268 = vld [vmem:[#allocation2 + $0x50] sm:$0xff]
  %v2269 = vld [vmem:[#allocation2 + $0x58] sm:$0xff]
  %v2270 = vld [vmem:[#allocation3 + $0x20] sm:$0xff]
  %v2271 = vld [vmem:[#allocation3 + $0x28] sm:$0xff]
  %v2272 = vadd.f32 %v2268, %v2270
  %v2273 = vadd.f32 %v2269, %v2271
  %v2275 = vsel %vm411, %v2265, 0
  %2277 = vmatprep.subr.mxu0 %v1686
  %2278 = vmatpush1.msra.mxu0 %v1685
  %2279 = vmatprep.subr.mxu0 %v1688
  %2280 = vmatpush1.msra.mxu0 %v1687
  %2281 = vmatprep.subr.mxu0 %v1690
  %2282 = vmatpush1.msra.mxu0 %v1689
  %2283 = vmatprep.subr.mxu0 %v1692
  %2284 = vmatpush1.msra.mxu0 %v1691
  %2285 = vmatprep.subr.mxu0 %v1694
  %2286 = vmatpush1.msra.mxu0 %v1693
  %2287 = vmatprep.subr.mxu0 %v1696
  %2288 = vmatpush1.msra.mxu0 %v1695
  %2289 = vmatprep.subr.mxu0 %v1698
  %2290 = vmatpush1.msra.mxu0 %v1697
  %2291 = vmatprep.subr.mxu0 %v1700
  %2292 = vmatpush1.msra.mxu0 %v1699
  %2293 = vmatprep.subr.mxu0 0.0
  %2294 = vmatpush1.msra.mxu0 0.0
  %2295 = vmatprep.subr.mxu0 0.0
  %2296 = vmatpush1.msra.mxu0 0.0
  %2297 = vmatprep.subr.mxu0 0.0
  %2298 = vmatpush1.msra.mxu0 0.0
  %2299 = vmatprep.subr.mxu0 0.0
  %2300 = vmatpush1.msra.mxu0 0.0
  %2301 = vmatprep.subr.mxu0 0.0
  %2302 = vmatpush1.msra.mxu0 0.0
  %2303 = vmatprep.subr.mxu0 0.0
  %2304 = vmatpush1.msra.mxu0 0.0
  %2305 = vmatprep.subr.mxu0 0.0
  %2306 = vmatpush1.msra.mxu0 0.0
  %2307 = vmatprep.subr.mxu0 0.0
  %2308 = vmatpush1.msra.mxu0 0.0
  %2309 = vmatprep.subr.mxu0 0.0
  %2310 = vmatpush1.msra.mxu0 0.0
  %2311 = vmatprep.subr.mxu0 0.0
  %2312 = vmatpush1.msra.mxu0 0.0
  %2313 = vmatprep.subr.mxu0 0.0
  %2314 = vmatpush1.msra.mxu0 0.0
  %2315 = vmatprep.subr.mxu0 0.0
  %2316 = vmatpush1.msra.mxu0 0.0
  %2317 = vmatprep.subr.mxu0 0.0
  %2318 = vmatpush1.msra.mxu0 0.0
  %2319 = vmatprep.subr.mxu0 0.0
  %2320 = vmatpush1.msra.mxu0 0.0
  %2321 = vmatprep.subr.mxu0 0.0
  %2322 = vmatpush1.msra.mxu0 0.0
  %2323 = vmatprep.subr.mxu0 0.0
  %2324 = vmatpush1.msra.mxu0 0.0
  %2325 = vmatprep.subr.mxu0 0.0
  %2326 = vmatpush1.msra.mxu0 0.0
  %2327 = vmatprep.subr.mxu0 0.0
  %2328 = vmatpush1.msra.mxu0 0.0
  %2329 = vmatprep.subr.mxu0 0.0
  %2330 = vmatpush1.msra.mxu0 0.0
  %2331 = vmatprep.subr.mxu0 0.0
  %2332 = vmatpush1.msra.mxu0 0.0
  %2333 = vmatprep.subr.mxu0 0.0
  %2334 = vmatpush1.msra.mxu0 0.0
  %2335 = vmatprep.subr.mxu0 0.0
  %2336 = vmatpush1.msra.mxu0 0.0
  %2337 = vmatprep.subr.mxu0 0.0
  %2338 = vmatpush1.msra.mxu0 0.0
  %2339 = vmatprep.subr.mxu0 0.0
  %2340 = vmatpush1.msra.mxu0 0.0
  %2341 = vmatprep.mubr.f32.mxu0 0.0
  %2342 = vmatmul.mubr.f32.gmra.mrb[0].mxu0 %v2275
  %v2343 = vpop.f32.mrb[0].mxu0
  %v2344 = vadd.f32 0.0, %v2343
  %v2345 = vpop.f32.mrb[0].mxu0
  %v2346 = vadd.f32 0.0, %v2345
  %2347 = vdwg.mxu0
  %v2348 = vadd.f32 %v2272, %v2344
  %v2349 = vadd.f32 %v2273, %v2346
  %v2350 = vxor.u32 %v2348, 2147483648
  %v2351 = vxor.u32 %v2349, 2147483648
  %v2352 = vmul.f32 %v2350, 1.442695
  %v2353 = vpow.pop %v2352
  %v2354 = vmul.f32 %v2351, 1.442695
  %v2355 = vpow.pop %v2354
  %v2356 = vadd.f32 %v2353, 1.0
  %v2357 = vadd.f32 %v2355, 1.0
  %v2358 = vrcp.pop %v2356
  %v2359 = vmul.f32 1.0, %v2358
  %v2360 = vrcp.pop %v2357
  %v2361 = vmul.f32 1.0, %v2360
  %v2362 = vtanh.pop %v2349
  %v2363 = vmul.f32 %v2359, %v2259
  %2365 = vrot.lane.b32.xlu0 %v2362, 64
  %v2366 = vpop.permute.xlu0 %2365
  %v2368 = vmul.f32 %v2359, %v2366
  %2370 = vrot.lane.b32.xlu0 %v2368, 64
  %v2371 = vpop.permute.xlu0 %2370
  %v2373 = vadd.f32 %v2363, %v2371
  %v2374 = vtanh.pop %v2373
  %2376 = vrot.lane.b32.xlu0 %v2374, 64
  %v2377 = vpop.permute.xlu0 %2376
  %v2379 = vmul.f32 %v2361, %v2377
  %2380 = vst.msk [vmem:[#allocation4 + $0x28] sm:$0xff] %vm66, %v2379
  %2381 = vst.msk [vmem:[#allocation4 + $0x10] sm:$0xff] %vm519, %v2379
  %v2382 = vld [vmem:[#allocation2 + $0x60] sm:$0xff]
  %v2383 = vld [vmem:[#allocation2 + $0x68] sm:$0xff]
  %v2384 = vld [vmem:[#allocation3 + $0x10] sm:$0xff]
  %v2385 = vld [vmem:[#allocation3 + $0x18] sm:$0xff]
  %v2386 = vadd.f32 %v2382, %v2384
  %v2387 = vadd.f32 %v2383, %v2385
  %v2389 = vsel %vm411, %v2379, 0
  %2391 = vmatprep.subr.mxu0 %v1686
  %2392 = vmatpush1.msra.mxu0 %v1685
  %2393 = vmatprep.subr.mxu0 %v1688
  %2394 = vmatpush1.msra.mxu0 %v1687
  %2395 = vmatprep.subr.mxu0 %v1690
  %2396 = vmatpush1.msra.mxu0 %v1689
  %2397 = vmatprep.subr.mxu0 %v1692
  %2398 = vmatpush1.msra.mxu0 %v1691
  %2399 = vmatprep.subr.mxu0 %v1694
  %2400 = vmatpush1.msra.mxu0 %v1693
  %2401 = vmatprep.subr.mxu0 %v1696
  %2402 = vmatpush1.msra.mxu0 %v1695
  %2403 = vmatprep.subr.mxu0 %v1698
  %2404 = vmatpush1.msra.mxu0 %v1697
  %2405 = vmatprep.subr.mxu0 %v1700
  %2406 = vmatpush1.msra.mxu0 %v1699
  %2407 = vmatprep.subr.mxu0 0.0
  %2408 = vmatpush1.msra.mxu0 0.0
  %2409 = vmatprep.subr.mxu0 0.0
  %2410 = vmatpush1.msra.mxu0 0.0
  %2411 = vmatprep.subr.mxu0 0.0
  %2412 = vmatpush1.msra.mxu0 0.0
  %2413 = vmatprep.subr.mxu0 0.0
  %2414 = vmatpush1.msra.mxu0 0.0
  %2415 = vmatprep.subr.mxu0 0.0
  %2416 = vmatpush1.msra.mxu0 0.0
  %2417 = vmatprep.subr.mxu0 0.0
  %2418 = vmatpush1.msra.mxu0 0.0
  %2419 = vmatprep.subr.mxu0 0.0
  %2420 = vmatpush1.msra.mxu0 0.0
  %2421 = vmatprep.subr.mxu0 0.0
  %2422 = vmatpush1.msra.mxu0 0.0
  %2423 = vmatprep.subr.mxu0 0.0
  %2424 = vmatpush1.msra.mxu0 0.0
  %2425 = vmatprep.subr.mxu0 0.0
  %2426 = vmatpush1.msra.mxu0 0.0
  %2427 = vmatprep.subr.mxu0 0.0
  %2428 = vmatpush1.msra.mxu0 0.0
  %2429 = vmatprep.subr.mxu0 0.0
  %2430 = vmatpush1.msra.mxu0 0.0
  %2431 = vmatprep.subr.mxu0 0.0
  %2432 = vmatpush1.msra.mxu0 0.0
  %2433 = vmatprep.subr.mxu0 0.0
  %2434 = vmatpush1.msra.mxu0 0.0
  %2435 = vmatprep.subr.mxu0 0.0
  %2436 = vmatpush1.msra.mxu0 0.0
  %2437 = vmatprep.subr.mxu0 0.0
  %2438 = vmatpush1.msra.mxu0 0.0
  %2439 = vmatprep.subr.mxu0 0.0
  %2440 = vmatpush1.msra.mxu0 0.0
  %2441 = vmatprep.subr.mxu0 0.0
  %2442 = vmatpush1.msra.mxu0 0.0
  %2443 = vmatprep.subr.mxu0 0.0
  %2444 = vmatpush1.msra.mxu0 0.0
  %2445 = vmatprep.subr.mxu0 0.0
  %2446 = vmatpush1.msra.mxu0 0.0
  %2447 = vmatprep.subr.mxu0 0.0
  %2448 = vmatpush1.msra.mxu0 0.0
  %2449 = vmatprep.subr.mxu0 0.0
  %2450 = vmatpush1.msra.mxu0 0.0
  %2451 = vmatprep.subr.mxu0 0.0
  %2452 = vmatpush1.msra.mxu0 0.0
  %2453 = vmatprep.subr.mxu0 0.0
  %2454 = vmatpush1.msra.mxu0 0.0
  %2455 = vmatprep.mubr.f32.mxu0 0.0
  %2456 = vmatmul.mubr.f32.gmra.mrb[0].mxu0 %v2389
  %v2457 = vpop.f32.mrb[0].mxu0
  %v2458 = vadd.f32 0.0, %v2457
  %v2459 = vpop.f32.mrb[0].mxu0
  %v2460 = vadd.f32 0.0, %v2459
  %2461 = vdwg.mxu0
  %v2462 = vadd.f32 %v2386, %v2458
  %v2463 = vadd.f32 %v2387, %v2460
  %v2464 = vxor.u32 %v2462, 2147483648
  %v2465 = vxor.u32 %v2463, 2147483648
  %v2466 = vmul.f32 %v2464, 1.442695
  %v2467 = vpow.pop %v2466
  %v2468 = vmul.f32 %v2465, 1.442695
  %v2469 = vpow.pop %v2468
  %v2470 = vadd.f32 %v2467, 1.0
  %v2471 = vadd.f32 %v2469, 1.0
  %v2472 = vrcp.pop %v2470
  %v2473 = vmul.f32 1.0, %v2472
  %v2474 = vrcp.pop %v2471
  %v2475 = vmul.f32 1.0, %v2474
  %v2476 = vtanh.pop %v2463
  %v2477 = vmul.f32 %v2473, %v2373
  %2479 = vrot.lane.b32.xlu0 %v2476, 64
  %v2480 = vpop.permute.xlu0 %2479
  %v2482 = vmul.f32 %v2473, %v2480
  %2484 = vrot.lane.b32.xlu0 %v2482, 64
  %v2485 = vpop.permute.xlu0 %2484
  %v2487 = vadd.f32 %v2477, %v2485
  %v2488 = vtanh.pop %v2487
  %2490 = vrot.lane.b32.xlu0 %v2488, 64
  %v2491 = vpop.permute.xlu0 %2490
  %v2493 = vmul.f32 %v2475, %v2491
  %2494 = vst.msk [vmem:[#allocation4 + $0x30] sm:$0xff] %vm66, %v2493
  %2495 = vst.msk [vmem:[#allocation4 + $0x8] sm:$0xff] %vm519, %v2493
  %v2496 = vld [vmem:[#allocation2 + $0x70] sm:$0xff]
  %v2497 = vld [vmem:[#allocation2 + $0x78] sm:$0xff]
  %v2498 = vld [vmem:[#allocation3] sm:$0xff]
  %v2499 = vld [vmem:[#allocation3 + $0x8] sm:$0xff]
  %v2500 = vadd.f32 %v2496, %v2498
  %v2501 = vadd.f32 %v2497, %v2499
  %v2503 = vsel %vm411, %v2493, 0
  %2505 = vmatprep.subr.mxu0 %v1686
  %2506 = vmatpush1.msra.mxu0 %v1685
  %2507 = vmatprep.subr.mxu0 %v1688
  %2508 = vmatpush1.msra.mxu0 %v1687
  %2509 = vmatprep.subr.mxu0 %v1690
  %2510 = vmatpush1.msra.mxu0 %v1689
  %2511 = vmatprep.subr.mxu0 %v1692
  %2512 = vmatpush1.msra.mxu0 %v1691
  %2513 = vmatprep.subr.mxu0 %v1694
  %2514 = vmatpush1.msra.mxu0 %v1693
  %2515 = vmatprep.subr.mxu0 %v1696
  %2516 = vmatpush1.msra.mxu0 %v1695
  %2517 = vmatprep.subr.mxu0 %v1698
  %2518 = vmatpush1.msra.mxu0 %v1697
  %2519 = vmatprep.subr.mxu0 %v1700
  %2520 = vmatpush1.msra.mxu0 %v1699
  %2521 = vmatprep.subr.mxu0 0.0
  %2522 = vmatpush1.msra.mxu0 0.0
  %2523 = vmatprep.subr.mxu0 0.0
  %2524 = vmatpush1.msra.mxu0 0.0
  %2525 = vmatprep.subr.mxu0 0.0
  %2526 = vmatpush1.msra.mxu0 0.0
  %2527 = vmatprep.subr.mxu0 0.0
  %2528 = vmatpush1.msra.mxu0 0.0
  %2529 = vmatprep.subr.mxu0 0.0
  %2530 = vmatpush1.msra.mxu0 0.0
  %2531 = vmatprep.subr.mxu0 0.0
  %2532 = vmatpush1.msra.mxu0 0.0
  %2533 = vmatprep.subr.mxu0 0.0
  %2534 = vmatpush1.msra.mxu0 0.0
  %2535 = vmatprep.subr.mxu0 0.0
  %2536 = vmatpush1.msra.mxu0 0.0
  %2537 = vmatprep.subr.mxu0 0.0
  %2538 = vmatpush1.msra.mxu0 0.0
  %2539 = vmatprep.subr.mxu0 0.0
  %2540 = vmatpush1.msra.mxu0 0.0
  %2541 = vmatprep.subr.mxu0 0.0
  %2542 = vmatpush1.msra.mxu0 0.0
  %2543 = vmatprep.subr.mxu0 0.0
  %2544 = vmatpush1.msra.mxu0 0.0
  %2545 = vmatprep.subr.mxu0 0.0
  %2546 = vmatpush1.msra.mxu0 0.0
  %2547 = vmatprep.subr.mxu0 0.0
  %2548 = vmatpush1.msra.mxu0 0.0
  %2549 = vmatprep.subr.mxu0 0.0
  %2550 = vmatpush1.msra.mxu0 0.0
  %2551 = vmatprep.subr.mxu0 0.0
  %2552 = vmatpush1.msra.mxu0 0.0
  %2553 = vmatprep.subr.mxu0 0.0
  %2554 = vmatpush1.msra.mxu0 0.0
  %2555 = vmatprep.subr.mxu0 0.0
  %2556 = vmatpush1.msra.mxu0 0.0
  %2557 = vmatprep.subr.mxu0 0.0
  %2558 = vmatpush1.msra.mxu0 0.0
  %2559 = vmatprep.subr.mxu0 0.0
  %2560 = vmatpush1.msra.mxu0 0.0
  %2561 = vmatprep.subr.mxu0 0.0
  %2562 = vmatpush1.msra.mxu0 0.0
  %2563 = vmatprep.subr.mxu0 0.0
  %2564 = vmatpush1.msra.mxu0 0.0
  %2565 = vmatprep.subr.mxu0 0.0
  %2566 = vmatpush1.msra.mxu0 0.0
  %2567 = vmatprep.subr.mxu0 0.0
  %2568 = vmatpush1.msra.mxu0 0.0
  %2569 = vmatprep.mubr.f32.mxu0 0.0
  %2570 = vmatmul.mubr.f32.gmra.mrb[0].mxu0 %v2503
  %v2571 = vpop.f32.mrb[0].mxu0
  %v2572 = vadd.f32 0.0, %v2571
  %v2573 = vpop.f32.mrb[0].mxu0
  %v2574 = vadd.f32 0.0, %v2573
  %2575 = vdwg.mxu0
  %v2576 = vadd.f32 %v2500, %v2572
  %v2577 = vadd.f32 %v2501, %v2574
  %v2578 = vxor.u32 %v2576, 2147483648
  %v2579 = vxor.u32 %v2577, 2147483648
  %v2580 = vmul.f32 %v2578, 1.442695
  %v2581 = vpow.pop %v2580
  %v2582 = vmul.f32 %v2579, 1.442695
  %v2583 = vpow.pop %v2582
  %v2584 = vadd.f32 %v2581, 1.0
  %v2585 = vadd.f32 %v2583, 1.0
  %v2586 = vrcp.pop %v2584
  %v2587 = vmul.f32 1.0, %v2586
  %v2588 = vrcp.pop %v2585
  %v2589 = vmul.f32 1.0, %v2588
  %v2590 = vtanh.pop %v2577
  %v2591 = vmul.f32 %v2587, %v2487
  %2593 = vrot.lane.b32.xlu0 %v2590, 64
  %v2594 = vpop.permute.xlu0 %2593
  %v2596 = vmul.f32 %v2587, %v2594
  %2598 = vrot.lane.b32.xlu0 %v2596, 64
  %v2599 = vpop.permute.xlu0 %2598
  %v2601 = vadd.f32 %v2591, %v2599
  %v2602 = vtanh.pop %v2601
  %2604 = vrot.lane.b32.xlu0 %v2602, 64
  %v2605 = vpop.permute.xlu0 %2604
  %v2607 = vmul.f32 %v2589, %v2605
  %2608 = vst.msk [vmem:[#allocation4 + $0x38] sm:$0xff] %vm66, %v2607
  %2609 = vst.msk [vmem:[#allocation4] sm:$0xff] %vm519, %v2607
  %v2610 = vld [vmem:[#allocation4] sm:$0xff]
  %v2611 = vld [vmem:[#allocation4 + $0x8] sm:$0xff]
  %v2612 = vld [vmem:[#allocation4 + $0x10] sm:$0xff]
  %v2613 = vld [vmem:[#allocation4 + $0x18] sm:$0xff]
  %v2614 = vld [vmem:[#allocation4 + $0x20] sm:$0xff]
  %v2615 = vld [vmem:[#allocation4 + $0x28] sm:$0xff]
  %v2616 = vld [vmem:[#allocation4 + $0x30] sm:$0xff]
  %v2617 = vld [vmem:[#allocation4 + $0x38] sm:$0xff]
  %v2618 = vld [vmem:[%s9] sm:$0xff]
  %v2619 = vld [vmem:[%s9 + $0x8] sm:$0xff]
  %v2620 = vld [vmem:[%s9 + $0x10] sm:$0xff]
  %v2621 = vld [vmem:[%s9 + $0x18] sm:$0xff]
  %v2622 = vld [vmem:[%s9 + $0x20] sm:$0xff]
  %v2623 = vld [vmem:[%s9 + $0x28] sm:$0xff]
  %v2624 = vld [vmem:[%s9 + $0x30] sm:$0xff]
  %v2625 = vld [vmem:[%s9 + $0x38] sm:$0xff]
  %v2626 = vld [vmem:[%s10] sm:$0x1]
  %v2628 = vlaneseq
  %v2629 = vshrl.u32 %v2628, 7
  %v2630 = vsub.s32 0, %v2629
  %v2631 = vrot.slane %v2626, %v2630
  %v2634 = vsel %vm411, %v2610, 0
  %v2637 = vsel %vm411, %v2611, 0
  %v2640 = vsel %vm411, %v2612, 0
  %v2643 = vsel %vm411, %v2613, 0
  %v2646 = vsel %vm411, %v2614, 0
  %v2649 = vsel %vm411, %v2615, 0
  %v2652 = vsel %vm411, %v2616, 0
  %v2655 = vsel %vm411, %v2617, 0
  %2657 = vmatprep.subr.mxu0 0.0
  %2658 = vmatpush1.msra.mxu0 %v2618
  %2659 = vmatprep.subr.mxu0 0.0
  %2660 = vmatpush1.msra.mxu0 %v2619
  %2661 = vmatprep.subr.mxu0 0.0
  %2662 = vmatpush1.msra.mxu0 %v2620
  %2663 = vmatprep.subr.mxu0 0.0
  %2664 = vmatpush1.msra.mxu0 %v2621
  %2665 = vmatprep.subr.mxu0 0.0
  %2666 = vmatpush1.msra.mxu0 %v2622
  %2667 = vmatprep.subr.mxu0 0.0
  %2668 = vmatpush1.msra.mxu0 %v2623
  %2669 = vmatprep.subr.mxu0 0.0
  %2670 = vmatpush1.msra.mxu0 %v2624
  %2671 = vmatprep.subr.mxu0 0.0
  %2672 = vmatpush1.msra.mxu0 %v2625
  %2673 = vmatprep.subr.mxu0 0.0
  %2674 = vmatpush1.msra.mxu0 0.0
  %2675 = vmatprep.subr.mxu0 0.0
  %2676 = vmatpush1.msra.mxu0 0.0
  %2677 = vmatprep.subr.mxu0 0.0
  %2678 = vmatpush1.msra.mxu0 0.0
  %2679 = vmatprep.subr.mxu0 0.0
  %2680 = vmatpush1.msra.mxu0 0.0
  %2681 = vmatprep.subr.mxu0 0.0
  %2682 = vmatpush1.msra.mxu0 0.0
  %2683 = vmatprep.subr.mxu0 0.0
  %2684 = vmatpush1.msra.mxu0 0.0
  %2685 = vmatprep.subr.mxu0 0.0
  %2686 = vmatpush1.msra.mxu0 0.0
  %2687 = vmatprep.subr.mxu0 0.0
  %2688 = vmatpush1.msra.mxu0 0.0
  %2689 = vmatprep.subr.mxu0 0.0
  %2690 = vmatpush1.msra.mxu0 0.0
  %2691 = vmatprep.subr.mxu0 0.0
  %2692 = vmatpush1.msra.mxu0 0.0
  %2693 = vmatprep.subr.mxu0 0.0
  %2694 = vmatpush1.msra.mxu0 0.0
  %2695 = vmatprep.subr.mxu0 0.0
  %2696 = vmatpush1.msra.mxu0 0.0
  %2697 = vmatprep.subr.mxu0 0.0
  %2698 = vmatpush1.msra.mxu0 0.0
  %2699 = vmatprep.subr.mxu0 0.0
  %2700 = vmatpush1.msra.mxu0 0.0
  %2701 = vmatprep.subr.mxu0 0.0
  %2702 = vmatpush1.msra.mxu0 0.0
  %2703 = vmatprep.subr.mxu0 0.0
  %2704 = vmatpush1.msra.mxu0 0.0
  %2705 = vmatprep.subr.mxu0 0.0
  %2706 = vmatpush1.msra.mxu0 0.0
  %2707 = vmatprep.subr.mxu0 0.0
  %2708 = vmatpush1.msra.mxu0 0.0
  %2709 = vmatprep.subr.mxu0 0.0
  %2710 = vmatpush1.msra.mxu0 0.0
  %2711 = vmatprep.subr.mxu0 0.0
  %2712 = vmatpush1.msra.mxu0 0.0
  %2713 = vmatprep.subr.mxu0 0.0
  %2714 = vmatpush1.msra.mxu0 0.0
  %2715 = vmatprep.subr.mxu0 0.0
  %2716 = vmatpush1.msra.mxu0 0.0
  %2717 = vmatprep.subr.mxu0 0.0
  %2718 = vmatpush1.msra.mxu0 0.0
  %2719 = vmatprep.subr.mxu0 0.0
  %2720 = vmatpush1.msra.mxu0 0.0
  %2721 = vmatprep.mubr.f32.mxu0 0.0
  %2722 = vmatmul.mubr.f32.gmra.mrb[0].mxu0 %v2634
  %v2723 = vpop.f32.mrb[0].mxu0
  %v2724 = vadd.f32 %v2631, %v2723
  %v2725 = vpop.f32.mrb[0].mxu0
  %2726 = vmatprep.mubr.f32.mxu0 0.0
  %2727 = vmatmul.mubr.f32.gmra.mrb[0].mxu0 %v2637
  %v2728 = vpop.f32.mrb[0].mxu0
  %v2729 = vadd.f32 %v2631, %v2728
  %v2730 = vpop.f32.mrb[0].mxu0
  %2731 = vmatprep.mubr.f32.mxu0 0.0
  %2732 = vmatmul.mubr.f32.gmra.mrb[0].mxu0 %v2640
  %v2733 = vpop.f32.mrb[0].mxu0
  %v2734 = vadd.f32 %v2631, %v2733
  %v2735 = vpop.f32.mrb[0].mxu0
  %2736 = vmatprep.mubr.f32.mxu0 0.0
  %2737 = vmatmul.mubr.f32.gmra.mrb[0].mxu0 %v2643
  %v2738 = vpop.f32.mrb[0].mxu0
  %v2739 = vadd.f32 %v2631, %v2738
  %v2740 = vpop.f32.mrb[0].mxu0
  %2741 = vmatprep.mubr.f32.mxu0 0.0
  %2742 = vmatmul.mubr.f32.gmra.mrb[0].mxu0 %v2646
  %v2743 = vpop.f32.mrb[0].mxu0
  %v2744 = vadd.f32 %v2631, %v2743
  %v2745 = vpop.f32.mrb[0].mxu0
  %2746 = vmatprep.mubr.f32.mxu0 0.0
  %2747 = vmatmul.mubr.f32.gmra.mrb[0].mxu0 %v2649
  %v2748 = vpop.f32.mrb[0].mxu0
  %v2749 = vadd.f32 %v2631, %v2748
  %v2750 = vpop.f32.mrb[0].mxu0
  %2751 = vmatprep.mubr.f32.mxu0 0.0
  %2752 = vmatmul.mubr.f32.gmra.mrb[0].mxu0 %v2652
  %v2753 = vpop.f32.mrb[0].mxu0
  %v2754 = vadd.f32 %v2631, %v2753
  %v2755 = vpop.f32.mrb[0].mxu0
  %2756 = vmatprep.mubr.f32.mxu0 0.0
  %2757 = vmatmul.mubr.f32.gmra.mrb[0].mxu0 %v2655
  %v2758 = vpop.f32.mrb[0].mxu0
  %v2759 = vadd.f32 %v2631, %v2758
  %v2760 = vpop.f32.mrb[0].mxu0
  %2761 = vdwg.mxu0
  %2762 = vst [vmem:[%s11] sm:$0xff] %v2724
  %2763 = vst [vmem:[%s11 + $0x8] sm:$0xff] %v2729
  %2764 = vst [vmem:[%s11 + $0x10] sm:$0xff] %v2734
  %2765 = vst [vmem:[%s11 + $0x18] sm:$0xff] %v2739
  %2766 = vst [vmem:[%s11 + $0x20] sm:$0xff] %v2744
  %2767 = vst [vmem:[%s11 + $0x28] sm:$0xff] %v2749
  %2768 = vst [vmem:[%s11 + $0x30] sm:$0xff] %v2754
  %2769 = vst [vmem:[%s11 + $0x38] sm:$0xff] %v2759
  // Predicated region
  $region46: #{bilstm_tagger_forward.1} parent=0 // pred_check
    _
  $region47: #{bilstm_tagger_forward.1} parent=0 // pred_check_branch
    %2771 = sbr.rel (0) target = $region49
  $region48: #{bilstm_tagger_forward.1} parent=0 // pred_region
    _
  $region49: #{bilstm_tagger_forward.1} parent=0 // pred_fallthru
    _
  // Predicated region
  $region50: #{bilstm_tagger_forward.1} parent=0 // pred_check
    _
  $region51: #{bilstm_tagger_forward.1} parent=0 // pred_check_branch
    %2773 = sbr.rel (0) target = $region53
  $region52: #{bilstm_tagger_forward.1} parent=0 // pred_region
    _
  $region53: #{bilstm_tagger_forward.1} parent=0 // pred_fallthru
    _

</llo_original>
